<compile_context>
chip_gen: v7x
topology: tpu7x:2x2x1
jax: 0.10.0
libtpu: 0.0.40
codegen_flags: <defaults>
</compile_context>

<pallas_src>
import functools

import jax
import jax.numpy as jnp
from jax.experimental import pallas as pl
from jax.experimental.pallas import tpu as pltpu


def _round_up(x, m):
    return ((x + m - 1) // m) * m


def _stored_hidden_width(H):
    """Per-direction hidden width as stored in the kernel layout."""
    # Compact: all 4 gates share one lane block (needs 4*H % 128 == 0).
    # Otherwise: pad each gate to its own 128-lane block.
    return H if (4 * H) % 128 == 0 else _round_up(H, 128)


# ----------------------------- fused Pallas kernel ---------------------------

def _fused_bilstm_kernel(*refs, num_layers, hidden_w, seq_len, batch_pad):
    """Fully fused bidirectional multi-layer LSTM + Linear head.

    Ref layout (inputs ... output ... scratch):
      x_ref                       (T*Bp, F)          time-major, batch padded to 8
      per layer l:
        w_ih_ref                  (Din, 2*GW) bf16   [fwd gates || rev gates]
        b_ref                     (1, 2*GW)   f32    b_ih + b_hh, both directions
        w_hh_f_ref, w_hh_r_ref    (HW, GW)    bf16
      w_fc_ref                    (2*HW, n_step) bf16
      b_fc_ref                    (1, n_step)    f32
      out_ref                     (Bp, n_step)   f32
      gx_ref   scratch            (T*Bp, 2*GW)   f32   hoisted input projection
      seq_ref  scratch            (T*Bp, 2*HW)   f32   per-layer [h_f || h_r]

    HW = stored hidden width, GW = 4*HW. Gate order matches PyTorch: i, f, g, o.
    If HW > H (padded mode) the padded lanes of h/c provably stay exactly 0.
    """
    T, Bp, HW = seq_len, batch_pad, hidden_w
    GW = 4 * HW
    f32 = jnp.float32
    bf16 = jnp.bfloat16

    x_ref = refs[0]
    lref = refs[1:1 + 4 * num_layers]
    w_fc_ref = refs[1 + 4 * num_layers]
    b_fc_ref = refs[2 + 4 * num_layers]
    out_ref = refs[3 + 4 * num_layers]
    gx_ref = refs[4 + 4 * num_layers]
    seq_ref = refs[5 + 4 * num_layers]

    def gate_math(gates, c):
        # gates: (Bp, GW) f32; slices are within one lane block (compact) or
        # 128-aligned (padded).
        i_g = jax.nn.sigmoid(gates[:, 0 * HW:1 * HW])
        f_g = jax.nn.sigmoid(gates[:, 1 * HW:2 * HW])
        g_g = jnp.tanh(gates[:, 2 * HW:3 * HW])
        o_g = jax.nn.sigmoid(gates[:, 3 * HW:4 * HW])
        c = f_g * c + i_g * g_g
        h = o_g * jnp.tanh(c)
        return h, c

    for layer in range(num_layers):
        w_ih_ref, b_ref, w_hh_f_ref, w_hh_r_ref = lref[4 * layer:4 * layer + 4]

        # Hoisted input projection for all T steps of BOTH directions in one
        # matmul (bias folded in once); only h @ W_hh remains in the time loop.
        if layer == 0:
            lin = x_ref[...].astype(bf16)                       # (T*Bp, F)
        else:
            lin = seq_ref[...].astype(bf16)                     # (T*Bp, 2*HW)
        gx_ref[...] = jnp.dot(lin, w_ih_ref[...],
                              preferred_element_type=f32) + b_ref[...]

        whh_f = w_hh_f_ref[...]
        whh_r = w_hh_r_ref[...]
        h_f = jnp.zeros((Bp, HW), f32)
        c_f = jnp.zeros((Bp, HW), f32)
        h_r = jnp.zeros((Bp, HW), f32)
        c_r = jnp.zeros((Bp, HW), f32)
        last_layer = (layer + 1 == num_layers)

        # Single unrolled time loop: fwd step s and rev step T-1-s back-to-back
        # (two independent latency chains per iteration).
        for s in range(T):
            tf = s
            tr = T - 1 - s
            gates_f = gx_ref[tf * Bp:(tf + 1) * Bp, 0:GW] + jnp.dot(
                h_f.astype(bf16), whh_f, preferred_element_type=f32)
            gates_r = gx_ref[tr * Bp:(tr + 1) * Bp, GW:2 * GW] + jnp.dot(
                h_r.astype(bf16), whh_r, preferred_element_type=f32)
            h_f, c_f = gate_math(gates_f, c_f)
            h_r, c_r = gate_math(gates_r, c_r)
            # Next-layer input (or final-step carriers) go to VMEM scratch; for
            # the last layer only the time-(T-1) block is ever consumed.
            if (not last_layer) or tf == T - 1:
                seq_ref[tf * Bp:(tf + 1) * Bp, 0:HW] = h_f
            if (not last_layer) or tr == T - 1:
                seq_ref[tr * Bp:(tr + 1) * Bp, HW:2 * HW] = h_r

    # out[:, -1, :] = [h_f(T-1) || h_r at time T-1]; already concatenated in
    # the scratch row block.  n_step < 128 -> masked partial store (harmless
    # at this size; pad n_step to 128 if the head widens).
    last = seq_ref[(T - 1) * Bp:T * Bp, :].astype(bf16)         # (Bp, 2*HW)
    out_ref[...] = jnp.dot(last, w_fc_ref[...],
                           preferred_element_type=f32) + b_fc_ref[...]


# ----------------------------- wrapper ---------------------------------------

def bidirectional_lstm_forward(x, kparams, *, hidden_dim, num_layers):
    """Matches BidirectionalLSTM.forward: x (B, T, n_feature) -> (B, n_step)."""
    B, T, F = x.shape
    HW = _stored_hidden_width(hidden_dim)
    n_step = kparams["fc"][1].shape[1]
    Bp = _round_up(B, 8)                       # sublane-aligned batch

    # Tiny XLA prologue: batch-first -> time-major, batch zero-padded to Bp,
    # flattened to (T*Bp, F) so every per-step row slice is sublane-aligned.
    x_tm = jnp.transpose(x.astype(jnp.float32), (1, 0, 2))      # (T, B, F)
    x_tm = jnp.pad(x_tm, ((0, 0), (0, Bp - B), (0, 0)))
    x_flat = x_tm.reshape(T * Bp, F)

    flat = [x_flat]
    for layer in range(num_layers):
        flat += list(kparams["lstm"][layer])   # w_ih_cat, b_cat, w_hh_f, w_hh_r
    flat += list(kparams["fc"])                # w_fc, b_fc

    kernel = functools.partial(
        _fused_bilstm_kernel, num_layers=num_layers, hidden_w=HW,
        seq_len=T, batch_pad=Bp)

    out = pl.pallas_call(
        kernel,
        out_shape=jax.ShapeDtypeStruct((Bp, n_step), jnp.float32),
        in_specs=[pl.BlockSpec(memory_space=pltpu.MemorySpace.VMEM)] * len(flat),
        out_specs=pl.BlockSpec(memory_space=pltpu.MemorySpace.VMEM),
        scratch_shapes=[pltpu.VMEM((T * Bp, 8 * HW), jnp.float32),   # gx
                        pltpu.VMEM((T * Bp, 2 * HW), jnp.float32)],  # layer seq
    )(*flat)
    return out[:B]


# ----------------------------- params ----------------------------------------

def init_raw_params(key, n_feature, hidden_dim, num_layers, n_step):
    """PyTorch-layout raw parameters (nn.LSTM / nn.Linear shapes + init)."""
    H = hidden_dim
    bound = 1.0 / (H ** 0.5)

    def uni(k, shape, b):
        return jax.random.uniform(k, shape, jnp.float32, -b, b)

    params = {"lstm": []}
    for layer in range(num_layers):
        in_size = n_feature if layer == 0 else 2 * H
        dirs = []
        for _ in range(2):  # forward, reverse
            key, k1, k2, k3, k4 = jax.random.split(key, 5)
            dirs.append((uni(k1, (4 * H, in_size), bound),   # weight_ih
                         uni(k2, (4 * H, H), bound),         # weight_hh
                         uni(k3, (4 * H,), bound),           # bias_ih
                         uni(k4, (4 * H,), bound)))          # bias_hh
        params["lstm"].append(tuple(dirs))

    key, k1, k2 = jax.random.split(key, 3)
    fb = 1.0 / ((2 * H) ** 0.5)
    params["fc"] = (uni(k1, (n_step, 2 * H), fb), uni(k2, (n_step,), fb))
    return params


def prepare_kernel_params(raw, hidden_dim, num_layers):
    """Repack PyTorch-layout weights into the kernel layout.

    * gates packed compactly (HW == H) when 4*H % 128 == 0, else per-gate
      128-lane padding (HW = round_up(H, 128))
    * per layer, W_ih of both directions concatenated along N, biases summed
    * matmul weights cast to bf16 (biases stay f32)
    """
    H = hidden_dim
    HW = _stored_hidden_width(H)
    GW = 4 * HW

    def gate_cols(w_t):
        # (Din, 4H) -> (Din, GW): gate g occupies lanes [g*HW, g*HW + H)
        if HW == H:
            return w_t
        out = jnp.zeros((w_t.shape[0], GW), jnp.float32)
        for g in range(4):
            out = out.at[:, g * HW:g * HW + H].set(w_t[:, g * H:(g + 1) * H])
        return out

    def bidir_rows(w):
        # (2H, C) rows [fwd H | rev H] -> (2*HW, C)
        if HW == H:
            return w
        out = jnp.zeros((2 * HW, w.shape[1]), jnp.float32)
        out = out.at[0:H, :].set(w[0:H, :])
        out = out.at[HW:HW + H, :].set(w[H:2 * H, :])
        return out

    def hidden_rows(w):
        # (H, C) -> (HW, C)
        if HW == H:
            return w
        out = jnp.zeros((HW, w.shape[1]), jnp.float32)
        return out.at[0:H, :].set(w)

    def bias_row(b):
        out = jnp.zeros((1, GW), jnp.float32)
        for g in range(4):
            out = out.at[0, g * HW:g * HW + H].set(b[g * H:(g + 1) * H])
        return out

    kparams = {"lstm": []}
    for layer in range(num_layers):
        packed = []
        for d in range(2):
            w_ih, w_hh, b_ih, b_hh = raw["lstm"][layer][d]
            w_ih_t = gate_cols(w_ih.T.astype(jnp.float32))        # (Din, GW)
            if layer > 0:
                w_ih_t = bidir_rows(w_ih_t)                       # (2*HW, GW)
            w_hh_t = hidden_rows(gate_cols(w_hh.T.astype(jnp.float32)))  # (HW, GW)
            packed.append((w_ih_t, w_hh_t, bias_row(b_ih + b_hh)))
        (wif, whf, bf_), (wir, whr, br_) = packed
        w_ih_cat = jnp.concatenate([wif, wir], axis=1).astype(jnp.bfloat16)
        b_cat = jnp.concatenate([bf_, br_], axis=1)               # f32
        kparams["lstm"].append((w_ih_cat, b_cat,
                                whf.astype(jnp.bfloat16),
                                whr.astype(jnp.bfloat16)))

    w_fc, b_fc = raw["fc"]                                        # (n_step,2H), (n_step,)
    w_fc_k = bidir_rows(w_fc.T.astype(jnp.float32)).astype(jnp.bfloat16)  # (2*HW, n_step)
    kparams["fc"] = (w_fc_k, b_fc.astype(jnp.float32)[None, :])
    return kparams


# ----------------------------- pure-JAX reference -----------------------------

def _reference_forward(x, raw, hidden_dim, num_layers):
    B, T, _ = x.shape
    H = hidden_dim
    layer_in = x.astype(jnp.float32)
    for layer in range(num_layers):
        outs = []
        for d in range(2):
            w_ih, w_hh, b_ih, b_hh = raw["lstm"][layer][d]
            w_ih_t, w_hh_t = w_ih.T, w_hh.T
            b = (b_ih + b_hh)[None, :]
            seq = layer_in if d == 0 else layer_in[:, ::-1, :]
            h = jnp.zeros((B, H), jnp.float32)
            c = jnp.zeros((B, H), jnp.float32)
            hs = []
            for t in range(T):
                gates = seq[:, t, :] @ w_ih_t + h @ w_hh_t + b
                i_g = jax.nn.sigmoid(gates[:, 0 * H:1 * H])
                f_g = jax.nn.sigmoid(gates[:, 1 * H:2 * H])
                g_g = jnp.tanh(gates[:, 2 * H:3 * H])
                o_g = jax.nn.sigmoid(gates[:, 3 * H:4 * H])
                c = f_g * c + i_g * g_g
                h = o_g * jnp.tanh(c)
                hs.append(h)
            out_dir = jnp.stack(hs, axis=1)
            if d == 1:
                out_dir = out_dir[:, ::-1, :]
            outs.append(out_dir)
        layer_in = jnp.concatenate(outs, axis=-1)
    last = layer_in[:, -1, :]
    w_fc, b_fc = raw["fc"]
    return last @ w_fc.T + b_fc[None, :]


# ----------------------------- main -------------------------------------------

if __name__ == "__main__":
    n_feature, hidden_dim, num_layers, n_step = 4, 32, 2, 8
    batch, seq_len = 2, 8

    key = jax.random.PRNGKey(0)
    kx, kp = jax.random.split(key)
    x = jax.random.normal(kx, (batch, seq_len, n_feature), jnp.float32)

    raw_params = init_raw_params(kp, n_feature, hidden_dim, num_layers, n_step)
    kernel_params = prepare_kernel_params(raw_params, hidden_dim, num_layers)

    fwd = jax.jit(functools.partial(
        bidirectional_lstm_forward, hidden_dim=hidden_dim, num_layers=num_layers))
    out = jax.block_until_ready(fwd(x, kernel_params))

    ref = _reference_forward(x, raw_params, hidden_dim, num_layers)
    assert out.shape == (batch, n_step)
    # Tolerances loosened vs. the all-f32 version because matmul weights are
    # stored in bf16 (gate/cell math and accumulation remain f32).
    assert jnp.allclose(out, ref, rtol=3e-2, atol=3e-2), "mismatch vs reference"

    print("KERNEL_OK")
</pallas_src>

<mosaic_0001>
module attributes {stable_mosaic.version = 11 : i64} {
  func.func @_fused_bilstm_kernel(%arg0: memref<64x4xf32, #tpu.memory_space<vmem>>, %arg1: memref<4x256xbf16, #tpu.memory_space<vmem>>, %arg2: memref<1x256xf32, #tpu.memory_space<vmem>>, %arg3: memref<32x128xbf16, #tpu.memory_space<vmem>>, %arg4: memref<32x128xbf16, #tpu.memory_space<vmem>>, %arg5: memref<64x256xbf16, #tpu.memory_space<vmem>>, %arg6: memref<1x256xf32, #tpu.memory_space<vmem>>, %arg7: memref<32x128xbf16, #tpu.memory_space<vmem>>, %arg8: memref<32x128xbf16, #tpu.memory_space<vmem>>, %arg9: memref<64x8xbf16, #tpu.memory_space<vmem>>, %arg10: memref<1x8xf32, #tpu.memory_space<vmem>>, %arg11: memref<8x8xf32, #tpu.memory_space<vmem>>, %arg12: memref<64x256xf32, #tpu.memory_space<vmem>>, %arg13: memref<64x64xf32, #tpu.memory_space<vmem>>) attributes {dimension_semantics = [], scalar_prefetch = 0 : i64, scratch_operands = 2 : i64, tpu.core_type = #tpu.core_type<tc>} {
    %c0 = arith.constant 0 : index
    %c0_0 = arith.constant 0 : index
    %0 = vector.load %arg0[%c0, %c0_0] : memref<64x4xf32, #tpu.memory_space<vmem>>, vector<64x4xf32>
    %1 = arith.truncf %0 : vector<64x4xf32> to vector<64x4xbf16>
    %c0_1 = arith.constant 0 : index
    %c0_2 = arith.constant 0 : index
    %2 = vector.load %arg1[%c0_1, %c0_2] : memref<4x256xbf16, #tpu.memory_space<vmem>>, vector<4x256xbf16>
    %cst = arith.constant dense<0.000000e+00> : vector<64x256xf32>
    %3 = tpu.matmul %1, %2, %cst {dimension_numbers = #tpu.dot_dimension_numbers<[1], [0], [0], [1], [0, 0, 1, 1], [], []>} : vector<64x4xbf16>, vector<4x256xbf16>, vector<64x256xf32> -> vector<64x256xf32>
    %c0_3 = arith.constant 0 : index
    %c0_4 = arith.constant 0 : index
    %4 = vector.load %arg2[%c0_3, %c0_4] : memref<1x256xf32, #tpu.memory_space<vmem>>, vector<1x256xf32>
    %5 = vector.broadcast %4 : vector<1x256xf32> to vector<64x256xf32>
    %6 = arith.addf %3, %5 : vector<64x256xf32>
    %c0_5 = arith.constant 0 : index
    %c0_6 = arith.constant 0 : index
    %7 = vector.load %arg12[%c0_5, %c0_6] : memref<64x256xf32, #tpu.memory_space<vmem>>, vector<64x256xf32>
    tpu.vector_store %arg12[%c0_5, %c0_6], %6 {strides = array<i32>} : memref<64x256xf32, #tpu.memory_space<vmem>>, vector<64x256xf32>,
    %c0_7 = arith.constant 0 : index
    %c0_8 = arith.constant 0 : index
    %8 = vector.load %arg3[%c0_7, %c0_8] : memref<32x128xbf16, #tpu.memory_space<vmem>>, vector<32x128xbf16>
    %c0_9 = arith.constant 0 : index
    %c0_10 = arith.constant 0 : index
    %9 = vector.load %arg4[%c0_9, %c0_10] : memref<32x128xbf16, #tpu.memory_space<vmem>>, vector<32x128xbf16>
    %cst_11 = arith.constant 0.000000e+00 : f32
    %10 = vector.broadcast %cst_11 : f32 to vector<8x32xf32>
    %cst_12 = arith.constant 0.000000e+00 : f32
    %11 = vector.broadcast %cst_12 : f32 to vector<8x32xf32>
    %cst_13 = arith.constant 0.000000e+00 : f32
    %12 = vector.broadcast %cst_13 : f32 to vector<8x32xf32>
    %cst_14 = arith.constant 0.000000e+00 : f32
    %13 = vector.broadcast %cst_14 : f32 to vector<8x32xf32>
    %c0_15 = arith.constant 0 : index
    %c0_16 = arith.constant 0 : index
    %14 = vector.load %arg12[%c0_15, %c0_16] : memref<64x256xf32, #tpu.memory_space<vmem>>, vector<8x128xf32>
    %15 = arith.truncf %10 : vector<8x32xf32> to vector<8x32xbf16>
    %cst_17 = arith.constant dense<0.000000e+00> : vector<8x128xf32>
    %16 = tpu.matmul %15, %8, %cst_17 {dimension_numbers = #tpu.dot_dimension_numbers<[1], [0], [0], [1], [0, 0, 1, 1], [], []>} : vector<8x32xbf16>, vector<32x128xbf16>, vector<8x128xf32> -> vector<8x128xf32>
    %17 = arith.addf %14, %16 : vector<8x128xf32>
    %c56 = arith.constant 56 : index
    %c128 = arith.constant 128 : index
    %18 = vector.load %arg12[%c56, %c128] : memref<64x256xf32, #tpu.memory_space<vmem>>, vector<8x128xf32>
    %19 = arith.truncf %12 : vector<8x32xf32> to vector<8x32xbf16>
    %cst_18 = arith.constant dense<0.000000e+00> : vector<8x128xf32>
    %20 = tpu.matmul %19, %9, %cst_18 {dimension_numbers = #tpu.dot_dimension_numbers<[1], [0], [0], [1], [0, 0, 1, 1], [], []>} : vector<8x32xbf16>, vector<32x128xbf16>, vector<8x128xf32> -> vector<8x128xf32>
    %21 = arith.addf %18, %20 : vector<8x128xf32>
    %22 = vector.extract_strided_slice %17 {offsets = [0, 0], sizes = [8, 32], strides = [1, 1]} : vector<8x128xf32> to vector<8x32xf32>
    %23 = arith.negf %22 : vector<8x32xf32>
    %24 = math.exp %23 : vector<8x32xf32>
    %cst_19 = arith.constant 1.000000e+00 : f32
    %25 = vector.broadcast %cst_19 : f32 to vector<8x32xf32>
    %26 = arith.addf %25, %24 : vector<8x32xf32>
    %27 = arith.divf %25, %26 : vector<8x32xf32>
    %28 = vector.extract_strided_slice %17 {offsets = [0, 32], sizes = [8, 32], strides = [1, 1]} : vector<8x128xf32> to vector<8x32xf32>
    %29 = arith.negf %28 : vector<8x32xf32>
    %30 = math.exp %29 : vector<8x32xf32>
    %cst_20 = arith.constant 1.000000e+00 : f32
    %31 = vector.broadcast %cst_20 : f32 to vector<8x32xf32>
    %32 = arith.addf %31, %30 : vector<8x32xf32>
    %33 = arith.divf %31, %32 : vector<8x32xf32>
    %34 = vector.extract_strided_slice %17 {offsets = [0, 64], sizes = [8, 32], strides = [1, 1]} : vector<8x128xf32> to vector<8x32xf32>
    %35 = math.tanh %34 : vector<8x32xf32>
    %36 = vector.extract_strided_slice %17 {offsets = [0, 96], sizes = [8, 32], strides = [1, 1]} : vector<8x128xf32> to vector<8x32xf32>
    %37 = arith.negf %36 : vector<8x32xf32>
    %38 = math.exp %37 : vector<8x32xf32>
    %cst_21 = arith.constant 1.000000e+00 : f32
    %39 = vector.broadcast %cst_21 : f32 to vector<8x32xf32>
    %40 = arith.addf %39, %38 : vector<8x32xf32>
    %41 = arith.divf %39, %40 : vector<8x32xf32>
    %42 = arith.mulf %33, %11 : vector<8x32xf32>
    %43 = arith.mulf %27, %35 : vector<8x32xf32>
    %44 = arith.addf %42, %43 : vector<8x32xf32>
    %45 = math.tanh %44 : vector<8x32xf32>
    %46 = arith.mulf %41, %45 : vector<8x32xf32>
    %47 = vector.extract_strided_slice %21 {offsets = [0, 0], sizes = [8, 32], strides = [1, 1]} : vector<8x128xf32> to vector<8x32xf32>
    %48 = arith.negf %47 : vector<8x32xf32>
    %49 = math.exp %48 : vector<8x32xf32>
    %cst_22 = arith.constant 1.000000e+00 : f32
    %50 = vector.broadcast %cst_22 : f32 to vector<8x32xf32>
    %51 = arith.addf %50, %49 : vector<8x32xf32>
    %52 = arith.divf %50, %51 : vector<8x32xf32>
    %53 = vector.extract_strided_slice %21 {offsets = [0, 32], sizes = [8, 32], strides = [1, 1]} : vector<8x128xf32> to vector<8x32xf32>
    %54 = arith.negf %53 : vector<8x32xf32>
    %55 = math.exp %54 : vector<8x32xf32>
    %cst_23 = arith.constant 1.000000e+00 : f32
    %56 = vector.broadcast %cst_23 : f32 to vector<8x32xf32>
    %57 = arith.addf %56, %55 : vector<8x32xf32>
    %58 = arith.divf %56, %57 : vector<8x32xf32>
    %59 = vector.extract_strided_slice %21 {offsets = [0, 64], sizes = [8, 32], strides = [1, 1]} : vector<8x128xf32> to vector<8x32xf32>
    %60 = math.tanh %59 : vector<8x32xf32>
    %61 = vector.extract_strided_slice %21 {offsets = [0, 96], sizes = [8, 32], strides = [1, 1]} : vector<8x128xf32> to vector<8x32xf32>
    %62 = arith.negf %61 : vector<8x32xf32>
    %63 = math.exp %62 : vector<8x32xf32>
    %cst_24 = arith.constant 1.000000e+00 : f32
    %64 = vector.broadcast %cst_24 : f32 to vector<8x32xf32>
    %65 = arith.addf %64, %63 : vector<8x32xf32>
    %66 = arith.divf %64, %65 : vector<8x32xf32>
    %67 = arith.mulf %58, %13 : vector<8x32xf32>
    %68 = arith.mulf %52, %60 : vector<8x32xf32>
    %69 = arith.addf %67, %68 : vector<8x32xf32>
    %70 = math.tanh %69 : vector<8x32xf32>
    %71 = arith.mulf %66, %70 : vector<8x32xf32>
    %c0_25 = arith.constant 0 : index
    %c0_26 = arith.constant 0 : index
    %72 = vector.load %arg13[%c0_25, %c0_26] : memref<64x64xf32, #tpu.memory_space<vmem>>, vector<8x32xf32>
    tpu.vector_store %arg13[%c0_25, %c0_26], %46 {strides = array<i32>} : memref<64x64xf32, #tpu.memory_space<vmem>>, vector<8x32xf32>,
    %c56_27 = arith.constant 56 : index
    %c32 = arith.constant 32 : index
    %73 = vector.load %arg13[%c56_27, %c32] : memref<64x64xf32, #tpu.memory_space<vmem>>, vector<8x32xf32>
    tpu.vector_store %arg13[%c56_27, %c32], %71 {strides = array<i32>} : memref<64x64xf32, #tpu.memory_space<vmem>>, vector<8x32xf32>,
    %c8 = arith.constant 8 : index
    %c0_28 = arith.constant 0 : index
    %74 = vector.load %arg12[%c8, %c0_28] : memref<64x256xf32, #tpu.memory_space<vmem>>, vector<8x128xf32>
    %75 = arith.truncf %46 : vector<8x32xf32> to vector<8x32xbf16>
    %cst_29 = arith.constant dense<0.000000e+00> : vector<8x128xf32>
    %76 = tpu.matmul %75, %8, %cst_29 {dimension_numbers = #tpu.dot_dimension_numbers<[1], [0], [0], [1], [0, 0, 1, 1], [], []>} : vector<8x32xbf16>, vector<32x128xbf16>, vector<8x128xf32> -> vector<8x128xf32>
    %77 = arith.addf %74, %76 : vector<8x128xf32>
    %c48 = arith.constant 48 : index
    %c128_30 = arith.constant 128 : index
    %78 = vector.load %arg12[%c48, %c128_30] : memref<64x256xf32, #tpu.memory_space<vmem>>, vector<8x128xf32>
    %79 = arith.truncf %71 : vector<8x32xf32> to vector<8x32xbf16>
    %cst_31 = arith.constant dense<0.000000e+00> : vector<8x128xf32>
    %80 = tpu.matmul %79, %9, %cst_31 {dimension_numbers = #tpu.dot_dimension_numbers<[1], [0], [0], [1], [0, 0, 1, 1], [], []>} : vector<8x32xbf16>, vector<32x128xbf16>, vector<8x128xf32> -> vector<8x128xf32>
    %81 = arith.addf %78, %80 : vector<8x128xf32>
    %82 = vector.extract_strided_slice %77 {offsets = [0, 0], sizes = [8, 32], strides = [1, 1]} : vector<8x128xf32> to vector<8x32xf32>
    %83 = arith.negf %82 : vector<8x32xf32>
    %84 = math.exp %83 : vector<8x32xf32>
    %cst_32 = arith.constant 1.000000e+00 : f32
    %85 = vector.broadcast %cst_32 : f32 to vector<8x32xf32>
    %86 = arith.addf %85, %84 : vector<8x32xf32>
    %87 = arith.divf %85, %86 : vector<8x32xf32>
    %88 = vector.extract_strided_slice %77 {offsets = [0, 32], sizes = [8, 32], strides = [1, 1]} : vector<8x128xf32> to vector<8x32xf32>
    %89 = arith.negf %88 : vector<8x32xf32>
    %90 = math.exp %89 : vector<8x32xf32>
    %cst_33 = arith.constant 1.000000e+00 : f32
    %91 = vector.broadcast %cst_33 : f32 to vector<8x32xf32>
    %92 = arith.addf %91, %90 : vector<8x32xf32>
    %93 = arith.divf %91, %92 : vector<8x32xf32>
    %94 = vector.extract_strided_slice %77 {offsets = [0, 64], sizes = [8, 32], strides = [1, 1]} : vector<8x128xf32> to vector<8x32xf32>
    %95 = math.tanh %94 : vector<8x32xf32>
    %96 = vector.extract_strided_slice %77 {offsets = [0, 96], sizes = [8, 32], strides = [1, 1]} : vector<8x128xf32> to vector<8x32xf32>
    %97 = arith.negf %96 : vector<8x32xf32>
    %98 = math.exp %97 : vector<8x32xf32>
    %cst_34 = arith.constant 1.000000e+00 : f32
    %99 = vector.broadcast %cst_34 : f32 to vector<8x32xf32>
    %100 = arith.addf %99, %98 : vector<8x32xf32>
    %101 = arith.divf %99, %100 : vector<8x32xf32>
    %102 = arith.mulf %93, %44 : vector<8x32xf32>
    %103 = arith.mulf %87, %95 : vector<8x32xf32>
    %104 = arith.addf %102, %103 : vector<8x32xf32>
    %105 = math.tanh %104 : vector<8x32xf32>
    %106 = arith.mulf %101, %105 : vector<8x32xf32>
    %107 = vector.extract_strided_slice %81 {offsets = [0, 0], sizes = [8, 32], strides = [1, 1]} : vector<8x128xf32> to vector<8x32xf32>
    %108 = arith.negf %107 : vector<8x32xf32>
    %109 = math.exp %108 : vector<8x32xf32>
    %cst_35 = arith.constant 1.000000e+00 : f32
    %110 = vector.broadcast %cst_35 : f32 to vector<8x32xf32>
    %111 = arith.addf %110, %109 : vector<8x32xf32>
    %112 = arith.divf %110, %111 : vector<8x32xf32>
    %113 = vector.extract_strided_slice %81 {offsets = [0, 32], sizes = [8, 32], strides = [1, 1]} : vector<8x128xf32> to vector<8x32xf32>
    %114 = arith.negf %113 : vector<8x32xf32>
    %115 = math.exp %114 : vector<8x32xf32>
    %cst_36 = arith.constant 1.000000e+00 : f32
    %116 = vector.broadcast %cst_36 : f32 to vector<8x32xf32>
    %117 = arith.addf %116, %115 : vector<8x32xf32>
    %118 = arith.divf %116, %117 : vector<8x32xf32>
    %119 = vector.extract_strided_slice %81 {offsets = [0, 64], sizes = [8, 32], strides = [1, 1]} : vector<8x128xf32> to vector<8x32xf32>
    %120 = math.tanh %119 : vector<8x32xf32>
    %121 = vector.extract_strided_slice %81 {offsets = [0, 96], sizes = [8, 32], strides = [1, 1]} : vector<8x128xf32> to vector<8x32xf32>
    %122 = arith.negf %121 : vector<8x32xf32>
    %123 = math.exp %122 : vector<8x32xf32>
    %cst_37 = arith.constant 1.000000e+00 : f32
    %124 = vector.broadcast %cst_37 : f32 to vector<8x32xf32>
    %125 = arith.addf %124, %123 : vector<8x32xf32>
    %126 = arith.divf %124, %125 : vector<8x32xf32>
    %127 = arith.mulf %118, %69 : vector<8x32xf32>
    %128 = arith.mulf %112, %120 : vector<8x32xf32>
    %129 = arith.addf %127, %128 : vector<8x32xf32>
    %130 = math.tanh %129 : vector<8x32xf32>
    %131 = arith.mulf %126, %130 : vector<8x32xf32>
    %c8_38 = arith.constant 8 : index
    %c0_39 = arith.constant 0 : index
    %132 = vector.load %arg13[%c8_38, %c0_39] : memref<64x64xf32, #tpu.memory_space<vmem>>, vector<8x32xf32>
    tpu.vector_store %arg13[%c8_38, %c0_39], %106 {strides = array<i32>} : memref<64x64xf32, #tpu.memory_space<vmem>>, vector<8x32xf32>,
    %c48_40 = arith.constant 48 : index
    %c32_41 = arith.constant 32 : index
    %133 = vector.load %arg13[%c48_40, %c32_41] : memref<64x64xf32, #tpu.memory_space<vmem>>, vector<8x32xf32>
    tpu.vector_store %arg13[%c48_40, %c32_41], %131 {strides = array<i32>} : memref<64x64xf32, #tpu.memory_space<vmem>>, vector<8x32xf32>,
    %c16 = arith.constant 16 : index
    %c0_42 = arith.constant 0 : index
    %134 = vector.load %arg12[%c16, %c0_42] : memref<64x256xf32, #tpu.memory_space<vmem>>, vector<8x128xf32>
    %135 = arith.truncf %106 : vector<8x32xf32> to vector<8x32xbf16>
    %cst_43 = arith.constant dense<0.000000e+00> : vector<8x128xf32>
    %136 = tpu.matmul %135, %8, %cst_43 {dimension_numbers = #tpu.dot_dimension_numbers<[1], [0], [0], [1], [0, 0, 1, 1], [], []>} : vector<8x32xbf16>, vector<32x128xbf16>, vector<8x128xf32> -> vector<8x128xf32>
    %137 = arith.addf %134, %136 : vector<8x128xf32>
    %c40 = arith.constant 40 : index
    %c128_44 = arith.constant 128 : index
    %138 = vector.load %arg12[%c40, %c128_44] : memref<64x256xf32, #tpu.memory_space<vmem>>, vector<8x128xf32>
    %139 = arith.truncf %131 : vector<8x32xf32> to vector<8x32xbf16>
    %cst_45 = arith.constant dense<0.000000e+00> : vector<8x128xf32>
    %140 = tpu.matmul %139, %9, %cst_45 {dimension_numbers = #tpu.dot_dimension_numbers<[1], [0], [0], [1], [0, 0, 1, 1], [], []>} : vector<8x32xbf16>, vector<32x128xbf16>, vector<8x128xf32> -> vector<8x128xf32>
    %141 = arith.addf %138, %140 : vector<8x128xf32>
    %142 = vector.extract_strided_slice %137 {offsets = [0, 0], sizes = [8, 32], strides = [1, 1]} : vector<8x128xf32> to vector<8x32xf32>
    %143 = arith.negf %142 : vector<8x32xf32>
    %144 = math.exp %143 : vector<8x32xf32>
    %cst_46 = arith.constant 1.000000e+00 : f32
    %145 = vector.broadcast %cst_46 : f32 to vector<8x32xf32>
    %146 = arith.addf %145, %144 : vector<8x32xf32>
    %147 = arith.divf %145, %146 : vector<8x32xf32>
    %148 = vector.extract_strided_slice %137 {offsets = [0, 32], sizes = [8, 32], strides = [1, 1]} : vector<8x128xf32> to vector<8x32xf32>
    %149 = arith.negf %148 : vector<8x32xf32>
    %150 = math.exp %149 : vector<8x32xf32>
    %cst_47 = arith.constant 1.000000e+00 : f32
    %151 = vector.broadcast %cst_47 : f32 to vector<8x32xf32>
    %152 = arith.addf %151, %150 : vector<8x32xf32>
    %153 = arith.divf %151, %152 : vector<8x32xf32>
    %154 = vector.extract_strided_slice %137 {offsets = [0, 64], sizes = [8, 32], strides = [1, 1]} : vector<8x128xf32> to vector<8x32xf32>
    %155 = math.tanh %154 : vector<8x32xf32>
    %156 = vector.extract_strided_slice %137 {offsets = [0, 96], sizes = [8, 32], strides = [1, 1]} : vector<8x128xf32> to vector<8x32xf32>
    %157 = arith.negf %156 : vector<8x32xf32>
    %158 = math.exp %157 : vector<8x32xf32>
    %cst_48 = arith.constant 1.000000e+00 : f32
    %159 = vector.broadcast %cst_48 : f32 to vector<8x32xf32>
    %160 = arith.addf %159, %158 : vector<8x32xf32>
    %161 = arith.divf %159, %160 : vector<8x32xf32>
    %162 = arith.mulf %153, %104 : vector<8x32xf32>
    %163 = arith.mulf %147, %155 : vector<8x32xf32>
    %164 = arith.addf %162, %163 : vector<8x32xf32>
    %165 = math.tanh %164 : vector<8x32xf32>
    %166 = arith.mulf %161, %165 : vector<8x32xf32>
    %167 = vector.extract_strided_slice %141 {offsets = [0, 0], sizes = [8, 32], strides = [1, 1]} : vector<8x128xf32> to vector<8x32xf32>
    %168 = arith.negf %167 : vector<8x32xf32>
    %169 = math.exp %168 : vector<8x32xf32>
    %cst_49 = arith.constant 1.000000e+00 : f32
    %170 = vector.broadcast %cst_49 : f32 to vector<8x32xf32>
    %171 = arith.addf %170, %169 : vector<8x32xf32>
    %172 = arith.divf %170, %171 : vector<8x32xf32>
    %173 = vector.extract_strided_slice %141 {offsets = [0, 32], sizes = [8, 32], strides = [1, 1]} : vector<8x128xf32> to vector<8x32xf32>
    %174 = arith.negf %173 : vector<8x32xf32>
    %175 = math.exp %174 : vector<8x32xf32>
    %cst_50 = arith.constant 1.000000e+00 : f32
    %176 = vector.broadcast %cst_50 : f32 to vector<8x32xf32>
    %177 = arith.addf %176, %175 : vector<8x32xf32>
    %178 = arith.divf %176, %177 : vector<8x32xf32>
    %179 = vector.extract_strided_slice %141 {offsets = [0, 64], sizes = [8, 32], strides = [1, 1]} : vector<8x128xf32> to vector<8x32xf32>
    %180 = math.tanh %179 : vector<8x32xf32>
    %181 = vector.extract_strided_slice %141 {offsets = [0, 96], sizes = [8, 32], strides = [1, 1]} : vector<8x128xf32> to vector<8x32xf32>
    %182 = arith.negf %181 : vector<8x32xf32>
    %183 = math.exp %182 : vector<8x32xf32>
    %cst_51 = arith.constant 1.000000e+00 : f32
    %184 = vector.broadcast %cst_51 : f32 to vector<8x32xf32>
    %185 = arith.addf %184, %183 : vector<8x32xf32>
    %186 = arith.divf %184, %185 : vector<8x32xf32>
    %187 = arith.mulf %178, %129 : vector<8x32xf32>
    %188 = arith.mulf %172, %180 : vector<8x32xf32>
    %189 = arith.addf %187, %188 : vector<8x32xf32>
    %190 = math.tanh %189 : vector<8x32xf32>
    %191 = arith.mulf %186, %190 : vector<8x32xf32>
    %c16_52 = arith.constant 16 : index
    %c0_53 = arith.constant 0 : index
    %192 = vector.load %arg13[%c16_52, %c0_53] : memref<64x64xf32, #tpu.memory_space<vmem>>, vector<8x32xf32>
    tpu.vector_store %arg13[%c16_52, %c0_53], %166 {strides = array<i32>} : memref<64x64xf32, #tpu.memory_space<vmem>>, vector<8x32xf32>,
    %c40_54 = arith.constant 40 : index
    %c32_55 = arith.constant 32 : index
    %193 = vector.load %arg13[%c40_54, %c32_55] : memref<64x64xf32, #tpu.memory_space<vmem>>, vector<8x32xf32>
    tpu.vector_store %arg13[%c40_54, %c32_55], %191 {strides = array<i32>} : memref<64x64xf32, #tpu.memory_space<vmem>>, vector<8x32xf32>,
    %c24 = arith.constant 24 : index
    %c0_56 = arith.constant 0 : index
    %194 = vector.load %arg12[%c24, %c0_56] : memref<64x256xf32, #tpu.memory_space<vmem>>, vector<8x128xf32>
    %195 = arith.truncf %166 : vector<8x32xf32> to vector<8x32xbf16>
    %cst_57 = arith.constant dense<0.000000e+00> : vector<8x128xf32>
    %196 = tpu.matmul %195, %8, %cst_57 {dimension_numbers = #tpu.dot_dimension_numbers<[1], [0], [0], [1], [0, 0, 1, 1], [], []>} : vector<8x32xbf16>, vector<32x128xbf16>, vector<8x128xf32> -> vector<8x128xf32>
    %197 = arith.addf %194, %196 : vector<8x128xf32>
    %c32_58 = arith.constant 32 : index
    %c128_59 = arith.constant 128 : index
    %198 = vector.load %arg12[%c32_58, %c128_59] : memref<64x256xf32, #tpu.memory_space<vmem>>, vector<8x128xf32>
    %199 = arith.truncf %191 : vector<8x32xf32> to vector<8x32xbf16>
    %cst_60 = arith.constant dense<0.000000e+00> : vector<8x128xf32>
    %200 = tpu.matmul %199, %9, %cst_60 {dimension_numbers = #tpu.dot_dimension_numbers<[1], [0], [0], [1], [0, 0, 1, 1], [], []>} : vector<8x32xbf16>, vector<32x128xbf16>, vector<8x128xf32> -> vector<8x128xf32>
    %201 = arith.addf %198, %200 : vector<8x128xf32>
    %202 = vector.extract_strided_slice %197 {offsets = [0, 0], sizes = [8, 32], strides = [1, 1]} : vector<8x128xf32> to vector<8x32xf32>
    %203 = arith.negf %202 : vector<8x32xf32>
    %204 = math.exp %203 : vector<8x32xf32>
    %cst_61 = arith.constant 1.000000e+00 : f32
    %205 = vector.broadcast %cst_61 : f32 to vector<8x32xf32>
    %206 = arith.addf %205, %204 : vector<8x32xf32>
    %207 = arith.divf %205, %206 : vector<8x32xf32>
    %208 = vector.extract_strided_slice %197 {offsets = [0, 32], sizes = [8, 32], strides = [1, 1]} : vector<8x128xf32> to vector<8x32xf32>
    %209 = arith.negf %208 : vector<8x32xf32>
    %210 = math.exp %209 : vector<8x32xf32>
    %cst_62 = arith.constant 1.000000e+00 : f32
    %211 = vector.broadcast %cst_62 : f32 to vector<8x32xf32>
    %212 = arith.addf %211, %210 : vector<8x32xf32>
    %213 = arith.divf %211, %212 : vector<8x32xf32>
    %214 = vector.extract_strided_slice %197 {offsets = [0, 64], sizes = [8, 32], strides = [1, 1]} : vector<8x128xf32> to vector<8x32xf32>
    %215 = math.tanh %214 : vector<8x32xf32>
    %216 = vector.extract_strided_slice %197 {offsets = [0, 96], sizes = [8, 32], strides = [1, 1]} : vector<8x128xf32> to vector<8x32xf32>
    %217 = arith.negf %216 : vector<8x32xf32>
    %218 = math.exp %217 : vector<8x32xf32>
    %cst_63 = arith.constant 1.000000e+00 : f32
    %219 = vector.broadcast %cst_63 : f32 to vector<8x32xf32>
    %220 = arith.addf %219, %218 : vector<8x32xf32>
    %221 = arith.divf %219, %220 : vector<8x32xf32>
    %222 = arith.mulf %213, %164 : vector<8x32xf32>
    %223 = arith.mulf %207, %215 : vector<8x32xf32>
    %224 = arith.addf %222, %223 : vector<8x32xf32>
    %225 = math.tanh %224 : vector<8x32xf32>
    %226 = arith.mulf %221, %225 : vector<8x32xf32>
    %227 = vector.extract_strided_slice %201 {offsets = [0, 0], sizes = [8, 32], strides = [1, 1]} : vector<8x128xf32> to vector<8x32xf32>
    %228 = arith.negf %227 : vector<8x32xf32>
    %229 = math.exp %228 : vector<8x32xf32>
    %cst_64 = arith.constant 1.000000e+00 : f32
    %230 = vector.broadcast %cst_64 : f32 to vector<8x32xf32>
    %231 = arith.addf %230, %229 : vector<8x32xf32>
    %232 = arith.divf %230, %231 : vector<8x32xf32>
    %233 = vector.extract_strided_slice %201 {offsets = [0, 32], sizes = [8, 32], strides = [1, 1]} : vector<8x128xf32> to vector<8x32xf32>
    %234 = arith.negf %233 : vector<8x32xf32>
    %235 = math.exp %234 : vector<8x32xf32>
    %cst_65 = arith.constant 1.000000e+00 : f32
    %236 = vector.broadcast %cst_65 : f32 to vector<8x32xf32>
    %237 = arith.addf %236, %235 : vector<8x32xf32>
    %238 = arith.divf %236, %237 : vector<8x32xf32>
    %239 = vector.extract_strided_slice %201 {offsets = [0, 64], sizes = [8, 32], strides = [1, 1]} : vector<8x128xf32> to vector<8x32xf32>
    %240 = math.tanh %239 : vector<8x32xf32>
    %241 = vector.extract_strided_slice %201 {offsets = [0, 96], sizes = [8, 32], strides = [1, 1]} : vector<8x128xf32> to vector<8x32xf32>
    %242 = arith.negf %241 : vector<8x32xf32>
    %243 = math.exp %242 : vector<8x32xf32>
    %cst_66 = arith.constant 1.000000e+00 : f32
    %244 = vector.broadcast %cst_66 : f32 to vector<8x32xf32>
    %245 = arith.addf %244, %243 : vector<8x32xf32>
    %246 = arith.divf %244, %245 : vector<8x32xf32>
    %247 = arith.mulf %238, %189 : vector<8x32xf32>
    %248 = arith.mulf %232, %240 : vector<8x32xf32>
    %249 = arith.addf %247, %248 : vector<8x32xf32>
    %250 = math.tanh %249 : vector<8x32xf32>
    %251 = arith.mulf %246, %250 : vector<8x32xf32>
    %c24_67 = arith.constant 24 : index
    %c0_68 = arith.constant 0 : index
    %252 = vector.load %arg13[%c24_67, %c0_68] : memref<64x64xf32, #tpu.memory_space<vmem>>, vector<8x32xf32>
    tpu.vector_store %arg13[%c24_67, %c0_68], %226 {strides = array<i32>} : memref<64x64xf32, #tpu.memory_space<vmem>>, vector<8x32xf32>,
    %c32_69 = arith.constant 32 : index
    %c32_70 = arith.constant 32 : index
    %253 = vector.load %arg13[%c32_69, %c32_70] : memref<64x64xf32, #tpu.memory_space<vmem>>, vector<8x32xf32>
    tpu.vector_store %arg13[%c32_69, %c32_70], %251 {strides = array<i32>} : memref<64x64xf32, #tpu.memory_space<vmem>>, vector<8x32xf32>,
    %c32_71 = arith.constant 32 : index
    %c0_72 = arith.constant 0 : index
    %254 = vector.load %arg12[%c32_71, %c0_72] : memref<64x256xf32, #tpu.memory_space<vmem>>, vector<8x128xf32>
    %255 = arith.truncf %226 : vector<8x32xf32> to vector<8x32xbf16>
    %cst_73 = arith.constant dense<0.000000e+00> : vector<8x128xf32>
    %256 = tpu.matmul %255, %8, %cst_73 {dimension_numbers = #tpu.dot_dimension_numbers<[1], [0], [0], [1], [0, 0, 1, 1], [], []>} : vector<8x32xbf16>, vector<32x128xbf16>, vector<8x128xf32> -> vector<8x128xf32>
    %257 = arith.addf %254, %256 : vector<8x128xf32>
    %c24_74 = arith.constant 24 : index
    %c128_75 = arith.constant 128 : index
    %258 = vector.load %arg12[%c24_74, %c128_75] : memref<64x256xf32, #tpu.memory_space<vmem>>, vector<8x128xf32>
    %259 = arith.truncf %251 : vector<8x32xf32> to vector<8x32xbf16>
    %cst_76 = arith.constant dense<0.000000e+00> : vector<8x128xf32>
    %260 = tpu.matmul %259, %9, %cst_76 {dimension_numbers = #tpu.dot_dimension_numbers<[1], [0], [0], [1], [0, 0, 1, 1], [], []>} : vector<8x32xbf16>, vector<32x128xbf16>, vector<8x128xf32> -> vector<8x128xf32>
    %261 = arith.addf %258, %260 : vector<8x128xf32>
    %262 = vector.extract_strided_slice %257 {offsets = [0, 0], sizes = [8, 32], strides = [1, 1]} : vector<8x128xf32> to vector<8x32xf32>
    %263 = arith.negf %262 : vector<8x32xf32>
    %264 = math.exp %263 : vector<8x32xf32>
    %cst_77 = arith.constant 1.000000e+00 : f32
    %265 = vector.broadcast %cst_77 : f32 to vector<8x32xf32>
    %266 = arith.addf %265, %264 : vector<8x32xf32>
    %267 = arith.divf %265, %266 : vector<8x32xf32>
    %268 = vector.extract_strided_slice %257 {offsets = [0, 32], sizes = [8, 32], strides = [1, 1]} : vector<8x128xf32> to vector<8x32xf32>
    %269 = arith.negf %268 : vector<8x32xf32>
    %270 = math.exp %269 : vector<8x32xf32>
    %cst_78 = arith.constant 1.000000e+00 : f32
    %271 = vector.broadcast %cst_78 : f32 to vector<8x32xf32>
    %272 = arith.addf %271, %270 : vector<8x32xf32>
    %273 = arith.divf %271, %272 : vector<8x32xf32>
    %274 = vector.extract_strided_slice %257 {offsets = [0, 64], sizes = [8, 32], strides = [1, 1]} : vector<8x128xf32> to vector<8x32xf32>
    %275 = math.tanh %274 : vector<8x32xf32>
    %276 = vector.extract_strided_slice %257 {offsets = [0, 96], sizes = [8, 32], strides = [1, 1]} : vector<8x128xf32> to vector<8x32xf32>
    %277 = arith.negf %276 : vector<8x32xf32>
    %278 = math.exp %277 : vector<8x32xf32>
    %cst_79 = arith.constant 1.000000e+00 : f32
    %279 = vector.broadcast %cst_79 : f32 to vector<8x32xf32>
    %280 = arith.addf %279, %278 : vector<8x32xf32>
    %281 = arith.divf %279, %280 : vector<8x32xf32>
    %282 = arith.mulf %273, %224 : vector<8x32xf32>
    %283 = arith.mulf %267, %275 : vector<8x32xf32>
    %284 = arith.addf %282, %283 : vector<8x32xf32>
    %285 = math.tanh %284 : vector<8x32xf32>
    %286 = arith.mulf %281, %285 : vector<8x32xf32>
    %287 = vector.extract_strided_slice %261 {offsets = [0, 0], sizes = [8, 32], strides = [1, 1]} : vector<8x128xf32> to vector<8x32xf32>
    %288 = arith.negf %287 : vector<8x32xf32>
    %289 = math.exp %288 : vector<8x32xf32>
    %cst_80 = arith.constant 1.000000e+00 : f32
    %290 = vector.broadcast %cst_80 : f32 to vector<8x32xf32>
    %291 = arith.addf %290, %289 : vector<8x32xf32>
    %292 = arith.divf %290, %291 : vector<8x32xf32>
    %293 = vector.extract_strided_slice %261 {offsets = [0, 32], sizes = [8, 32], strides = [1, 1]} : vector<8x128xf32> to vector<8x32xf32>
    %294 = arith.negf %293 : vector<8x32xf32>
    %295 = math.exp %294 : vector<8x32xf32>
    %cst_81 = arith.constant 1.000000e+00 : f32
    %296 = vector.broadcast %cst_81 : f32 to vector<8x32xf32>
    %297 = arith.addf %296, %295 : vector<8x32xf32>
    %298 = arith.divf %296, %297 : vector<8x32xf32>
    %299 = vector.extract_strided_slice %261 {offsets = [0, 64], sizes = [8, 32], strides = [1, 1]} : vector<8x128xf32> to vector<8x32xf32>
    %300 = math.tanh %299 : vector<8x32xf32>
    %301 = vector.extract_strided_slice %261 {offsets = [0, 96], sizes = [8, 32], strides = [1, 1]} : vector<8x128xf32> to vector<8x32xf32>
    %302 = arith.negf %301 : vector<8x32xf32>
    %303 = math.exp %302 : vector<8x32xf32>
    %cst_82 = arith.constant 1.000000e+00 : f32
    %304 = vector.broadcast %cst_82 : f32 to vector<8x32xf32>
    %305 = arith.addf %304, %303 : vector<8x32xf32>
    %306 = arith.divf %304, %305 : vector<8x32xf32>
    %307 = arith.mulf %298, %249 : vector<8x32xf32>
    %308 = arith.mulf %292, %300 : vector<8x32xf32>
    %309 = arith.addf %307, %308 : vector<8x32xf32>
    %310 = math.tanh %309 : vector<8x32xf32>
    %311 = arith.mulf %306, %310 : vector<8x32xf32>
    %c32_83 = arith.constant 32 : index
    %c0_84 = arith.constant 0 : index
    %312 = vector.load %arg13[%c32_83, %c0_84] : memref<64x64xf32, #tpu.memory_space<vmem>>, vector<8x32xf32>
    tpu.vector_store %arg13[%c32_83, %c0_84], %286 {strides = array<i32>} : memref<64x64xf32, #tpu.memory_space<vmem>>, vector<8x32xf32>,
    %c24_85 = arith.constant 24 : index
    %c32_86 = arith.constant 32 : index
    %313 = vector.load %arg13[%c24_85, %c32_86] : memref<64x64xf32, #tpu.memory_space<vmem>>, vector<8x32xf32>
    tpu.vector_store %arg13[%c24_85, %c32_86], %311 {strides = array<i32>} : memref<64x64xf32, #tpu.memory_space<vmem>>, vector<8x32xf32>,
    %c40_87 = arith.constant 40 : index
    %c0_88 = arith.constant 0 : index
    %314 = vector.load %arg12[%c40_87, %c0_88] : memref<64x256xf32, #tpu.memory_space<vmem>>, vector<8x128xf32>
    %315 = arith.truncf %286 : vector<8x32xf32> to vector<8x32xbf16>
    %cst_89 = arith.constant dense<0.000000e+00> : vector<8x128xf32>
    %316 = tpu.matmul %315, %8, %cst_89 {dimension_numbers = #tpu.dot_dimension_numbers<[1], [0], [0], [1], [0, 0, 1, 1], [], []>} : vector<8x32xbf16>, vector<32x128xbf16>, vector<8x128xf32> -> vector<8x128xf32>
    %317 = arith.addf %314, %316 : vector<8x128xf32>
    %c16_90 = arith.constant 16 : index
    %c128_91 = arith.constant 128 : index
    %318 = vector.load %arg12[%c16_90, %c128_91] : memref<64x256xf32, #tpu.memory_space<vmem>>, vector<8x128xf32>
    %319 = arith.truncf %311 : vector<8x32xf32> to vector<8x32xbf16>
    %cst_92 = arith.constant dense<0.000000e+00> : vector<8x128xf32>
    %320 = tpu.matmul %319, %9, %cst_92 {dimension_numbers = #tpu.dot_dimension_numbers<[1], [0], [0], [1], [0, 0, 1, 1], [], []>} : vector<8x32xbf16>, vector<32x128xbf16>, vector<8x128xf32> -> vector<8x128xf32>
    %321 = arith.addf %318, %320 : vector<8x128xf32>
    %322 = vector.extract_strided_slice %317 {offsets = [0, 0], sizes = [8, 32], strides = [1, 1]} : vector<8x128xf32> to vector<8x32xf32>
    %323 = arith.negf %322 : vector<8x32xf32>
    %324 = math.exp %323 : vector<8x32xf32>
    %cst_93 = arith.constant 1.000000e+00 : f32
    %325 = vector.broadcast %cst_93 : f32 to vector<8x32xf32>
    %326 = arith.addf %325, %324 : vector<8x32xf32>
    %327 = arith.divf %325, %326 : vector<8x32xf32>
    %328 = vector.extract_strided_slice %317 {offsets = [0, 32], sizes = [8, 32], strides = [1, 1]} : vector<8x128xf32> to vector<8x32xf32>
    %329 = arith.negf %328 : vector<8x32xf32>
    %330 = math.exp %329 : vector<8x32xf32>
    %cst_94 = arith.constant 1.000000e+00 : f32
    %331 = vector.broadcast %cst_94 : f32 to vector<8x32xf32>
    %332 = arith.addf %331, %330 : vector<8x32xf32>
    %333 = arith.divf %331, %332 : vector<8x32xf32>
    %334 = vector.extract_strided_slice %317 {offsets = [0, 64], sizes = [8, 32], strides = [1, 1]} : vector<8x128xf32> to vector<8x32xf32>
    %335 = math.tanh %334 : vector<8x32xf32>
    %336 = vector.extract_strided_slice %317 {offsets = [0, 96], sizes = [8, 32], strides = [1, 1]} : vector<8x128xf32> to vector<8x32xf32>
    %337 = arith.negf %336 : vector<8x32xf32>
    %338 = math.exp %337 : vector<8x32xf32>
    %cst_95 = arith.constant 1.000000e+00 : f32
    %339 = vector.broadcast %cst_95 : f32 to vector<8x32xf32>
    %340 = arith.addf %339, %338 : vector<8x32xf32>
    %341 = arith.divf %339, %340 : vector<8x32xf32>
    %342 = arith.mulf %333, %284 : vector<8x32xf32>
    %343 = arith.mulf %327, %335 : vector<8x32xf32>
    %344 = arith.addf %342, %343 : vector<8x32xf32>
    %345 = math.tanh %344 : vector<8x32xf32>
    %346 = arith.mulf %341, %345 : vector<8x32xf32>
    %347 = vector.extract_strided_slice %321 {offsets = [0, 0], sizes = [8, 32], strides = [1, 1]} : vector<8x128xf32> to vector<8x32xf32>
    %348 = arith.negf %347 : vector<8x32xf32>
    %349 = math.exp %348 : vector<8x32xf32>
    %cst_96 = arith.constant 1.000000e+00 : f32
    %350 = vector.broadcast %cst_96 : f32 to vector<8x32xf32>
    %351 = arith.addf %350, %349 : vector<8x32xf32>
    %352 = arith.divf %350, %351 : vector<8x32xf32>
    %353 = vector.extract_strided_slice %321 {offsets = [0, 32], sizes = [8, 32], strides = [1, 1]} : vector<8x128xf32> to vector<8x32xf32>
    %354 = arith.negf %353 : vector<8x32xf32>
    %355 = math.exp %354 : vector<8x32xf32>
    %cst_97 = arith.constant 1.000000e+00 : f32
    %356 = vector.broadcast %cst_97 : f32 to vector<8x32xf32>
    %357 = arith.addf %356, %355 : vector<8x32xf32>
    %358 = arith.divf %356, %357 : vector<8x32xf32>
    %359 = vector.extract_strided_slice %321 {offsets = [0, 64], sizes = [8, 32], strides = [1, 1]} : vector<8x128xf32> to vector<8x32xf32>
    %360 = math.tanh %359 : vector<8x32xf32>
    %361 = vector.extract_strided_slice %321 {offsets = [0, 96], sizes = [8, 32], strides = [1, 1]} : vector<8x128xf32> to vector<8x32xf32>
    %362 = arith.negf %361 : vector<8x32xf32>
    %363 = math.exp %362 : vector<8x32xf32>
    %cst_98 = arith.constant 1.000000e+00 : f32
    %364 = vector.broadcast %cst_98 : f32 to vector<8x32xf32>
    %365 = arith.addf %364, %363 : vector<8x32xf32>
    %366 = arith.divf %364, %365 : vector<8x32xf32>
    %367 = arith.mulf %358, %309 : vector<8x32xf32>
    %368 = arith.mulf %352, %360 : vector<8x32xf32>
    %369 = arith.addf %367, %368 : vector<8x32xf32>
    %370 = math.tanh %369 : vector<8x32xf32>
    %371 = arith.mulf %366, %370 : vector<8x32xf32>
    %c40_99 = arith.constant 40 : index
    %c0_100 = arith.constant 0 : index
    %372 = vector.load %arg13[%c40_99, %c0_100] : memref<64x64xf32, #tpu.memory_space<vmem>>, vector<8x32xf32>
    tpu.vector_store %arg13[%c40_99, %c0_100], %346 {strides = array<i32>} : memref<64x64xf32, #tpu.memory_space<vmem>>, vector<8x32xf32>,
    %c16_101 = arith.constant 16 : index
    %c32_102 = arith.constant 32 : index
    %373 = vector.load %arg13[%c16_101, %c32_102] : memref<64x64xf32, #tpu.memory_space<vmem>>, vector<8x32xf32>
    tpu.vector_store %arg13[%c16_101, %c32_102], %371 {strides = array<i32>} : memref<64x64xf32, #tpu.memory_space<vmem>>, vector<8x32xf32>,
    %c48_103 = arith.constant 48 : index
    %c0_104 = arith.constant 0 : index
    %374 = vector.load %arg12[%c48_103, %c0_104] : memref<64x256xf32, #tpu.memory_space<vmem>>, vector<8x128xf32>
    %375 = arith.truncf %346 : vector<8x32xf32> to vector<8x32xbf16>
    %cst_105 = arith.constant dense<0.000000e+00> : vector<8x128xf32>
    %376 = tpu.matmul %375, %8, %cst_105 {dimension_numbers = #tpu.dot_dimension_numbers<[1], [0], [0], [1], [0, 0, 1, 1], [], []>} : vector<8x32xbf16>, vector<32x128xbf16>, vector<8x128xf32> -> vector<8x128xf32>
    %377 = arith.addf %374, %376 : vector<8x128xf32>
    %c8_106 = arith.constant 8 : index
    %c128_107 = arith.constant 128 : index
    %378 = vector.load %arg12[%c8_106, %c128_107] : memref<64x256xf32, #tpu.memory_space<vmem>>, vector<8x128xf32>
    %379 = arith.truncf %371 : vector<8x32xf32> to vector<8x32xbf16>
    %cst_108 = arith.constant dense<0.000000e+00> : vector<8x128xf32>
    %380 = tpu.matmul %379, %9, %cst_108 {dimension_numbers = #tpu.dot_dimension_numbers<[1], [0], [0], [1], [0, 0, 1, 1], [], []>} : vector<8x32xbf16>, vector<32x128xbf16>, vector<8x128xf32> -> vector<8x128xf32>
    %381 = arith.addf %378, %380 : vector<8x128xf32>
    %382 = vector.extract_strided_slice %377 {offsets = [0, 0], sizes = [8, 32], strides = [1, 1]} : vector<8x128xf32> to vector<8x32xf32>
    %383 = arith.negf %382 : vector<8x32xf32>
    %384 = math.exp %383 : vector<8x32xf32>
    %cst_109 = arith.constant 1.000000e+00 : f32
    %385 = vector.broadcast %cst_109 : f32 to vector<8x32xf32>
    %386 = arith.addf %385, %384 : vector<8x32xf32>
    %387 = arith.divf %385, %386 : vector<8x32xf32>
    %388 = vector.extract_strided_slice %377 {offsets = [0, 32], sizes = [8, 32], strides = [1, 1]} : vector<8x128xf32> to vector<8x32xf32>
    %389 = arith.negf %388 : vector<8x32xf32>
    %390 = math.exp %389 : vector<8x32xf32>
    %cst_110 = arith.constant 1.000000e+00 : f32
    %391 = vector.broadcast %cst_110 : f32 to vector<8x32xf32>
    %392 = arith.addf %391, %390 : vector<8x32xf32>
    %393 = arith.divf %391, %392 : vector<8x32xf32>
    %394 = vector.extract_strided_slice %377 {offsets = [0, 64], sizes = [8, 32], strides = [1, 1]} : vector<8x128xf32> to vector<8x32xf32>
    %395 = math.tanh %394 : vector<8x32xf32>
    %396 = vector.extract_strided_slice %377 {offsets = [0, 96], sizes = [8, 32], strides = [1, 1]} : vector<8x128xf32> to vector<8x32xf32>
    %397 = arith.negf %396 : vector<8x32xf32>
    %398 = math.exp %397 : vector<8x32xf32>
    %cst_111 = arith.constant 1.000000e+00 : f32
    %399 = vector.broadcast %cst_111 : f32 to vector<8x32xf32>
    %400 = arith.addf %399, %398 : vector<8x32xf32>
    %401 = arith.divf %399, %400 : vector<8x32xf32>
    %402 = arith.mulf %393, %344 : vector<8x32xf32>
    %403 = arith.mulf %387, %395 : vector<8x32xf32>
    %404 = arith.addf %402, %403 : vector<8x32xf32>
    %405 = math.tanh %404 : vector<8x32xf32>
    %406 = arith.mulf %401, %405 : vector<8x32xf32>
    %407 = vector.extract_strided_slice %381 {offsets = [0, 0], sizes = [8, 32], strides = [1, 1]} : vector<8x128xf32> to vector<8x32xf32>
    %408 = arith.negf %407 : vector<8x32xf32>
    %409 = math.exp %408 : vector<8x32xf32>
    %cst_112 = arith.constant 1.000000e+00 : f32
    %410 = vector.broadcast %cst_112 : f32 to vector<8x32xf32>
    %411 = arith.addf %410, %409 : vector<8x32xf32>
    %412 = arith.divf %410, %411 : vector<8x32xf32>
    %413 = vector.extract_strided_slice %381 {offsets = [0, 32], sizes = [8, 32], strides = [1, 1]} : vector<8x128xf32> to vector<8x32xf32>
    %414 = arith.negf %413 : vector<8x32xf32>
    %415 = math.exp %414 : vector<8x32xf32>
    %cst_113 = arith.constant 1.000000e+00 : f32
    %416 = vector.broadcast %cst_113 : f32 to vector<8x32xf32>
    %417 = arith.addf %416, %415 : vector<8x32xf32>
    %418 = arith.divf %416, %417 : vector<8x32xf32>
    %419 = vector.extract_strided_slice %381 {offsets = [0, 64], sizes = [8, 32], strides = [1, 1]} : vector<8x128xf32> to vector<8x32xf32>
    %420 = math.tanh %419 : vector<8x32xf32>
    %421 = vector.extract_strided_slice %381 {offsets = [0, 96], sizes = [8, 32], strides = [1, 1]} : vector<8x128xf32> to vector<8x32xf32>
    %422 = arith.negf %421 : vector<8x32xf32>
    %423 = math.exp %422 : vector<8x32xf32>
    %cst_114 = arith.constant 1.000000e+00 : f32
    %424 = vector.broadcast %cst_114 : f32 to vector<8x32xf32>
    %425 = arith.addf %424, %423 : vector<8x32xf32>
    %426 = arith.divf %424, %425 : vector<8x32xf32>
    %427 = arith.mulf %418, %369 : vector<8x32xf32>
    %428 = arith.mulf %412, %420 : vector<8x32xf32>
    %429 = arith.addf %427, %428 : vector<8x32xf32>
    %430 = math.tanh %429 : vector<8x32xf32>
    %431 = arith.mulf %426, %430 : vector<8x32xf32>
    %c48_115 = arith.constant 48 : index
    %c0_116 = arith.constant 0 : index
    %432 = vector.load %arg13[%c48_115, %c0_116] : memref<64x64xf32, #tpu.memory_space<vmem>>, vector<8x32xf32>
    tpu.vector_store %arg13[%c48_115, %c0_116], %406 {strides = array<i32>} : memref<64x64xf32, #tpu.memory_space<vmem>>, vector<8x32xf32>,
    %c8_117 = arith.constant 8 : index
    %c32_118 = arith.constant 32 : index
    %433 = vector.load %arg13[%c8_117, %c32_118] : memref<64x64xf32, #tpu.memory_space<vmem>>, vector<8x32xf32>
    tpu.vector_store %arg13[%c8_117, %c32_118], %431 {strides = array<i32>} : memref<64x64xf32, #tpu.memory_space<vmem>>, vector<8x32xf32>,
    %c56_119 = arith.constant 56 : index
    %c0_120 = arith.constant 0 : index
    %434 = vector.load %arg12[%c56_119, %c0_120] : memref<64x256xf32, #tpu.memory_space<vmem>>, vector<8x128xf32>
    %435 = arith.truncf %406 : vector<8x32xf32> to vector<8x32xbf16>
    %cst_121 = arith.constant dense<0.000000e+00> : vector<8x128xf32>
    %436 = tpu.matmul %435, %8, %cst_121 {dimension_numbers = #tpu.dot_dimension_numbers<[1], [0], [0], [1], [0, 0, 1, 1], [], []>} : vector<8x32xbf16>, vector<32x128xbf16>, vector<8x128xf32> -> vector<8x128xf32>
    %437 = arith.addf %434, %436 : vector<8x128xf32>
    %c0_122 = arith.constant 0 : index
    %c128_123 = arith.constant 128 : index
    %438 = vector.load %arg12[%c0_122, %c128_123] : memref<64x256xf32, #tpu.memory_space<vmem>>, vector<8x128xf32>
    %439 = arith.truncf %431 : vector<8x32xf32> to vector<8x32xbf16>
    %cst_124 = arith.constant dense<0.000000e+00> : vector<8x128xf32>
    %440 = tpu.matmul %439, %9, %cst_124 {dimension_numbers = #tpu.dot_dimension_numbers<[1], [0], [0], [1], [0, 0, 1, 1], [], []>} : vector<8x32xbf16>, vector<32x128xbf16>, vector<8x128xf32> -> vector<8x128xf32>
    %441 = arith.addf %438, %440 : vector<8x128xf32>
    %442 = vector.extract_strided_slice %437 {offsets = [0, 0], sizes = [8, 32], strides = [1, 1]} : vector<8x128xf32> to vector<8x32xf32>
    %443 = arith.negf %442 : vector<8x32xf32>
    %444 = math.exp %443 : vector<8x32xf32>
    %cst_125 = arith.constant 1.000000e+00 : f32
    %445 = vector.broadcast %cst_125 : f32 to vector<8x32xf32>
    %446 = arith.addf %445, %444 : vector<8x32xf32>
    %447 = arith.divf %445, %446 : vector<8x32xf32>
    %448 = vector.extract_strided_slice %437 {offsets = [0, 32], sizes = [8, 32], strides = [1, 1]} : vector<8x128xf32> to vector<8x32xf32>
    %449 = arith.negf %448 : vector<8x32xf32>
    %450 = math.exp %449 : vector<8x32xf32>
    %cst_126 = arith.constant 1.000000e+00 : f32
    %451 = vector.broadcast %cst_126 : f32 to vector<8x32xf32>
    %452 = arith.addf %451, %450 : vector<8x32xf32>
    %453 = arith.divf %451, %452 : vector<8x32xf32>
    %454 = vector.extract_strided_slice %437 {offsets = [0, 64], sizes = [8, 32], strides = [1, 1]} : vector<8x128xf32> to vector<8x32xf32>
    %455 = math.tanh %454 : vector<8x32xf32>
    %456 = vector.extract_strided_slice %437 {offsets = [0, 96], sizes = [8, 32], strides = [1, 1]} : vector<8x128xf32> to vector<8x32xf32>
    %457 = arith.negf %456 : vector<8x32xf32>
    %458 = math.exp %457 : vector<8x32xf32>
    %cst_127 = arith.constant 1.000000e+00 : f32
    %459 = vector.broadcast %cst_127 : f32 to vector<8x32xf32>
    %460 = arith.addf %459, %458 : vector<8x32xf32>
    %461 = arith.divf %459, %460 : vector<8x32xf32>
    %462 = arith.mulf %453, %404 : vector<8x32xf32>
    %463 = arith.mulf %447, %455 : vector<8x32xf32>
    %464 = arith.addf %462, %463 : vector<8x32xf32>
    %465 = math.tanh %464 : vector<8x32xf32>
    %466 = arith.mulf %461, %465 : vector<8x32xf32>
    %467 = vector.extract_strided_slice %441 {offsets = [0, 0], sizes = [8, 32], strides = [1, 1]} : vector<8x128xf32> to vector<8x32xf32>
    %468 = arith.negf %467 : vector<8x32xf32>
    %469 = math.exp %468 : vector<8x32xf32>
    %cst_128 = arith.constant 1.000000e+00 : f32
    %470 = vector.broadcast %cst_128 : f32 to vector<8x32xf32>
    %471 = arith.addf %470, %469 : vector<8x32xf32>
    %472 = arith.divf %470, %471 : vector<8x32xf32>
    %473 = vector.extract_strided_slice %441 {offsets = [0, 32], sizes = [8, 32], strides = [1, 1]} : vector<8x128xf32> to vector<8x32xf32>
    %474 = arith.negf %473 : vector<8x32xf32>
    %475 = math.exp %474 : vector<8x32xf32>
    %cst_129 = arith.constant 1.000000e+00 : f32
    %476 = vector.broadcast %cst_129 : f32 to vector<8x32xf32>
    %477 = arith.addf %476, %475 : vector<8x32xf32>
    %478 = arith.divf %476, %477 : vector<8x32xf32>
    %479 = vector.extract_strided_slice %441 {offsets = [0, 64], sizes = [8, 32], strides = [1, 1]} : vector<8x128xf32> to vector<8x32xf32>
    %480 = math.tanh %479 : vector<8x32xf32>
    %481 = vector.extract_strided_slice %441 {offsets = [0, 96], sizes = [8, 32], strides = [1, 1]} : vector<8x128xf32> to vector<8x32xf32>
    %482 = arith.negf %481 : vector<8x32xf32>
    %483 = math.exp %482 : vector<8x32xf32>
    %cst_130 = arith.constant 1.000000e+00 : f32
    %484 = vector.broadcast %cst_130 : f32 to vector<8x32xf32>
    %485 = arith.addf %484, %483 : vector<8x32xf32>
    %486 = arith.divf %484, %485 : vector<8x32xf32>
    %487 = arith.mulf %478, %429 : vector<8x32xf32>
    %488 = arith.mulf %472, %480 : vector<8x32xf32>
    %489 = arith.addf %487, %488 : vector<8x32xf32>
    %490 = math.tanh %489 : vector<8x32xf32>
    %491 = arith.mulf %486, %490 : vector<8x32xf32>
    %c56_131 = arith.constant 56 : index
    %c0_132 = arith.constant 0 : index
    %492 = vector.load %arg13[%c56_131, %c0_132] : memref<64x64xf32, #tpu.memory_space<vmem>>, vector<8x32xf32>
    tpu.vector_store %arg13[%c56_131, %c0_132], %466 {strides = array<i32>} : memref<64x64xf32, #tpu.memory_space<vmem>>, vector<8x32xf32>,
    %c0_133 = arith.constant 0 : index
    %c32_134 = arith.constant 32 : index
    %493 = vector.load %arg13[%c0_133, %c32_134] : memref<64x64xf32, #tpu.memory_space<vmem>>, vector<8x32xf32>
    tpu.vector_store %arg13[%c0_133, %c32_134], %491 {strides = array<i32>} : memref<64x64xf32, #tpu.memory_space<vmem>>, vector<8x32xf32>,
    %c0_135 = arith.constant 0 : index
    %c0_136 = arith.constant 0 : index
    %494 = vector.load %arg13[%c0_135, %c0_136] : memref<64x64xf32, #tpu.memory_space<vmem>>, vector<64x64xf32>
    %495 = arith.truncf %494 : vector<64x64xf32> to vector<64x64xbf16>
    %c0_137 = arith.constant 0 : index
    %c0_138 = arith.constant 0 : index
    %496 = vector.load %arg5[%c0_137, %c0_138] : memref<64x256xbf16, #tpu.memory_space<vmem>>, vector<64x256xbf16>
    %cst_139 = arith.constant dense<0.000000e+00> : vector<64x256xf32>
    %497 = tpu.matmul %495, %496, %cst_139 {dimension_numbers = #tpu.dot_dimension_numbers<[1], [0], [0], [1], [0, 0, 1, 1], [], []>} : vector<64x64xbf16>, vector<64x256xbf16>, vector<64x256xf32> -> vector<64x256xf32>
    %c0_140 = arith.constant 0 : index
    %c0_141 = arith.constant 0 : index
    %498 = vector.load %arg6[%c0_140, %c0_141] : memref<1x256xf32, #tpu.memory_space<vmem>>, vector<1x256xf32>
    %499 = vector.broadcast %498 : vector<1x256xf32> to vector<64x256xf32>
    %500 = arith.addf %497, %499 : vector<64x256xf32>
    %c0_142 = arith.constant 0 : index
    %c0_143 = arith.constant 0 : index
    %501 = vector.load %arg12[%c0_142, %c0_143] : memref<64x256xf32, #tpu.memory_space<vmem>>, vector<64x256xf32>
    tpu.vector_store %arg12[%c0_142, %c0_143], %500 {strides = array<i32>} : memref<64x256xf32, #tpu.memory_space<vmem>>, vector<64x256xf32>,
    %c0_144 = arith.constant 0 : index
    %c0_145 = arith.constant 0 : index
    %502 = vector.load %arg7[%c0_144, %c0_145] : memref<32x128xbf16, #tpu.memory_space<vmem>>, vector<32x128xbf16>
    %c0_146 = arith.constant 0 : index
    %c0_147 = arith.constant 0 : index
    %503 = vector.load %arg8[%c0_146, %c0_147] : memref<32x128xbf16, #tpu.memory_space<vmem>>, vector<32x128xbf16>
    %cst_148 = arith.constant 0.000000e+00 : f32
    %504 = vector.broadcast %cst_148 : f32 to vector<8x32xf32>
    %cst_149 = arith.constant 0.000000e+00 : f32
    %505 = vector.broadcast %cst_149 : f32 to vector<8x32xf32>
    %cst_150 = arith.constant 0.000000e+00 : f32
    %506 = vector.broadcast %cst_150 : f32 to vector<8x32xf32>
    %cst_151 = arith.constant 0.000000e+00 : f32
    %507 = vector.broadcast %cst_151 : f32 to vector<8x32xf32>
    %c0_152 = arith.constant 0 : index
    %c0_153 = arith.constant 0 : index
    %508 = vector.load %arg12[%c0_152, %c0_153] : memref<64x256xf32, #tpu.memory_space<vmem>>, vector<8x128xf32>
    %509 = arith.truncf %504 : vector<8x32xf32> to vector<8x32xbf16>
    %cst_154 = arith.constant dense<0.000000e+00> : vector<8x128xf32>
    %510 = tpu.matmul %509, %502, %cst_154 {dimension_numbers = #tpu.dot_dimension_numbers<[1], [0], [0], [1], [0, 0, 1, 1], [], []>} : vector<8x32xbf16>, vector<32x128xbf16>, vector<8x128xf32> -> vector<8x128xf32>
    %511 = arith.addf %508, %510 : vector<8x128xf32>
    %c56_155 = arith.constant 56 : index
    %c128_156 = arith.constant 128 : index
    %512 = vector.load %arg12[%c56_155, %c128_156] : memref<64x256xf32, #tpu.memory_space<vmem>>, vector<8x128xf32>
    %513 = arith.truncf %506 : vector<8x32xf32> to vector<8x32xbf16>
    %cst_157 = arith.constant dense<0.000000e+00> : vector<8x128xf32>
    %514 = tpu.matmul %513, %503, %cst_157 {dimension_numbers = #tpu.dot_dimension_numbers<[1], [0], [0], [1], [0, 0, 1, 1], [], []>} : vector<8x32xbf16>, vector<32x128xbf16>, vector<8x128xf32> -> vector<8x128xf32>
    %515 = arith.addf %512, %514 : vector<8x128xf32>
    %516 = vector.extract_strided_slice %511 {offsets = [0, 0], sizes = [8, 32], strides = [1, 1]} : vector<8x128xf32> to vector<8x32xf32>
    %517 = arith.negf %516 : vector<8x32xf32>
    %518 = math.exp %517 : vector<8x32xf32>
    %cst_158 = arith.constant 1.000000e+00 : f32
    %519 = vector.broadcast %cst_158 : f32 to vector<8x32xf32>
    %520 = arith.addf %519, %518 : vector<8x32xf32>
    %521 = arith.divf %519, %520 : vector<8x32xf32>
    %522 = vector.extract_strided_slice %511 {offsets = [0, 32], sizes = [8, 32], strides = [1, 1]} : vector<8x128xf32> to vector<8x32xf32>
    %523 = arith.negf %522 : vector<8x32xf32>
    %524 = math.exp %523 : vector<8x32xf32>
    %cst_159 = arith.constant 1.000000e+00 : f32
    %525 = vector.broadcast %cst_159 : f32 to vector<8x32xf32>
    %526 = arith.addf %525, %524 : vector<8x32xf32>
    %527 = arith.divf %525, %526 : vector<8x32xf32>
    %528 = vector.extract_strided_slice %511 {offsets = [0, 64], sizes = [8, 32], strides = [1, 1]} : vector<8x128xf32> to vector<8x32xf32>
    %529 = math.tanh %528 : vector<8x32xf32>
    %530 = vector.extract_strided_slice %511 {offsets = [0, 96], sizes = [8, 32], strides = [1, 1]} : vector<8x128xf32> to vector<8x32xf32>
    %531 = arith.negf %530 : vector<8x32xf32>
    %532 = math.exp %531 : vector<8x32xf32>
    %cst_160 = arith.constant 1.000000e+00 : f32
    %533 = vector.broadcast %cst_160 : f32 to vector<8x32xf32>
    %534 = arith.addf %533, %532 : vector<8x32xf32>
    %535 = arith.divf %533, %534 : vector<8x32xf32>
    %536 = arith.mulf %527, %505 : vector<8x32xf32>
    %537 = arith.mulf %521, %529 : vector<8x32xf32>
    %538 = arith.addf %536, %537 : vector<8x32xf32>
    %539 = math.tanh %538 : vector<8x32xf32>
    %540 = arith.mulf %535, %539 : vector<8x32xf32>
    %541 = vector.extract_strided_slice %515 {offsets = [0, 0], sizes = [8, 32], strides = [1, 1]} : vector<8x128xf32> to vector<8x32xf32>
    %542 = arith.negf %541 : vector<8x32xf32>
    %543 = math.exp %542 : vector<8x32xf32>
    %cst_161 = arith.constant 1.000000e+00 : f32
    %544 = vector.broadcast %cst_161 : f32 to vector<8x32xf32>
    %545 = arith.addf %544, %543 : vector<8x32xf32>
    %546 = arith.divf %544, %545 : vector<8x32xf32>
    %547 = vector.extract_strided_slice %515 {offsets = [0, 32], sizes = [8, 32], strides = [1, 1]} : vector<8x128xf32> to vector<8x32xf32>
    %548 = arith.negf %547 : vector<8x32xf32>
    %549 = math.exp %548 : vector<8x32xf32>
    %cst_162 = arith.constant 1.000000e+00 : f32
    %550 = vector.broadcast %cst_162 : f32 to vector<8x32xf32>
    %551 = arith.addf %550, %549 : vector<8x32xf32>
    %552 = arith.divf %550, %551 : vector<8x32xf32>
    %553 = vector.extract_strided_slice %515 {offsets = [0, 64], sizes = [8, 32], strides = [1, 1]} : vector<8x128xf32> to vector<8x32xf32>
    %554 = math.tanh %553 : vector<8x32xf32>
    %555 = vector.extract_strided_slice %515 {offsets = [0, 96], sizes = [8, 32], strides = [1, 1]} : vector<8x128xf32> to vector<8x32xf32>
    %556 = arith.negf %555 : vector<8x32xf32>
    %557 = math.exp %556 : vector<8x32xf32>
    %cst_163 = arith.constant 1.000000e+00 : f32
    %558 = vector.broadcast %cst_163 : f32 to vector<8x32xf32>
    %559 = arith.addf %558, %557 : vector<8x32xf32>
    %560 = arith.divf %558, %559 : vector<8x32xf32>
    %561 = arith.mulf %552, %507 : vector<8x32xf32>
    %562 = arith.mulf %546, %554 : vector<8x32xf32>
    %563 = arith.addf %561, %562 : vector<8x32xf32>
    %564 = math.tanh %563 : vector<8x32xf32>
    %565 = arith.mulf %560, %564 : vector<8x32xf32>
    %c56_164 = arith.constant 56 : index
    %c32_165 = arith.constant 32 : index
    %566 = vector.load %arg13[%c56_164, %c32_165] : memref<64x64xf32, #tpu.memory_space<vmem>>, vector<8x32xf32>
    tpu.vector_store %arg13[%c56_164, %c32_165], %565 {strides = array<i32>} : memref<64x64xf32, #tpu.memory_space<vmem>>, vector<8x32xf32>,
    %c8_166 = arith.constant 8 : index
    %c0_167 = arith.constant 0 : index
    %567 = vector.load %arg12[%c8_166, %c0_167] : memref<64x256xf32, #tpu.memory_space<vmem>>, vector<8x128xf32>
    %568 = arith.truncf %540 : vector<8x32xf32> to vector<8x32xbf16>
    %cst_168 = arith.constant dense<0.000000e+00> : vector<8x128xf32>
    %569 = tpu.matmul %568, %502, %cst_168 {dimension_numbers = #tpu.dot_dimension_numbers<[1], [0], [0], [1], [0, 0, 1, 1], [], []>} : vector<8x32xbf16>, vector<32x128xbf16>, vector<8x128xf32> -> vector<8x128xf32>
    %570 = arith.addf %567, %569 : vector<8x128xf32>
    %571 = vector.extract_strided_slice %570 {offsets = [0, 0], sizes = [8, 32], strides = [1, 1]} : vector<8x128xf32> to vector<8x32xf32>
    %572 = arith.negf %571 : vector<8x32xf32>
    %573 = math.exp %572 : vector<8x32xf32>
    %cst_169 = arith.constant 1.000000e+00 : f32
    %574 = vector.broadcast %cst_169 : f32 to vector<8x32xf32>
    %575 = arith.addf %574, %573 : vector<8x32xf32>
    %576 = arith.divf %574, %575 : vector<8x32xf32>
    %577 = vector.extract_strided_slice %570 {offsets = [0, 32], sizes = [8, 32], strides = [1, 1]} : vector<8x128xf32> to vector<8x32xf32>
    %578 = arith.negf %577 : vector<8x32xf32>
    %579 = math.exp %578 : vector<8x32xf32>
    %cst_170 = arith.constant 1.000000e+00 : f32
    %580 = vector.broadcast %cst_170 : f32 to vector<8x32xf32>
    %581 = arith.addf %580, %579 : vector<8x32xf32>
    %582 = arith.divf %580, %581 : vector<8x32xf32>
    %583 = vector.extract_strided_slice %570 {offsets = [0, 64], sizes = [8, 32], strides = [1, 1]} : vector<8x128xf32> to vector<8x32xf32>
    %584 = math.tanh %583 : vector<8x32xf32>
    %585 = vector.extract_strided_slice %570 {offsets = [0, 96], sizes = [8, 32], strides = [1, 1]} : vector<8x128xf32> to vector<8x32xf32>
    %586 = arith.negf %585 : vector<8x32xf32>
    %587 = math.exp %586 : vector<8x32xf32>
    %cst_171 = arith.constant 1.000000e+00 : f32
    %588 = vector.broadcast %cst_171 : f32 to vector<8x32xf32>
    %589 = arith.addf %588, %587 : vector<8x32xf32>
    %590 = arith.divf %588, %589 : vector<8x32xf32>
    %591 = arith.mulf %582, %538 : vector<8x32xf32>
    %592 = arith.mulf %576, %584 : vector<8x32xf32>
    %593 = arith.addf %591, %592 : vector<8x32xf32>
    %594 = math.tanh %593 : vector<8x32xf32>
    %595 = arith.mulf %590, %594 : vector<8x32xf32>
    %c16_172 = arith.constant 16 : index
    %c0_173 = arith.constant 0 : index
    %596 = vector.load %arg12[%c16_172, %c0_173] : memref<64x256xf32, #tpu.memory_space<vmem>>, vector<8x128xf32>
    %597 = arith.truncf %595 : vector<8x32xf32> to vector<8x32xbf16>
    %cst_174 = arith.constant dense<0.000000e+00> : vector<8x128xf32>
    %598 = tpu.matmul %597, %502, %cst_174 {dimension_numbers = #tpu.dot_dimension_numbers<[1], [0], [0], [1], [0, 0, 1, 1], [], []>} : vector<8x32xbf16>, vector<32x128xbf16>, vector<8x128xf32> -> vector<8x128xf32>
    %599 = arith.addf %596, %598 : vector<8x128xf32>
    %600 = vector.extract_strided_slice %599 {offsets = [0, 0], sizes = [8, 32], strides = [1, 1]} : vector<8x128xf32> to vector<8x32xf32>
    %601 = arith.negf %600 : vector<8x32xf32>
    %602 = math.exp %601 : vector<8x32xf32>
    %cst_175 = arith.constant 1.000000e+00 : f32
    %603 = vector.broadcast %cst_175 : f32 to vector<8x32xf32>
    %604 = arith.addf %603, %602 : vector<8x32xf32>
    %605 = arith.divf %603, %604 : vector<8x32xf32>
    %606 = vector.extract_strided_slice %599 {offsets = [0, 32], sizes = [8, 32], strides = [1, 1]} : vector<8x128xf32> to vector<8x32xf32>
    %607 = arith.negf %606 : vector<8x32xf32>
    %608 = math.exp %607 : vector<8x32xf32>
    %cst_176 = arith.constant 1.000000e+00 : f32
    %609 = vector.broadcast %cst_176 : f32 to vector<8x32xf32>
    %610 = arith.addf %609, %608 : vector<8x32xf32>
    %611 = arith.divf %609, %610 : vector<8x32xf32>
    %612 = vector.extract_strided_slice %599 {offsets = [0, 64], sizes = [8, 32], strides = [1, 1]} : vector<8x128xf32> to vector<8x32xf32>
    %613 = math.tanh %612 : vector<8x32xf32>
    %614 = vector.extract_strided_slice %599 {offsets = [0, 96], sizes = [8, 32], strides = [1, 1]} : vector<8x128xf32> to vector<8x32xf32>
    %615 = arith.negf %614 : vector<8x32xf32>
    %616 = math.exp %615 : vector<8x32xf32>
    %cst_177 = arith.constant 1.000000e+00 : f32
    %617 = vector.broadcast %cst_177 : f32 to vector<8x32xf32>
    %618 = arith.addf %617, %616 : vector<8x32xf32>
    %619 = arith.divf %617, %618 : vector<8x32xf32>
    %620 = arith.mulf %611, %593 : vector<8x32xf32>
    %621 = arith.mulf %605, %613 : vector<8x32xf32>
    %622 = arith.addf %620, %621 : vector<8x32xf32>
    %623 = math.tanh %622 : vector<8x32xf32>
    %624 = arith.mulf %619, %623 : vector<8x32xf32>
    %c24_178 = arith.constant 24 : index
    %c0_179 = arith.constant 0 : index
    %625 = vector.load %arg12[%c24_178, %c0_179] : memref<64x256xf32, #tpu.memory_space<vmem>>, vector<8x128xf32>
    %626 = arith.truncf %624 : vector<8x32xf32> to vector<8x32xbf16>
    %cst_180 = arith.constant dense<0.000000e+00> : vector<8x128xf32>
    %627 = tpu.matmul %626, %502, %cst_180 {dimension_numbers = #tpu.dot_dimension_numbers<[1], [0], [0], [1], [0, 0, 1, 1], [], []>} : vector<8x32xbf16>, vector<32x128xbf16>, vector<8x128xf32> -> vector<8x128xf32>
    %628 = arith.addf %625, %627 : vector<8x128xf32>
    %629 = vector.extract_strided_slice %628 {offsets = [0, 0], sizes = [8, 32], strides = [1, 1]} : vector<8x128xf32> to vector<8x32xf32>
    %630 = arith.negf %629 : vector<8x32xf32>
    %631 = math.exp %630 : vector<8x32xf32>
    %cst_181 = arith.constant 1.000000e+00 : f32
    %632 = vector.broadcast %cst_181 : f32 to vector<8x32xf32>
    %633 = arith.addf %632, %631 : vector<8x32xf32>
    %634 = arith.divf %632, %633 : vector<8x32xf32>
    %635 = vector.extract_strided_slice %628 {offsets = [0, 32], sizes = [8, 32], strides = [1, 1]} : vector<8x128xf32> to vector<8x32xf32>
    %636 = arith.negf %635 : vector<8x32xf32>
    %637 = math.exp %636 : vector<8x32xf32>
    %cst_182 = arith.constant 1.000000e+00 : f32
    %638 = vector.broadcast %cst_182 : f32 to vector<8x32xf32>
    %639 = arith.addf %638, %637 : vector<8x32xf32>
    %640 = arith.divf %638, %639 : vector<8x32xf32>
    %641 = vector.extract_strided_slice %628 {offsets = [0, 64], sizes = [8, 32], strides = [1, 1]} : vector<8x128xf32> to vector<8x32xf32>
    %642 = math.tanh %641 : vector<8x32xf32>
    %643 = vector.extract_strided_slice %628 {offsets = [0, 96], sizes = [8, 32], strides = [1, 1]} : vector<8x128xf32> to vector<8x32xf32>
    %644 = arith.negf %643 : vector<8x32xf32>
    %645 = math.exp %644 : vector<8x32xf32>
    %cst_183 = arith.constant 1.000000e+00 : f32
    %646 = vector.broadcast %cst_183 : f32 to vector<8x32xf32>
    %647 = arith.addf %646, %645 : vector<8x32xf32>
    %648 = arith.divf %646, %647 : vector<8x32xf32>
    %649 = arith.mulf %640, %622 : vector<8x32xf32>
    %650 = arith.mulf %634, %642 : vector<8x32xf32>
    %651 = arith.addf %649, %650 : vector<8x32xf32>
    %652 = math.tanh %651 : vector<8x32xf32>
    %653 = arith.mulf %648, %652 : vector<8x32xf32>
    %c32_184 = arith.constant 32 : index
    %c0_185 = arith.constant 0 : index
    %654 = vector.load %arg12[%c32_184, %c0_185] : memref<64x256xf32, #tpu.memory_space<vmem>>, vector<8x128xf32>
    %655 = arith.truncf %653 : vector<8x32xf32> to vector<8x32xbf16>
    %cst_186 = arith.constant dense<0.000000e+00> : vector<8x128xf32>
    %656 = tpu.matmul %655, %502, %cst_186 {dimension_numbers = #tpu.dot_dimension_numbers<[1], [0], [0], [1], [0, 0, 1, 1], [], []>} : vector<8x32xbf16>, vector<32x128xbf16>, vector<8x128xf32> -> vector<8x128xf32>
    %657 = arith.addf %654, %656 : vector<8x128xf32>
    %658 = vector.extract_strided_slice %657 {offsets = [0, 0], sizes = [8, 32], strides = [1, 1]} : vector<8x128xf32> to vector<8x32xf32>
    %659 = arith.negf %658 : vector<8x32xf32>
    %660 = math.exp %659 : vector<8x32xf32>
    %cst_187 = arith.constant 1.000000e+00 : f32
    %661 = vector.broadcast %cst_187 : f32 to vector<8x32xf32>
    %662 = arith.addf %661, %660 : vector<8x32xf32>
    %663 = arith.divf %661, %662 : vector<8x32xf32>
    %664 = vector.extract_strided_slice %657 {offsets = [0, 32], sizes = [8, 32], strides = [1, 1]} : vector<8x128xf32> to vector<8x32xf32>
    %665 = arith.negf %664 : vector<8x32xf32>
    %666 = math.exp %665 : vector<8x32xf32>
    %cst_188 = arith.constant 1.000000e+00 : f32
    %667 = vector.broadcast %cst_188 : f32 to vector<8x32xf32>
    %668 = arith.addf %667, %666 : vector<8x32xf32>
    %669 = arith.divf %667, %668 : vector<8x32xf32>
    %670 = vector.extract_strided_slice %657 {offsets = [0, 64], sizes = [8, 32], strides = [1, 1]} : vector<8x128xf32> to vector<8x32xf32>
    %671 = math.tanh %670 : vector<8x32xf32>
    %672 = vector.extract_strided_slice %657 {offsets = [0, 96], sizes = [8, 32], strides = [1, 1]} : vector<8x128xf32> to vector<8x32xf32>
    %673 = arith.negf %672 : vector<8x32xf32>
    %674 = math.exp %673 : vector<8x32xf32>
    %cst_189 = arith.constant 1.000000e+00 : f32
    %675 = vector.broadcast %cst_189 : f32 to vector<8x32xf32>
    %676 = arith.addf %675, %674 : vector<8x32xf32>
    %677 = arith.divf %675, %676 : vector<8x32xf32>
    %678 = arith.mulf %669, %651 : vector<8x32xf32>
    %679 = arith.mulf %663, %671 : vector<8x32xf32>
    %680 = arith.addf %678, %679 : vector<8x32xf32>
    %681 = math.tanh %680 : vector<8x32xf32>
    %682 = arith.mulf %677, %681 : vector<8x32xf32>
    %c40_190 = arith.constant 40 : index
    %c0_191 = arith.constant 0 : index
    %683 = vector.load %arg12[%c40_190, %c0_191] : memref<64x256xf32, #tpu.memory_space<vmem>>, vector<8x128xf32>
    %684 = arith.truncf %682 : vector<8x32xf32> to vector<8x32xbf16>
    %cst_192 = arith.constant dense<0.000000e+00> : vector<8x128xf32>
    %685 = tpu.matmul %684, %502, %cst_192 {dimension_numbers = #tpu.dot_dimension_numbers<[1], [0], [0], [1], [0, 0, 1, 1], [], []>} : vector<8x32xbf16>, vector<32x128xbf16>, vector<8x128xf32> -> vector<8x128xf32>
    %686 = arith.addf %683, %685 : vector<8x128xf32>
    %687 = vector.extract_strided_slice %686 {offsets = [0, 0], sizes = [8, 32], strides = [1, 1]} : vector<8x128xf32> to vector<8x32xf32>
    %688 = arith.negf %687 : vector<8x32xf32>
    %689 = math.exp %688 : vector<8x32xf32>
    %cst_193 = arith.constant 1.000000e+00 : f32
    %690 = vector.broadcast %cst_193 : f32 to vector<8x32xf32>
    %691 = arith.addf %690, %689 : vector<8x32xf32>
    %692 = arith.divf %690, %691 : vector<8x32xf32>
    %693 = vector.extract_strided_slice %686 {offsets = [0, 32], sizes = [8, 32], strides = [1, 1]} : vector<8x128xf32> to vector<8x32xf32>
    %694 = arith.negf %693 : vector<8x32xf32>
    %695 = math.exp %694 : vector<8x32xf32>
    %cst_194 = arith.constant 1.000000e+00 : f32
    %696 = vector.broadcast %cst_194 : f32 to vector<8x32xf32>
    %697 = arith.addf %696, %695 : vector<8x32xf32>
    %698 = arith.divf %696, %697 : vector<8x32xf32>
    %699 = vector.extract_strided_slice %686 {offsets = [0, 64], sizes = [8, 32], strides = [1, 1]} : vector<8x128xf32> to vector<8x32xf32>
    %700 = math.tanh %699 : vector<8x32xf32>
    %701 = vector.extract_strided_slice %686 {offsets = [0, 96], sizes = [8, 32], strides = [1, 1]} : vector<8x128xf32> to vector<8x32xf32>
    %702 = arith.negf %701 : vector<8x32xf32>
    %703 = math.exp %702 : vector<8x32xf32>
    %cst_195 = arith.constant 1.000000e+00 : f32
    %704 = vector.broadcast %cst_195 : f32 to vector<8x32xf32>
    %705 = arith.addf %704, %703 : vector<8x32xf32>
    %706 = arith.divf %704, %705 : vector<8x32xf32>
    %707 = arith.mulf %698, %680 : vector<8x32xf32>
    %708 = arith.mulf %692, %700 : vector<8x32xf32>
    %709 = arith.addf %707, %708 : vector<8x32xf32>
    %710 = math.tanh %709 : vector<8x32xf32>
    %711 = arith.mulf %706, %710 : vector<8x32xf32>
    %c48_196 = arith.constant 48 : index
    %c0_197 = arith.constant 0 : index
    %712 = vector.load %arg12[%c48_196, %c0_197] : memref<64x256xf32, #tpu.memory_space<vmem>>, vector<8x128xf32>
    %713 = arith.truncf %711 : vector<8x32xf32> to vector<8x32xbf16>
    %cst_198 = arith.constant dense<0.000000e+00> : vector<8x128xf32>
    %714 = tpu.matmul %713, %502, %cst_198 {dimension_numbers = #tpu.dot_dimension_numbers<[1], [0], [0], [1], [0, 0, 1, 1], [], []>} : vector<8x32xbf16>, vector<32x128xbf16>, vector<8x128xf32> -> vector<8x128xf32>
    %715 = arith.addf %712, %714 : vector<8x128xf32>
    %716 = vector.extract_strided_slice %715 {offsets = [0, 0], sizes = [8, 32], strides = [1, 1]} : vector<8x128xf32> to vector<8x32xf32>
    %717 = arith.negf %716 : vector<8x32xf32>
    %718 = math.exp %717 : vector<8x32xf32>
    %cst_199 = arith.constant 1.000000e+00 : f32
    %719 = vector.broadcast %cst_199 : f32 to vector<8x32xf32>
    %720 = arith.addf %719, %718 : vector<8x32xf32>
    %721 = arith.divf %719, %720 : vector<8x32xf32>
    %722 = vector.extract_strided_slice %715 {offsets = [0, 32], sizes = [8, 32], strides = [1, 1]} : vector<8x128xf32> to vector<8x32xf32>
    %723 = arith.negf %722 : vector<8x32xf32>
    %724 = math.exp %723 : vector<8x32xf32>
    %cst_200 = arith.constant 1.000000e+00 : f32
    %725 = vector.broadcast %cst_200 : f32 to vector<8x32xf32>
    %726 = arith.addf %725, %724 : vector<8x32xf32>
    %727 = arith.divf %725, %726 : vector<8x32xf32>
    %728 = vector.extract_strided_slice %715 {offsets = [0, 64], sizes = [8, 32], strides = [1, 1]} : vector<8x128xf32> to vector<8x32xf32>
    %729 = math.tanh %728 : vector<8x32xf32>
    %730 = vector.extract_strided_slice %715 {offsets = [0, 96], sizes = [8, 32], strides = [1, 1]} : vector<8x128xf32> to vector<8x32xf32>
    %731 = arith.negf %730 : vector<8x32xf32>
    %732 = math.exp %731 : vector<8x32xf32>
    %cst_201 = arith.constant 1.000000e+00 : f32
    %733 = vector.broadcast %cst_201 : f32 to vector<8x32xf32>
    %734 = arith.addf %733, %732 : vector<8x32xf32>
    %735 = arith.divf %733, %734 : vector<8x32xf32>
    %736 = arith.mulf %727, %709 : vector<8x32xf32>
    %737 = arith.mulf %721, %729 : vector<8x32xf32>
    %738 = arith.addf %736, %737 : vector<8x32xf32>
    %739 = math.tanh %738 : vector<8x32xf32>
    %740 = arith.mulf %735, %739 : vector<8x32xf32>
    %c56_202 = arith.constant 56 : index
    %c0_203 = arith.constant 0 : index
    %741 = vector.load %arg12[%c56_202, %c0_203] : memref<64x256xf32, #tpu.memory_space<vmem>>, vector<8x128xf32>
    %742 = arith.truncf %740 : vector<8x32xf32> to vector<8x32xbf16>
    %cst_204 = arith.constant dense<0.000000e+00> : vector<8x128xf32>
    %743 = tpu.matmul %742, %502, %cst_204 {dimension_numbers = #tpu.dot_dimension_numbers<[1], [0], [0], [1], [0, 0, 1, 1], [], []>} : vector<8x32xbf16>, vector<32x128xbf16>, vector<8x128xf32> -> vector<8x128xf32>
    %744 = arith.addf %741, %743 : vector<8x128xf32>
    %745 = vector.extract_strided_slice %744 {offsets = [0, 0], sizes = [8, 32], strides = [1, 1]} : vector<8x128xf32> to vector<8x32xf32>
    %746 = arith.negf %745 : vector<8x32xf32>
    %747 = math.exp %746 : vector<8x32xf32>
    %cst_205 = arith.constant 1.000000e+00 : f32
    %748 = vector.broadcast %cst_205 : f32 to vector<8x32xf32>
    %749 = arith.addf %748, %747 : vector<8x32xf32>
    %750 = arith.divf %748, %749 : vector<8x32xf32>
    %751 = vector.extract_strided_slice %744 {offsets = [0, 32], sizes = [8, 32], strides = [1, 1]} : vector<8x128xf32> to vector<8x32xf32>
    %752 = arith.negf %751 : vector<8x32xf32>
    %753 = math.exp %752 : vector<8x32xf32>
    %cst_206 = arith.constant 1.000000e+00 : f32
    %754 = vector.broadcast %cst_206 : f32 to vector<8x32xf32>
    %755 = arith.addf %754, %753 : vector<8x32xf32>
    %756 = arith.divf %754, %755 : vector<8x32xf32>
    %757 = vector.extract_strided_slice %744 {offsets = [0, 64], sizes = [8, 32], strides = [1, 1]} : vector<8x128xf32> to vector<8x32xf32>
    %758 = math.tanh %757 : vector<8x32xf32>
    %759 = vector.extract_strided_slice %744 {offsets = [0, 96], sizes = [8, 32], strides = [1, 1]} : vector<8x128xf32> to vector<8x32xf32>
    %760 = arith.negf %759 : vector<8x32xf32>
    %761 = math.exp %760 : vector<8x32xf32>
    %cst_207 = arith.constant 1.000000e+00 : f32
    %762 = vector.broadcast %cst_207 : f32 to vector<8x32xf32>
    %763 = arith.addf %762, %761 : vector<8x32xf32>
    %764 = arith.divf %762, %763 : vector<8x32xf32>
    %765 = arith.mulf %756, %738 : vector<8x32xf32>
    %766 = arith.mulf %750, %758 : vector<8x32xf32>
    %767 = arith.addf %765, %766 : vector<8x32xf32>
    %768 = math.tanh %767 : vector<8x32xf32>
    %769 = arith.mulf %764, %768 : vector<8x32xf32>
    %c56_208 = arith.constant 56 : index
    %c0_209 = arith.constant 0 : index
    %770 = vector.load %arg13[%c56_208, %c0_209] : memref<64x64xf32, #tpu.memory_space<vmem>>, vector<8x32xf32>
    tpu.vector_store %arg13[%c56_208, %c0_209], %769 {strides = array<i32>} : memref<64x64xf32, #tpu.memory_space<vmem>>, vector<8x32xf32>,
    %c56_210 = arith.constant 56 : index
    %c0_211 = arith.constant 0 : index
    %771 = vector.load %arg13[%c56_210, %c0_211] : memref<64x64xf32, #tpu.memory_space<vmem>>, vector<8x64xf32>
    %772 = arith.truncf %771 : vector<8x64xf32> to vector<8x64xbf16>
    %c0_212 = arith.constant 0 : index
    %c0_213 = arith.constant 0 : index
    %773 = vector.load %arg9[%c0_212, %c0_213] : memref<64x8xbf16, #tpu.memory_space<vmem>>, vector<64x8xbf16>
    %cst_214 = arith.constant dense<0.000000e+00> : vector<8x8xf32>
    %774 = tpu.matmul %772, %773, %cst_214 {dimension_numbers = #tpu.dot_dimension_numbers<[1], [0], [0], [1], [0, 0, 1, 1], [], []>} : vector<8x64xbf16>, vector<64x8xbf16>, vector<8x8xf32> -> vector<8x8xf32>
    %c0_215 = arith.constant 0 : index
    %c0_216 = arith.constant 0 : index
    %775 = vector.load %arg10[%c0_215, %c0_216] : memref<1x8xf32, #tpu.memory_space<vmem>>, vector<1x8xf32>
    %776 = vector.broadcast %775 : vector<1x8xf32> to vector<8x8xf32>
    %777 = arith.addf %774, %776 : vector<8x8xf32>
    %c0_217 = arith.constant 0 : index
    %c0_218 = arith.constant 0 : index
    %778 = vector.load %arg11[%c0_217, %c0_218] : memref<8x8xf32, #tpu.memory_space<vmem>>, vector<8x8xf32>
    tpu.vector_store %arg11[%c0_217, %c0_218], %777 {strides = array<i32>} : memref<8x8xf32, #tpu.memory_space<vmem>>, vector<8x8xf32>,
    return
  }
}

</mosaic_0001>

<llo_original>
// kernel: bidirectional_lstm_forward.1
$region0: #{bidirectional_lstm_forward.1}
  #allocation0 [shape = 'u32[]', space=smem, size = 0x4, offset = 0x4, fixed_abs, tag = 'smem constant byte address 0x4 - core index']
  #allocation1 [shape = 'u32[144,128]{1,0:T(1,128)}', space=vmem, size = 0x12000, scoped, tag = 'internal scratch']
  #allocation2 [shape = 'f32[64,256]{1,0:T(8,128)}', space=vmem, size = 0x10000, scoped, tag = 'scratch operand']
  #allocation3 [shape = 'f32[64,64]{1,0:T(8,128)}', space=vmem, size = 0x8000, scoped, tag = 'scratch operand']
  %s0 = inlined_call_operand.vmem [shape: f32[64,4], index: 0, kind: input, shape index: {}]
  %s1 = inlined_call_operand.vmem [shape: bf16[4,256], index: 1, kind: input, shape index: {}]
  %s2 = inlined_call_operand.vmem [shape: f32[1,256], index: 2, kind: input, shape index: {}]
  %s3 = inlined_call_operand.vmem [shape: bf16[32,128], index: 3, kind: input, shape index: {}]
  %s4 = inlined_call_operand.vmem [shape: bf16[32,128], index: 4, kind: input, shape index: {}]
  %s5 = inlined_call_operand.vmem [shape: bf16[64,256], index: 5, kind: input, shape index: {}]
  %s6 = inlined_call_operand.vmem [shape: f32[1,256], index: 6, kind: input, shape index: {}]
  %s7 = inlined_call_operand.vmem [shape: bf16[32,128], index: 7, kind: input, shape index: {}]
  %s8 = inlined_call_operand.vmem [shape: bf16[32,128], index: 8, kind: input, shape index: {}]
  %s9 = inlined_call_operand.vmem [shape: bf16[64,8], index: 9, kind: input, shape index: {}]
  %s10 = inlined_call_operand.vmem [shape: f32[1,8], index: 10, kind: input, shape index: {}]
  %s11 = inlined_call_operand.vmem [shape: f32[8,8], index: 11, kind: output, shape index: {}]
  %s12 = sld [smem:[#allocation0]]
  $region54: #{bidirectional_lstm_forward.1} parent=0
    _
  %s14 = ssub.s32 1, %s12
  %s15 = scalar_select 0, %s14, %s12
  // Predicated region
  $region2: #{bidirectional_lstm_forward.1} parent=0 // pred_check
    _
  $region3: #{bidirectional_lstm_forward.1} parent=0 // pred_check_branch
    %17 = sbr.rel (0) target = $region5
  $region4: #{bidirectional_lstm_forward.1} parent=0 // pred_region
    _
  $region5: #{bidirectional_lstm_forward.1} parent=0 // pred_fallthru
    _
  // Predicated region
  $region6: #{bidirectional_lstm_forward.1} parent=0 // pred_check
    _
  $region7: #{bidirectional_lstm_forward.1} parent=0 // pred_check_branch
    %19 = sbr.rel (0) target = $region9
  $region8: #{bidirectional_lstm_forward.1} parent=0 // pred_region
    _
  $region9: #{bidirectional_lstm_forward.1} parent=0 // pred_fallthru
    _
  // Predicated region
  $region10: #{bidirectional_lstm_forward.1} parent=0 // pred_check
    _
  $region11: #{bidirectional_lstm_forward.1} parent=0 // pred_check_branch
    %21 = sbr.rel (0) target = $region13
  $region12: #{bidirectional_lstm_forward.1} parent=0 // pred_region
    _
  $region13: #{bidirectional_lstm_forward.1} parent=0 // pred_fallthru
    _
  // Predicated region
  $region14: #{bidirectional_lstm_forward.1} parent=0 // pred_check
    _
  $region15: #{bidirectional_lstm_forward.1} parent=0 // pred_check_branch
    %23 = sbr.rel (0) target = $region17
  $region16: #{bidirectional_lstm_forward.1} parent=0 // pred_region
    _
  $region17: #{bidirectional_lstm_forward.1} parent=0 // pred_fallthru
    _
  // Predicated region
  $region18: #{bidirectional_lstm_forward.1} parent=0 // pred_check
    _
  $region19: #{bidirectional_lstm_forward.1} parent=0 // pred_check_branch
    %25 = sbr.rel (0) target = $region21
  $region20: #{bidirectional_lstm_forward.1} parent=0 // pred_region
    _
  $region21: #{bidirectional_lstm_forward.1} parent=0 // pred_fallthru
    _
  // Predicated region
  $region22: #{bidirectional_lstm_forward.1} parent=0 // pred_check
    _
  $region23: #{bidirectional_lstm_forward.1} parent=0 // pred_check_branch
    %27 = sbr.rel (0) target = $region25
  $region24: #{bidirectional_lstm_forward.1} parent=0 // pred_region
    _
  $region25: #{bidirectional_lstm_forward.1} parent=0 // pred_fallthru
    _
  // Predicated region
  $region26: #{bidirectional_lstm_forward.1} parent=0 // pred_check
    _
  $region27: #{bidirectional_lstm_forward.1} parent=0 // pred_check_branch
    %29 = sbr.rel (0) target = $region29
  $region28: #{bidirectional_lstm_forward.1} parent=0 // pred_region
    _
  $region29: #{bidirectional_lstm_forward.1} parent=0 // pred_fallthru
    _
  // Predicated region
  $region30: #{bidirectional_lstm_forward.1} parent=0 // pred_check
    _
  $region31: #{bidirectional_lstm_forward.1} parent=0 // pred_check_branch
    %31 = sbr.rel (0) target = $region33
  $region32: #{bidirectional_lstm_forward.1} parent=0 // pred_region
    _
  $region33: #{bidirectional_lstm_forward.1} parent=0 // pred_fallthru
    _
  // Predicated region
  $region34: #{bidirectional_lstm_forward.1} parent=0 // pred_check
    _
  $region35: #{bidirectional_lstm_forward.1} parent=0 // pred_check_branch
    %33 = sbr.rel (0) target = $region37
  $region36: #{bidirectional_lstm_forward.1} parent=0 // pred_region
    _
  $region37: #{bidirectional_lstm_forward.1} parent=0 // pred_fallthru
    _
  // Predicated region
  $region38: #{bidirectional_lstm_forward.1} parent=0 // pred_check
    _
  $region39: #{bidirectional_lstm_forward.1} parent=0 // pred_check_branch
    %35 = sbr.rel (0) target = $region41
  $region40: #{bidirectional_lstm_forward.1} parent=0 // pred_region
    _
  $region41: #{bidirectional_lstm_forward.1} parent=0 // pred_fallthru
    _
  // Predicated region
  $region42: #{bidirectional_lstm_forward.1} parent=0 // pred_check
    _
  $region43: #{bidirectional_lstm_forward.1} parent=0 // pred_check_branch
    %37 = sbr.rel (0) target = $region45
  $region44: #{bidirectional_lstm_forward.1} parent=0 // pred_region
    _
  $region45: #{bidirectional_lstm_forward.1} parent=0 // pred_fallthru
    _
  %v39 = vld [vmem:[%s0] sm:$0xff]
  %v40 = vld [vmem:[%s0 + $0x8] sm:$0xff]
  %v41 = vld [vmem:[%s0 + $0x10] sm:$0xff]
  %v42 = vld [vmem:[%s0 + $0x18] sm:$0xff]
  %v43 = vld [vmem:[%s0 + $0x20] sm:$0xff]
  %v44 = vld [vmem:[%s0 + $0x28] sm:$0xff]
  %v45 = vld [vmem:[%s0 + $0x30] sm:$0xff]
  %v46 = vld [vmem:[%s0 + $0x38] sm:$0xff]
  %v47 = vpack.c.bf16 %v40, %v39
  %v48 = vpack.c.bf16 %v42, %v41
  %v49 = vpack.c.bf16 %v44, %v43
  %v50 = vpack.c.bf16 %v46, %v45
  %v51 = vld [vmem:[%s1] sm:$0xf]
  %v52 = vld [vmem:[%s2] sm:$0x3]
  %v54 = vlaneseq
  %v55 = vshrl.u32 %v54, 7
  %v56 = vsub.s32 0, %v55
  %v57 = vrot.slane %v52, %v56
  %v58 = vlaneseq
  %v59 = vshrl.u32 %v58, 7
  %v60 = vsub.s32 1, %v59
  %v61 = vrot.slane %v52, %v60
  %v66 = vunpack.c.l.s4 1983009808
  %v67 = vunpack.c.0.s8 %v66
  %v68 = vlaneseq
  %v69 = vshrl.u32 %v68, 7
  %v70 = vsub.s32 %v67, %v69
  %v71 = vrot.slane %v51, %v70
  %v72 = vcombine.high %v71, %v71
  %vm73 = vcmask 31744
  %v75 = vsel %vm73, %v47, 0
  %v78 = vsel %vm73, %v48, 0
  %v81 = vsel %vm73, %v49, 0
  %v84 = vsel %vm73, %v50, 0
  %vm86 = vcmask 1041408
  %v88 = vsel %vm86, %v71, 0
  %v91 = vsel %vm86, %v72, 0
  %93 = vmatprep.subr.bf16.mxu0 %v91
  %94 = vmatpush1.bf16.msra.mxu0 %v88
  %95 = vmatprep.subr.bf16.mxu0 0
  %96 = vmatpush1.bf16.msra.mxu0 0
  %97 = vmatprep.subr.bf16.mxu0 0
  %98 = vmatpush1.bf16.msra.mxu0 0
  %99 = vmatprep.subr.bf16.mxu0 0
  %100 = vmatpush1.bf16.msra.mxu0 0
  %101 = vmatprep.subr.bf16.mxu0 0
  %102 = vmatpush1.bf16.msra.mxu0 0
  %103 = vmatprep.subr.bf16.mxu0 0
  %104 = vmatpush1.bf16.msra.mxu0 0
  %105 = vmatprep.subr.bf16.mxu0 0
  %106 = vmatpush1.bf16.msra.mxu0 0
  %107 = vmatprep.subr.bf16.mxu0 0
  %108 = vmatpush1.bf16.msra.mxu0 0
  %109 = vmatprep.subr.bf16.mxu0 0
  %110 = vmatpush1.bf16.msra.mxu0 0
  %111 = vmatprep.subr.bf16.mxu0 0
  %112 = vmatpush1.bf16.msra.mxu0 0
  %113 = vmatprep.subr.bf16.mxu0 0
  %114 = vmatpush1.bf16.msra.mxu0 0
  %115 = vmatprep.subr.bf16.mxu0 0
  %116 = vmatpush1.bf16.msra.mxu0 0
  %117 = vmatprep.subr.bf16.mxu0 0
  %118 = vmatpush1.bf16.msra.mxu0 0
  %119 = vmatprep.subr.bf16.mxu0 0
  %120 = vmatpush1.bf16.msra.mxu0 0
  %121 = vmatprep.subr.bf16.mxu0 0
  %122 = vmatpush1.bf16.msra.mxu0 0
  %123 = vmatprep.subr.bf16.mxu0 0
  %124 = vmatpush1.bf16.msra.mxu0 0
  %125 = vmatprep.mubr.bf16.mxu0 0
  %126 = vmatmul.mubr.bf16.gmra.mrb[0].mxu0 %v75
  %v127 = vpop.f32.mrb[0].mxu0
  %v128 = vadd.f32 %v57, %v127
  %v129 = vpop.f32.mrb[0].mxu0
  %v130 = vadd.f32 %v61, %v129
  %v131 = vpop.f32.mrb[0].mxu0
  %v132 = vadd.f32 %v57, %v131
  %v133 = vpop.f32.mrb[0].mxu0
  %v134 = vadd.f32 %v61, %v133
  %135 = vmatprep.mubr.bf16.mxu0 0
  %136 = vmatmul.mubr.bf16.gmra.mrb[0].mxu0 %v78
  %v137 = vpop.f32.mrb[0].mxu0
  %v138 = vadd.f32 %v57, %v137
  %v139 = vpop.f32.mrb[0].mxu0
  %v140 = vadd.f32 %v61, %v139
  %v141 = vpop.f32.mrb[0].mxu0
  %v142 = vadd.f32 %v57, %v141
  %v143 = vpop.f32.mrb[0].mxu0
  %v144 = vadd.f32 %v61, %v143
  %145 = vmatprep.mubr.bf16.mxu0 0
  %146 = vmatmul.mubr.bf16.gmra.mrb[0].mxu0 %v81
  %v147 = vpop.f32.mrb[0].mxu0
  %v148 = vadd.f32 %v57, %v147
  %v149 = vpop.f32.mrb[0].mxu0
  %v150 = vadd.f32 %v61, %v149
  %v151 = vpop.f32.mrb[0].mxu0
  %v152 = vadd.f32 %v57, %v151
  %v153 = vpop.f32.mrb[0].mxu0
  %v154 = vadd.f32 %v61, %v153
  %155 = vmatprep.mubr.bf16.mxu0 0
  %156 = vmatmul.mubr.bf16.gmra.mrb[0].mxu0 %v84
  %v157 = vpop.f32.mrb[0].mxu0
  %v158 = vadd.f32 %v57, %v157
  %v159 = vpop.f32.mrb[0].mxu0
  %v160 = vadd.f32 %v61, %v159
  %v161 = vpop.f32.mrb[0].mxu0
  %v162 = vadd.f32 %v57, %v161
  %v163 = vpop.f32.mrb[0].mxu0
  %v164 = vadd.f32 %v61, %v163
  %165 = vdwg.mxu0
  %166 = vst [vmem:[#allocation2] sm:$0xff] %v128
  %167 = vst [vmem:[#allocation2 + $0x8] sm:$0xff] %v130
  %168 = vst [vmem:[#allocation2 + $0x10] sm:$0xff] %v132
  %169 = vst [vmem:[#allocation2 + $0x18] sm:$0xff] %v134
  %170 = vst [vmem:[#allocation2 + $0x20] sm:$0xff] %v138
  %171 = vst [vmem:[#allocation2 + $0x28] sm:$0xff] %v140
  %172 = vst [vmem:[#allocation2 + $0x30] sm:$0xff] %v142
  %173 = vst [vmem:[#allocation2 + $0x38] sm:$0xff] %v144
  %174 = vst [vmem:[#allocation2 + $0x40] sm:$0xff] %v148
  %175 = vst [vmem:[#allocation2 + $0x48] sm:$0xff] %v150
  %176 = vst [vmem:[#allocation2 + $0x50] sm:$0xff] %v152
  %177 = vst [vmem:[#allocation2 + $0x58] sm:$0xff] %v154
  %178 = vst [vmem:[#allocation2 + $0x60] sm:$0xff] %v158
  %179 = vst [vmem:[#allocation2 + $0x68] sm:$0xff] %v160
  %180 = vst [vmem:[#allocation2 + $0x70] sm:$0xff] %v162
  %181 = vst [vmem:[#allocation2 + $0x78] sm:$0xff] %v164
  %v182 = vld [vmem:[%s3] sm:$0xf]
  %v183 = vld [vmem:[%s3 + $0x4] sm:$0xf]
  %v184 = vld [vmem:[%s3 + $0x8] sm:$0xf]
  %v185 = vld [vmem:[%s3 + $0xc] sm:$0xf]
  %v186 = vld [vmem:[%s4] sm:$0xf]
  %v187 = vld [vmem:[%s4 + $0x4] sm:$0xf]
  %v188 = vld [vmem:[%s4 + $0x8] sm:$0xf]
  %v189 = vld [vmem:[%s4 + $0xc] sm:$0xf]
  %v190 = vld [vmem:[#allocation2] sm:$0xff]
  %v195 = vunpack.c.l.b16 %v182
  %v196 = vunpack.c.l.b16 %v183
  %v197 = vunpack.c.l.b16 %v184
  %v198 = vunpack.c.l.b16 %v185
  %v199 = vpack.c.b16 %v196, %v195
  %v200 = vpack.c.b16 %v198, %v197
  %vm203 = vcmask 261120
  %v205 = vsel %vm203, 0, 0
  %207 = vmatprep.subr.bf16.mxu0 0
  %208 = vmatpush1.bf16.msra.mxu0 %v199
  %209 = vmatprep.subr.bf16.mxu0 0
  %210 = vmatpush1.bf16.msra.mxu0 %v200
  %211 = vmatprep.subr.bf16.mxu0 0
  %212 = vmatpush1.bf16.msra.mxu0 0
  %213 = vmatprep.subr.bf16.mxu0 0
  %214 = vmatpush1.bf16.msra.mxu0 0
  %215 = vmatprep.subr.bf16.mxu0 0
  %216 = vmatpush1.bf16.msra.mxu0 0
  %217 = vmatprep.subr.bf16.mxu0 0
  %218 = vmatpush1.bf16.msra.mxu0 0
  %219 = vmatprep.subr.bf16.mxu0 0
  %220 = vmatpush1.bf16.msra.mxu0 0
  %221 = vmatprep.subr.bf16.mxu0 0
  %222 = vmatpush1.bf16.msra.mxu0 0
  %223 = vmatprep.subr.bf16.mxu0 0
  %224 = vmatpush1.bf16.msra.mxu0 0
  %225 = vmatprep.subr.bf16.mxu0 0
  %226 = vmatpush1.bf16.msra.mxu0 0
  %227 = vmatprep.subr.bf16.mxu0 0
  %228 = vmatpush1.bf16.msra.mxu0 0
  %229 = vmatprep.subr.bf16.mxu0 0
  %230 = vmatpush1.bf16.msra.mxu0 0
  %231 = vmatprep.subr.bf16.mxu0 0
  %232 = vmatpush1.bf16.msra.mxu0 0
  %233 = vmatprep.subr.bf16.mxu0 0
  %234 = vmatpush1.bf16.msra.mxu0 0
  %235 = vmatprep.subr.bf16.mxu0 0
  %236 = vmatpush1.bf16.msra.mxu0 0
  %237 = vmatprep.subr.bf16.mxu0 0
  %238 = vmatpush1.bf16.msra.mxu0 0
  %239 = vmatprep.mubr.bf16.mxu0 0
  %240 = vmatmul.mubr.bf16.gmra.mrb[0].mxu0 %v205
  %v241 = vpop.f32.mrb[0].mxu0
  %v242 = vadd.f32 0.0, %v241
  %v243 = vpop.f32.mrb[0].mxu0
  %v244 = vpop.f32.mrb[0].mxu0
  %v245 = vpop.f32.mrb[0].mxu0
  %246 = vdwg.mxu0
  %v247 = vadd.f32 %v190, %v242
  %v248 = vld [vmem:[#allocation2 + $0x78] sm:$0xff]
  %v253 = vunpack.c.l.b16 %v186
  %v254 = vunpack.c.l.b16 %v187
  %v255 = vunpack.c.l.b16 %v188
  %v256 = vunpack.c.l.b16 %v189
  %v257 = vpack.c.b16 %v254, %v253
  %v258 = vpack.c.b16 %v256, %v255
  %261 = vmatprep.subr.bf16.mxu0 0
  %262 = vmatpush1.bf16.msra.mxu0 %v257
  %263 = vmatprep.subr.bf16.mxu0 0
  %264 = vmatpush1.bf16.msra.mxu0 %v258
  %265 = vmatprep.subr.bf16.mxu0 0
  %266 = vmatpush1.bf16.msra.mxu0 0
  %267 = vmatprep.subr.bf16.mxu0 0
  %268 = vmatpush1.bf16.msra.mxu0 0
  %269 = vmatprep.subr.bf16.mxu0 0
  %270 = vmatpush1.bf16.msra.mxu0 0
  %271 = vmatprep.subr.bf16.mxu0 0
  %272 = vmatpush1.bf16.msra.mxu0 0
  %273 = vmatprep.subr.bf16.mxu0 0
  %274 = vmatpush1.bf16.msra.mxu0 0
  %275 = vmatprep.subr.bf16.mxu0 0
  %276 = vmatpush1.bf16.msra.mxu0 0
  %277 = vmatprep.subr.bf16.mxu0 0
  %278 = vmatpush1.bf16.msra.mxu0 0
  %279 = vmatprep.subr.bf16.mxu0 0
  %280 = vmatpush1.bf16.msra.mxu0 0
  %281 = vmatprep.subr.bf16.mxu0 0
  %282 = vmatpush1.bf16.msra.mxu0 0
  %283 = vmatprep.subr.bf16.mxu0 0
  %284 = vmatpush1.bf16.msra.mxu0 0
  %285 = vmatprep.subr.bf16.mxu0 0
  %286 = vmatpush1.bf16.msra.mxu0 0
  %287 = vmatprep.subr.bf16.mxu0 0
  %288 = vmatpush1.bf16.msra.mxu0 0
  %289 = vmatprep.subr.bf16.mxu0 0
  %290 = vmatpush1.bf16.msra.mxu0 0
  %291 = vmatprep.subr.bf16.mxu0 0
  %292 = vmatpush1.bf16.msra.mxu0 0
  %293 = vmatprep.mubr.bf16.mxu0 0
  %294 = vmatmul.mubr.bf16.gmra.mrb[0].mxu0 %v205
  %v295 = vpop.f32.mrb[0].mxu0
  %v296 = vadd.f32 0.0, %v295
  %v297 = vpop.f32.mrb[0].mxu0
  %v298 = vpop.f32.mrb[0].mxu0
  %v299 = vpop.f32.mrb[0].mxu0
  %300 = vdwg.mxu0
  %v301 = vadd.f32 %v248, %v296
  %v302 = vxor.u32 %v247, 2147483648
  %v303 = vmul.f32 %v302, 1.442695
  %v304 = vpow.pop %v303
  %v305 = vadd.f32 %v304, 1.0
  %v306 = vrcp.pop %v305
  %v307 = vmul.f32 1.0, %v306
  %v308 = vtanh.pop %v247
  %v309 = vmul.f32 %v307, 0.0
  %311 = vrot.lane.b32.xlu0 %v308, 64
  %v312 = vpop.permute.xlu0 %311
  %v314 = vmul.f32 %v307, %v312
  %316 = vrot.lane.b32.xlu0 %v314, 32
  %v317 = vpop.permute.xlu0 %316
  %v319 = vadd.f32 %v309, %v317
  %v320 = vtanh.pop %v319
  %322 = vrot.lane.b32.xlu0 %v320, 64
  %v323 = vpop.permute.xlu0 %322
  %v325 = vmul.f32 %v307, %v323
  %v326 = vxor.u32 %v301, 2147483648
  %v327 = vmul.f32 %v326, 1.442695
  %v328 = vpow.pop %v327
  %v329 = vadd.f32 %v328, 1.0
  %v330 = vrcp.pop %v329
  %v331 = vmul.f32 1.0, %v330
  %v332 = vtanh.pop %v301
  %v333 = vmul.f32 %v331, 0.0
  %335 = vrot.lane.b32.xlu0 %v332, 64
  %v336 = vpop.permute.xlu0 %335
  %v338 = vmul.f32 %v331, %v336
  %340 = vrot.lane.b32.xlu0 %v338, 32
  %v341 = vpop.permute.xlu0 %340
  %v343 = vadd.f32 %v333, %v341
  %v344 = vtanh.pop %v343
  %346 = vrot.lane.b32.xlu0 %v344, 64
  %v347 = vpop.permute.xlu0 %346
  %v349 = vmul.f32 %v331, %v347
  %351 = vrot.lane.b32.xlu0 %v325, 32
  %v352 = vpop.permute.xlu0 %351
  %354 = vst.msk [vmem:[#allocation3] sm:$0xff] %vm203, %v352
  %356 = vrot.lane.b32.xlu0 %v349, 64
  %v357 = vpop.permute.xlu0 %356
  %vm359 = vcmask 523520
  %360 = vst.msk [vmem:[#allocation3 + $0x38] sm:$0xff] %vm359, %v357
  %v361 = vld [vmem:[#allocation2 + $0x10] sm:$0xff]
  %v362 = vpack.c.bf16 %v325, %v325
  %364 = vrot.lane.b32.xlu0 %v362, 32
  %v365 = vpop.permute.xlu0 %364
  %v367 = vsel %vm203, %v365, 0
  %369 = vmatprep.subr.bf16.mxu0 0
  %370 = vmatpush1.bf16.msra.mxu0 %v199
  %371 = vmatprep.subr.bf16.mxu0 0
  %372 = vmatpush1.bf16.msra.mxu0 %v200
  %373 = vmatprep.subr.bf16.mxu0 0
  %374 = vmatpush1.bf16.msra.mxu0 0
  %375 = vmatprep.subr.bf16.mxu0 0
  %376 = vmatpush1.bf16.msra.mxu0 0
  %377 = vmatprep.subr.bf16.mxu0 0
  %378 = vmatpush1.bf16.msra.mxu0 0
  %379 = vmatprep.subr.bf16.mxu0 0
  %380 = vmatpush1.bf16.msra.mxu0 0
  %381 = vmatprep.subr.bf16.mxu0 0
  %382 = vmatpush1.bf16.msra.mxu0 0
  %383 = vmatprep.subr.bf16.mxu0 0
  %384 = vmatpush1.bf16.msra.mxu0 0
  %385 = vmatprep.subr.bf16.mxu0 0
  %386 = vmatpush1.bf16.msra.mxu0 0
  %387 = vmatprep.subr.bf16.mxu0 0
  %388 = vmatpush1.bf16.msra.mxu0 0
  %389 = vmatprep.subr.bf16.mxu0 0
  %390 = vmatpush1.bf16.msra.mxu0 0
  %391 = vmatprep.subr.bf16.mxu0 0
  %392 = vmatpush1.bf16.msra.mxu0 0
  %393 = vmatprep.subr.bf16.mxu0 0
  %394 = vmatpush1.bf16.msra.mxu0 0
  %395 = vmatprep.subr.bf16.mxu0 0
  %396 = vmatpush1.bf16.msra.mxu0 0
  %397 = vmatprep.subr.bf16.mxu0 0
  %398 = vmatpush1.bf16.msra.mxu0 0
  %399 = vmatprep.subr.bf16.mxu0 0
  %400 = vmatpush1.bf16.msra.mxu0 0
  %401 = vmatprep.mubr.bf16.mxu0 0
  %402 = vmatmul.mubr.bf16.gmra.mrb[0].mxu0 %v367
  %v403 = vpop.f32.mrb[0].mxu0
  %v404 = vadd.f32 0.0, %v403
  %v405 = vpop.f32.mrb[0].mxu0
  %v406 = vpop.f32.mrb[0].mxu0
  %v407 = vpop.f32.mrb[0].mxu0
  %408 = vdwg.mxu0
  %v409 = vadd.f32 %v361, %v404
  %v410 = vld [vmem:[#allocation2 + $0x68] sm:$0xff]
  %v411 = vpack.c.bf16 %v349, %v349
  %413 = vrot.lane.b32.xlu0 %v411, 32
  %v414 = vpop.permute.xlu0 %413
  %v416 = vsel %vm203, %v414, 0
  %418 = vmatprep.subr.bf16.mxu0 0
  %419 = vmatpush1.bf16.msra.mxu0 %v257
  %420 = vmatprep.subr.bf16.mxu0 0
  %421 = vmatpush1.bf16.msra.mxu0 %v258
  %422 = vmatprep.subr.bf16.mxu0 0
  %423 = vmatpush1.bf16.msra.mxu0 0
  %424 = vmatprep.subr.bf16.mxu0 0
  %425 = vmatpush1.bf16.msra.mxu0 0
  %426 = vmatprep.subr.bf16.mxu0 0
  %427 = vmatpush1.bf16.msra.mxu0 0
  %428 = vmatprep.subr.bf16.mxu0 0
  %429 = vmatpush1.bf16.msra.mxu0 0
  %430 = vmatprep.subr.bf16.mxu0 0
  %431 = vmatpush1.bf16.msra.mxu0 0
  %432 = vmatprep.subr.bf16.mxu0 0
  %433 = vmatpush1.bf16.msra.mxu0 0
  %434 = vmatprep.subr.bf16.mxu0 0
  %435 = vmatpush1.bf16.msra.mxu0 0
  %436 = vmatprep.subr.bf16.mxu0 0
  %437 = vmatpush1.bf16.msra.mxu0 0
  %438 = vmatprep.subr.bf16.mxu0 0
  %439 = vmatpush1.bf16.msra.mxu0 0
  %440 = vmatprep.subr.bf16.mxu0 0
  %441 = vmatpush1.bf16.msra.mxu0 0
  %442 = vmatprep.subr.bf16.mxu0 0
  %443 = vmatpush1.bf16.msra.mxu0 0
  %444 = vmatprep.subr.bf16.mxu0 0
  %445 = vmatpush1.bf16.msra.mxu0 0
  %446 = vmatprep.subr.bf16.mxu0 0
  %447 = vmatpush1.bf16.msra.mxu0 0
  %448 = vmatprep.subr.bf16.mxu0 0
  %449 = vmatpush1.bf16.msra.mxu0 0
  %450 = vmatprep.mubr.bf16.mxu0 0
  %451 = vmatmul.mubr.bf16.gmra.mrb[0].mxu0 %v416
  %v452 = vpop.f32.mrb[0].mxu0
  %v453 = vadd.f32 0.0, %v452
  %v454 = vpop.f32.mrb[0].mxu0
  %v455 = vpop.f32.mrb[0].mxu0
  %v456 = vpop.f32.mrb[0].mxu0
  %457 = vdwg.mxu0
  %v458 = vadd.f32 %v410, %v453
  %v459 = vxor.u32 %v409, 2147483648
  %v460 = vmul.f32 %v459, 1.442695
  %v461 = vpow.pop %v460
  %v462 = vadd.f32 %v461, 1.0
  %v463 = vrcp.pop %v462
  %v464 = vmul.f32 1.0, %v463
  %v465 = vtanh.pop %v409
  %v466 = vmul.f32 %v464, %v319
  %468 = vrot.lane.b32.xlu0 %v465, 64
  %v469 = vpop.permute.xlu0 %468
  %v471 = vmul.f32 %v464, %v469
  %473 = vrot.lane.b32.xlu0 %v471, 32
  %v474 = vpop.permute.xlu0 %473
  %v476 = vadd.f32 %v466, %v474
  %v477 = vtanh.pop %v476
  %479 = vrot.lane.b32.xlu0 %v477, 64
  %v480 = vpop.permute.xlu0 %479
  %v482 = vmul.f32 %v464, %v480
  %v483 = vxor.u32 %v458, 2147483648
  %v484 = vmul.f32 %v483, 1.442695
  %v485 = vpow.pop %v484
  %v486 = vadd.f32 %v485, 1.0
  %v487 = vrcp.pop %v486
  %v488 = vmul.f32 1.0, %v487
  %v489 = vtanh.pop %v458
  %v490 = vmul.f32 %v488, %v343
  %492 = vrot.lane.b32.xlu0 %v489, 64
  %v493 = vpop.permute.xlu0 %492
  %v495 = vmul.f32 %v488, %v493
  %497 = vrot.lane.b32.xlu0 %v495, 32
  %v498 = vpop.permute.xlu0 %497
  %v500 = vadd.f32 %v490, %v498
  %v501 = vtanh.pop %v500
  %503 = vrot.lane.b32.xlu0 %v501, 64
  %v504 = vpop.permute.xlu0 %503
  %v506 = vmul.f32 %v488, %v504
  %508 = vrot.lane.b32.xlu0 %v482, 32
  %v509 = vpop.permute.xlu0 %508
  %511 = vst.msk [vmem:[#allocation3 + $0x8] sm:$0xff] %vm203, %v509
  %513 = vrot.lane.b32.xlu0 %v506, 64
  %v514 = vpop.permute.xlu0 %513
  %516 = vst.msk [vmem:[#allocation3 + $0x30] sm:$0xff] %vm359, %v514
  %v517 = vld [vmem:[#allocation2 + $0x20] sm:$0xff]
  %v518 = vpack.c.bf16 %v482, %v482
  %520 = vrot.lane.b32.xlu0 %v518, 32
  %v521 = vpop.permute.xlu0 %520
  %v523 = vsel %vm203, %v521, 0
  %525 = vmatprep.subr.bf16.mxu0 0
  %526 = vmatpush1.bf16.msra.mxu0 %v199
  %527 = vmatprep.subr.bf16.mxu0 0
  %528 = vmatpush1.bf16.msra.mxu0 %v200
  %529 = vmatprep.subr.bf16.mxu0 0
  %530 = vmatpush1.bf16.msra.mxu0 0
  %531 = vmatprep.subr.bf16.mxu0 0
  %532 = vmatpush1.bf16.msra.mxu0 0
  %533 = vmatprep.subr.bf16.mxu0 0
  %534 = vmatpush1.bf16.msra.mxu0 0
  %535 = vmatprep.subr.bf16.mxu0 0
  %536 = vmatpush1.bf16.msra.mxu0 0
  %537 = vmatprep.subr.bf16.mxu0 0
  %538 = vmatpush1.bf16.msra.mxu0 0
  %539 = vmatprep.subr.bf16.mxu0 0
  %540 = vmatpush1.bf16.msra.mxu0 0
  %541 = vmatprep.subr.bf16.mxu0 0
  %542 = vmatpush1.bf16.msra.mxu0 0
  %543 = vmatprep.subr.bf16.mxu0 0
  %544 = vmatpush1.bf16.msra.mxu0 0
  %545 = vmatprep.subr.bf16.mxu0 0
  %546 = vmatpush1.bf16.msra.mxu0 0
  %547 = vmatprep.subr.bf16.mxu0 0
  %548 = vmatpush1.bf16.msra.mxu0 0
  %549 = vmatprep.subr.bf16.mxu0 0
  %550 = vmatpush1.bf16.msra.mxu0 0
  %551 = vmatprep.subr.bf16.mxu0 0
  %552 = vmatpush1.bf16.msra.mxu0 0
  %553 = vmatprep.subr.bf16.mxu0 0
  %554 = vmatpush1.bf16.msra.mxu0 0
  %555 = vmatprep.subr.bf16.mxu0 0
  %556 = vmatpush1.bf16.msra.mxu0 0
  %557 = vmatprep.mubr.bf16.mxu0 0
  %558 = vmatmul.mubr.bf16.gmra.mrb[0].mxu0 %v523
  %v559 = vpop.f32.mrb[0].mxu0
  %v560 = vadd.f32 0.0, %v559
  %v561 = vpop.f32.mrb[0].mxu0
  %v562 = vpop.f32.mrb[0].mxu0
  %v563 = vpop.f32.mrb[0].mxu0
  %564 = vdwg.mxu0
  %v565 = vadd.f32 %v517, %v560
  %v566 = vld [vmem:[#allocation2 + $0x58] sm:$0xff]
  %v567 = vpack.c.bf16 %v506, %v506
  %569 = vrot.lane.b32.xlu0 %v567, 32
  %v570 = vpop.permute.xlu0 %569
  %v572 = vsel %vm203, %v570, 0
  %574 = vmatprep.subr.bf16.mxu0 0
  %575 = vmatpush1.bf16.msra.mxu0 %v257
  %576 = vmatprep.subr.bf16.mxu0 0
  %577 = vmatpush1.bf16.msra.mxu0 %v258
  %578 = vmatprep.subr.bf16.mxu0 0
  %579 = vmatpush1.bf16.msra.mxu0 0
  %580 = vmatprep.subr.bf16.mxu0 0
  %581 = vmatpush1.bf16.msra.mxu0 0
  %582 = vmatprep.subr.bf16.mxu0 0
  %583 = vmatpush1.bf16.msra.mxu0 0
  %584 = vmatprep.subr.bf16.mxu0 0
  %585 = vmatpush1.bf16.msra.mxu0 0
  %586 = vmatprep.subr.bf16.mxu0 0
  %587 = vmatpush1.bf16.msra.mxu0 0
  %588 = vmatprep.subr.bf16.mxu0 0
  %589 = vmatpush1.bf16.msra.mxu0 0
  %590 = vmatprep.subr.bf16.mxu0 0
  %591 = vmatpush1.bf16.msra.mxu0 0
  %592 = vmatprep.subr.bf16.mxu0 0
  %593 = vmatpush1.bf16.msra.mxu0 0
  %594 = vmatprep.subr.bf16.mxu0 0
  %595 = vmatpush1.bf16.msra.mxu0 0
  %596 = vmatprep.subr.bf16.mxu0 0
  %597 = vmatpush1.bf16.msra.mxu0 0
  %598 = vmatprep.subr.bf16.mxu0 0
  %599 = vmatpush1.bf16.msra.mxu0 0
  %600 = vmatprep.subr.bf16.mxu0 0
  %601 = vmatpush1.bf16.msra.mxu0 0
  %602 = vmatprep.subr.bf16.mxu0 0
  %603 = vmatpush1.bf16.msra.mxu0 0
  %604 = vmatprep.subr.bf16.mxu0 0
  %605 = vmatpush1.bf16.msra.mxu0 0
  %606 = vmatprep.mubr.bf16.mxu0 0
  %607 = vmatmul.mubr.bf16.gmra.mrb[0].mxu0 %v572
  %v608 = vpop.f32.mrb[0].mxu0
  %v609 = vadd.f32 0.0, %v608
  %v610 = vpop.f32.mrb[0].mxu0
  %v611 = vpop.f32.mrb[0].mxu0
  %v612 = vpop.f32.mrb[0].mxu0
  %613 = vdwg.mxu0
  %v614 = vadd.f32 %v566, %v609
  %v615 = vxor.u32 %v565, 2147483648
  %v616 = vmul.f32 %v615, 1.442695
  %v617 = vpow.pop %v616
  %v618 = vadd.f32 %v617, 1.0
  %v619 = vrcp.pop %v618
  %v620 = vmul.f32 1.0, %v619
  %v621 = vtanh.pop %v565
  %v622 = vmul.f32 %v620, %v476
  %624 = vrot.lane.b32.xlu0 %v621, 64
  %v625 = vpop.permute.xlu0 %624
  %v627 = vmul.f32 %v620, %v625
  %629 = vrot.lane.b32.xlu0 %v627, 32
  %v630 = vpop.permute.xlu0 %629
  %v632 = vadd.f32 %v622, %v630
  %v633 = vtanh.pop %v632
  %635 = vrot.lane.b32.xlu0 %v633, 64
  %v636 = vpop.permute.xlu0 %635
  %v638 = vmul.f32 %v620, %v636
  %v639 = vxor.u32 %v614, 2147483648
  %v640 = vmul.f32 %v639, 1.442695
  %v641 = vpow.pop %v640
  %v642 = vadd.f32 %v641, 1.0
  %v643 = vrcp.pop %v642
  %v644 = vmul.f32 1.0, %v643
  %v645 = vtanh.pop %v614
  %v646 = vmul.f32 %v644, %v500
  %648 = vrot.lane.b32.xlu0 %v645, 64
  %v649 = vpop.permute.xlu0 %648
  %v651 = vmul.f32 %v644, %v649
  %653 = vrot.lane.b32.xlu0 %v651, 32
  %v654 = vpop.permute.xlu0 %653
  %v656 = vadd.f32 %v646, %v654
  %v657 = vtanh.pop %v656
  %659 = vrot.lane.b32.xlu0 %v657, 64
  %v660 = vpop.permute.xlu0 %659
  %v662 = vmul.f32 %v644, %v660
  %664 = vrot.lane.b32.xlu0 %v638, 32
  %v665 = vpop.permute.xlu0 %664
  %667 = vst.msk [vmem:[#allocation3 + $0x10] sm:$0xff] %vm203, %v665
  %669 = vrot.lane.b32.xlu0 %v662, 64
  %v670 = vpop.permute.xlu0 %669
  %672 = vst.msk [vmem:[#allocation3 + $0x28] sm:$0xff] %vm359, %v670
  %v673 = vld [vmem:[#allocation2 + $0x30] sm:$0xff]
  %v674 = vpack.c.bf16 %v638, %v638
  %676 = vrot.lane.b32.xlu0 %v674, 32
  %v677 = vpop.permute.xlu0 %676
  %v679 = vsel %vm203, %v677, 0
  %681 = vmatprep.subr.bf16.mxu0 0
  %682 = vmatpush1.bf16.msra.mxu0 %v199
  %683 = vmatprep.subr.bf16.mxu0 0
  %684 = vmatpush1.bf16.msra.mxu0 %v200
  %685 = vmatprep.subr.bf16.mxu0 0
  %686 = vmatpush1.bf16.msra.mxu0 0
  %687 = vmatprep.subr.bf16.mxu0 0
  %688 = vmatpush1.bf16.msra.mxu0 0
  %689 = vmatprep.subr.bf16.mxu0 0
  %690 = vmatpush1.bf16.msra.mxu0 0
  %691 = vmatprep.subr.bf16.mxu0 0
  %692 = vmatpush1.bf16.msra.mxu0 0
  %693 = vmatprep.subr.bf16.mxu0 0
  %694 = vmatpush1.bf16.msra.mxu0 0
  %695 = vmatprep.subr.bf16.mxu0 0
  %696 = vmatpush1.bf16.msra.mxu0 0
  %697 = vmatprep.subr.bf16.mxu0 0
  %698 = vmatpush1.bf16.msra.mxu0 0
  %699 = vmatprep.subr.bf16.mxu0 0
  %700 = vmatpush1.bf16.msra.mxu0 0
  %701 = vmatprep.subr.bf16.mxu0 0
  %702 = vmatpush1.bf16.msra.mxu0 0
  %703 = vmatprep.subr.bf16.mxu0 0
  %704 = vmatpush1.bf16.msra.mxu0 0
  %705 = vmatprep.subr.bf16.mxu0 0
  %706 = vmatpush1.bf16.msra.mxu0 0
  %707 = vmatprep.subr.bf16.mxu0 0
  %708 = vmatpush1.bf16.msra.mxu0 0
  %709 = vmatprep.subr.bf16.mxu0 0
  %710 = vmatpush1.bf16.msra.mxu0 0
  %711 = vmatprep.subr.bf16.mxu0 0
  %712 = vmatpush1.bf16.msra.mxu0 0
  %713 = vmatprep.mubr.bf16.mxu0 0
  %714 = vmatmul.mubr.bf16.gmra.mrb[0].mxu0 %v679
  %v715 = vpop.f32.mrb[0].mxu0
  %v716 = vadd.f32 0.0, %v715
  %v717 = vpop.f32.mrb[0].mxu0
  %v718 = vpop.f32.mrb[0].mxu0
  %v719 = vpop.f32.mrb[0].mxu0
  %720 = vdwg.mxu0
  %v721 = vadd.f32 %v673, %v716
  %v722 = vld [vmem:[#allocation2 + $0x48] sm:$0xff]
  %v723 = vpack.c.bf16 %v662, %v662
  %725 = vrot.lane.b32.xlu0 %v723, 32
  %v726 = vpop.permute.xlu0 %725
  %v728 = vsel %vm203, %v726, 0
  %730 = vmatprep.subr.bf16.mxu0 0
  %731 = vmatpush1.bf16.msra.mxu0 %v257
  %732 = vmatprep.subr.bf16.mxu0 0
  %733 = vmatpush1.bf16.msra.mxu0 %v258
  %734 = vmatprep.subr.bf16.mxu0 0
  %735 = vmatpush1.bf16.msra.mxu0 0
  %736 = vmatprep.subr.bf16.mxu0 0
  %737 = vmatpush1.bf16.msra.mxu0 0
  %738 = vmatprep.subr.bf16.mxu0 0
  %739 = vmatpush1.bf16.msra.mxu0 0
  %740 = vmatprep.subr.bf16.mxu0 0
  %741 = vmatpush1.bf16.msra.mxu0 0
  %742 = vmatprep.subr.bf16.mxu0 0
  %743 = vmatpush1.bf16.msra.mxu0 0
  %744 = vmatprep.subr.bf16.mxu0 0
  %745 = vmatpush1.bf16.msra.mxu0 0
  %746 = vmatprep.subr.bf16.mxu0 0
  %747 = vmatpush1.bf16.msra.mxu0 0
  %748 = vmatprep.subr.bf16.mxu0 0
  %749 = vmatpush1.bf16.msra.mxu0 0
  %750 = vmatprep.subr.bf16.mxu0 0
  %751 = vmatpush1.bf16.msra.mxu0 0
  %752 = vmatprep.subr.bf16.mxu0 0
  %753 = vmatpush1.bf16.msra.mxu0 0
  %754 = vmatprep.subr.bf16.mxu0 0
  %755 = vmatpush1.bf16.msra.mxu0 0
  %756 = vmatprep.subr.bf16.mxu0 0
  %757 = vmatpush1.bf16.msra.mxu0 0
  %758 = vmatprep.subr.bf16.mxu0 0
  %759 = vmatpush1.bf16.msra.mxu0 0
  %760 = vmatprep.subr.bf16.mxu0 0
  %761 = vmatpush1.bf16.msra.mxu0 0
  %762 = vmatprep.mubr.bf16.mxu0 0
  %763 = vmatmul.mubr.bf16.gmra.mrb[0].mxu0 %v728
  %v764 = vpop.f32.mrb[0].mxu0
  %v765 = vadd.f32 0.0, %v764
  %v766 = vpop.f32.mrb[0].mxu0
  %v767 = vpop.f32.mrb[0].mxu0
  %v768 = vpop.f32.mrb[0].mxu0
  %769 = vdwg.mxu0
  %v770 = vadd.f32 %v722, %v765
  %v771 = vxor.u32 %v721, 2147483648
  %v772 = vmul.f32 %v771, 1.442695
  %v773 = vpow.pop %v772
  %v774 = vadd.f32 %v773, 1.0
  %v775 = vrcp.pop %v774
  %v776 = vmul.f32 1.0, %v775
  %v777 = vtanh.pop %v721
  %v778 = vmul.f32 %v776, %v632
  %780 = vrot.lane.b32.xlu0 %v777, 64
  %v781 = vpop.permute.xlu0 %780
  %v783 = vmul.f32 %v776, %v781
  %785 = vrot.lane.b32.xlu0 %v783, 32
  %v786 = vpop.permute.xlu0 %785
  %v788 = vadd.f32 %v778, %v786
  %v789 = vtanh.pop %v788
  %791 = vrot.lane.b32.xlu0 %v789, 64
  %v792 = vpop.permute.xlu0 %791
  %v794 = vmul.f32 %v776, %v792
  %v795 = vxor.u32 %v770, 2147483648
  %v796 = vmul.f32 %v795, 1.442695
  %v797 = vpow.pop %v796
  %v798 = vadd.f32 %v797, 1.0
  %v799 = vrcp.pop %v798
  %v800 = vmul.f32 1.0, %v799
  %v801 = vtanh.pop %v770
  %v802 = vmul.f32 %v800, %v656
  %804 = vrot.lane.b32.xlu0 %v801, 64
  %v805 = vpop.permute.xlu0 %804
  %v807 = vmul.f32 %v800, %v805
  %809 = vrot.lane.b32.xlu0 %v807, 32
  %v810 = vpop.permute.xlu0 %809
  %v812 = vadd.f32 %v802, %v810
  %v813 = vtanh.pop %v812
  %815 = vrot.lane.b32.xlu0 %v813, 64
  %v816 = vpop.permute.xlu0 %815
  %v818 = vmul.f32 %v800, %v816
  %820 = vrot.lane.b32.xlu0 %v794, 32
  %v821 = vpop.permute.xlu0 %820
  %823 = vst.msk [vmem:[#allocation3 + $0x18] sm:$0xff] %vm203, %v821
  %825 = vrot.lane.b32.xlu0 %v818, 64
  %v826 = vpop.permute.xlu0 %825
  %828 = vst.msk [vmem:[#allocation3 + $0x20] sm:$0xff] %vm359, %v826
  %v829 = vld [vmem:[#allocation2 + $0x40] sm:$0xff]
  %v830 = vpack.c.bf16 %v794, %v794
  %832 = vrot.lane.b32.xlu0 %v830, 32
  %v833 = vpop.permute.xlu0 %832
  %v835 = vsel %vm203, %v833, 0
  %837 = vmatprep.subr.bf16.mxu0 0
  %838 = vmatpush1.bf16.msra.mxu0 %v199
  %839 = vmatprep.subr.bf16.mxu0 0
  %840 = vmatpush1.bf16.msra.mxu0 %v200
  %841 = vmatprep.subr.bf16.mxu0 0
  %842 = vmatpush1.bf16.msra.mxu0 0
  %843 = vmatprep.subr.bf16.mxu0 0
  %844 = vmatpush1.bf16.msra.mxu0 0
  %845 = vmatprep.subr.bf16.mxu0 0
  %846 = vmatpush1.bf16.msra.mxu0 0
  %847 = vmatprep.subr.bf16.mxu0 0
  %848 = vmatpush1.bf16.msra.mxu0 0
  %849 = vmatprep.subr.bf16.mxu0 0
  %850 = vmatpush1.bf16.msra.mxu0 0
  %851 = vmatprep.subr.bf16.mxu0 0
  %852 = vmatpush1.bf16.msra.mxu0 0
  %853 = vmatprep.subr.bf16.mxu0 0
  %854 = vmatpush1.bf16.msra.mxu0 0
  %855 = vmatprep.subr.bf16.mxu0 0
  %856 = vmatpush1.bf16.msra.mxu0 0
  %857 = vmatprep.subr.bf16.mxu0 0
  %858 = vmatpush1.bf16.msra.mxu0 0
  %859 = vmatprep.subr.bf16.mxu0 0
  %860 = vmatpush1.bf16.msra.mxu0 0
  %861 = vmatprep.subr.bf16.mxu0 0
  %862 = vmatpush1.bf16.msra.mxu0 0
  %863 = vmatprep.subr.bf16.mxu0 0
  %864 = vmatpush1.bf16.msra.mxu0 0
  %865 = vmatprep.subr.bf16.mxu0 0
  %866 = vmatpush1.bf16.msra.mxu0 0
  %867 = vmatprep.subr.bf16.mxu0 0
  %868 = vmatpush1.bf16.msra.mxu0 0
  %869 = vmatprep.mubr.bf16.mxu0 0
  %870 = vmatmul.mubr.bf16.gmra.mrb[0].mxu0 %v835
  %v871 = vpop.f32.mrb[0].mxu0
  %v872 = vadd.f32 0.0, %v871
  %v873 = vpop.f32.mrb[0].mxu0
  %v874 = vpop.f32.mrb[0].mxu0
  %v875 = vpop.f32.mrb[0].mxu0
  %876 = vdwg.mxu0
  %v877 = vadd.f32 %v829, %v872
  %v878 = vld [vmem:[#allocation2 + $0x38] sm:$0xff]
  %v879 = vpack.c.bf16 %v818, %v818
  %881 = vrot.lane.b32.xlu0 %v879, 32
  %v882 = vpop.permute.xlu0 %881
  %v884 = vsel %vm203, %v882, 0
  %886 = vmatprep.subr.bf16.mxu0 0
  %887 = vmatpush1.bf16.msra.mxu0 %v257
  %888 = vmatprep.subr.bf16.mxu0 0
  %889 = vmatpush1.bf16.msra.mxu0 %v258
  %890 = vmatprep.subr.bf16.mxu0 0
  %891 = vmatpush1.bf16.msra.mxu0 0
  %892 = vmatprep.subr.bf16.mxu0 0
  %893 = vmatpush1.bf16.msra.mxu0 0
  %894 = vmatprep.subr.bf16.mxu0 0
  %895 = vmatpush1.bf16.msra.mxu0 0
  %896 = vmatprep.subr.bf16.mxu0 0
  %897 = vmatpush1.bf16.msra.mxu0 0
  %898 = vmatprep.subr.bf16.mxu0 0
  %899 = vmatpush1.bf16.msra.mxu0 0
  %900 = vmatprep.subr.bf16.mxu0 0
  %901 = vmatpush1.bf16.msra.mxu0 0
  %902 = vmatprep.subr.bf16.mxu0 0
  %903 = vmatpush1.bf16.msra.mxu0 0
  %904 = vmatprep.subr.bf16.mxu0 0
  %905 = vmatpush1.bf16.msra.mxu0 0
  %906 = vmatprep.subr.bf16.mxu0 0
  %907 = vmatpush1.bf16.msra.mxu0 0
  %908 = vmatprep.subr.bf16.mxu0 0
  %909 = vmatpush1.bf16.msra.mxu0 0
  %910 = vmatprep.subr.bf16.mxu0 0
  %911 = vmatpush1.bf16.msra.mxu0 0
  %912 = vmatprep.subr.bf16.mxu0 0
  %913 = vmatpush1.bf16.msra.mxu0 0
  %914 = vmatprep.subr.bf16.mxu0 0
  %915 = vmatpush1.bf16.msra.mxu0 0
  %916 = vmatprep.subr.bf16.mxu0 0
  %917 = vmatpush1.bf16.msra.mxu0 0
  %918 = vmatprep.mubr.bf16.mxu0 0
  %919 = vmatmul.mubr.bf16.gmra.mrb[0].mxu0 %v884
  %v920 = vpop.f32.mrb[0].mxu0
  %v921 = vadd.f32 0.0, %v920
  %v922 = vpop.f32.mrb[0].mxu0
  %v923 = vpop.f32.mrb[0].mxu0
  %v924 = vpop.f32.mrb[0].mxu0
  %925 = vdwg.mxu0
  %v926 = vadd.f32 %v878, %v921
  %v927 = vxor.u32 %v877, 2147483648
  %v928 = vmul.f32 %v927, 1.442695
  %v929 = vpow.pop %v928
  %v930 = vadd.f32 %v929, 1.0
  %v931 = vrcp.pop %v930
  %v932 = vmul.f32 1.0, %v931
  %v933 = vtanh.pop %v877
  %v934 = vmul.f32 %v932, %v788
  %936 = vrot.lane.b32.xlu0 %v933, 64
  %v937 = vpop.permute.xlu0 %936
  %v939 = vmul.f32 %v932, %v937
  %941 = vrot.lane.b32.xlu0 %v939, 32
  %v942 = vpop.permute.xlu0 %941
  %v944 = vadd.f32 %v934, %v942
  %v945 = vtanh.pop %v944
  %947 = vrot.lane.b32.xlu0 %v945, 64
  %v948 = vpop.permute.xlu0 %947
  %v950 = vmul.f32 %v932, %v948
  %v951 = vxor.u32 %v926, 2147483648
  %v952 = vmul.f32 %v951, 1.442695
  %v953 = vpow.pop %v952
  %v954 = vadd.f32 %v953, 1.0
  %v955 = vrcp.pop %v954
  %v956 = vmul.f32 1.0, %v955
  %v957 = vtanh.pop %v926
  %v958 = vmul.f32 %v956, %v812
  %960 = vrot.lane.b32.xlu0 %v957, 64
  %v961 = vpop.permute.xlu0 %960
  %v963 = vmul.f32 %v956, %v961
  %965 = vrot.lane.b32.xlu0 %v963, 32
  %v966 = vpop.permute.xlu0 %965
  %v968 = vadd.f32 %v958, %v966
  %v969 = vtanh.pop %v968
  %971 = vrot.lane.b32.xlu0 %v969, 64
  %v972 = vpop.permute.xlu0 %971
  %v974 = vmul.f32 %v956, %v972
  %976 = vrot.lane.b32.xlu0 %v950, 32
  %v977 = vpop.permute.xlu0 %976
  %979 = vst.msk [vmem:[#allocation3 + $0x20] sm:$0xff] %vm203, %v977
  %981 = vrot.lane.b32.xlu0 %v974, 64
  %v982 = vpop.permute.xlu0 %981
  %984 = vst.msk [vmem:[#allocation3 + $0x18] sm:$0xff] %vm359, %v982
  %v985 = vld [vmem:[#allocation2 + $0x50] sm:$0xff]
  %v986 = vpack.c.bf16 %v950, %v950
  %988 = vrot.lane.b32.xlu0 %v986, 32
  %v989 = vpop.permute.xlu0 %988
  %v991 = vsel %vm203, %v989, 0
  %993 = vmatprep.subr.bf16.mxu0 0
  %994 = vmatpush1.bf16.msra.mxu0 %v199
  %995 = vmatprep.subr.bf16.mxu0 0
  %996 = vmatpush1.bf16.msra.mxu0 %v200
  %997 = vmatprep.subr.bf16.mxu0 0
  %998 = vmatpush1.bf16.msra.mxu0 0
  %999 = vmatprep.subr.bf16.mxu0 0
  %1000 = vmatpush1.bf16.msra.mxu0 0
  %1001 = vmatprep.subr.bf16.mxu0 0
  %1002 = vmatpush1.bf16.msra.mxu0 0
  %1003 = vmatprep.subr.bf16.mxu0 0
  %1004 = vmatpush1.bf16.msra.mxu0 0
  %1005 = vmatprep.subr.bf16.mxu0 0
  %1006 = vmatpush1.bf16.msra.mxu0 0
  %1007 = vmatprep.subr.bf16.mxu0 0
  %1008 = vmatpush1.bf16.msra.mxu0 0
  %1009 = vmatprep.subr.bf16.mxu0 0
  %1010 = vmatpush1.bf16.msra.mxu0 0
  %1011 = vmatprep.subr.bf16.mxu0 0
  %1012 = vmatpush1.bf16.msra.mxu0 0
  %1013 = vmatprep.subr.bf16.mxu0 0
  %1014 = vmatpush1.bf16.msra.mxu0 0
  %1015 = vmatprep.subr.bf16.mxu0 0
  %1016 = vmatpush1.bf16.msra.mxu0 0
  %1017 = vmatprep.subr.bf16.mxu0 0
  %1018 = vmatpush1.bf16.msra.mxu0 0
  %1019 = vmatprep.subr.bf16.mxu0 0
  %1020 = vmatpush1.bf16.msra.mxu0 0
  %1021 = vmatprep.subr.bf16.mxu0 0
  %1022 = vmatpush1.bf16.msra.mxu0 0
  %1023 = vmatprep.subr.bf16.mxu0 0
  %1024 = vmatpush1.bf16.msra.mxu0 0
  %1025 = vmatprep.mubr.bf16.mxu0 0
  %1026 = vmatmul.mubr.bf16.gmra.mrb[0].mxu0 %v991
  %v1027 = vpop.f32.mrb[0].mxu0
  %v1028 = vadd.f32 0.0, %v1027
  %v1029 = vpop.f32.mrb[0].mxu0
  %v1030 = vpop.f32.mrb[0].mxu0
  %v1031 = vpop.f32.mrb[0].mxu0
  %1032 = vdwg.mxu0
  %v1033 = vadd.f32 %v985, %v1028
  %v1034 = vld [vmem:[#allocation2 + $0x28] sm:$0xff]
  %v1035 = vpack.c.bf16 %v974, %v974
  %1037 = vrot.lane.b32.xlu0 %v1035, 32
  %v1038 = vpop.permute.xlu0 %1037
  %v1040 = vsel %vm203, %v1038, 0
  %1042 = vmatprep.subr.bf16.mxu0 0
  %1043 = vmatpush1.bf16.msra.mxu0 %v257
  %1044 = vmatprep.subr.bf16.mxu0 0
  %1045 = vmatpush1.bf16.msra.mxu0 %v258
  %1046 = vmatprep.subr.bf16.mxu0 0
  %1047 = vmatpush1.bf16.msra.mxu0 0
  %1048 = vmatprep.subr.bf16.mxu0 0
  %1049 = vmatpush1.bf16.msra.mxu0 0
  %1050 = vmatprep.subr.bf16.mxu0 0
  %1051 = vmatpush1.bf16.msra.mxu0 0
  %1052 = vmatprep.subr.bf16.mxu0 0
  %1053 = vmatpush1.bf16.msra.mxu0 0
  %1054 = vmatprep.subr.bf16.mxu0 0
  %1055 = vmatpush1.bf16.msra.mxu0 0
  %1056 = vmatprep.subr.bf16.mxu0 0
  %1057 = vmatpush1.bf16.msra.mxu0 0
  %1058 = vmatprep.subr.bf16.mxu0 0
  %1059 = vmatpush1.bf16.msra.mxu0 0
  %1060 = vmatprep.subr.bf16.mxu0 0
  %1061 = vmatpush1.bf16.msra.mxu0 0
  %1062 = vmatprep.subr.bf16.mxu0 0
  %1063 = vmatpush1.bf16.msra.mxu0 0
  %1064 = vmatprep.subr.bf16.mxu0 0
  %1065 = vmatpush1.bf16.msra.mxu0 0
  %1066 = vmatprep.subr.bf16.mxu0 0
  %1067 = vmatpush1.bf16.msra.mxu0 0
  %1068 = vmatprep.subr.bf16.mxu0 0
  %1069 = vmatpush1.bf16.msra.mxu0 0
  %1070 = vmatprep.subr.bf16.mxu0 0
  %1071 = vmatpush1.bf16.msra.mxu0 0
  %1072 = vmatprep.subr.bf16.mxu0 0
  %1073 = vmatpush1.bf16.msra.mxu0 0
  %1074 = vmatprep.mubr.bf16.mxu0 0
  %1075 = vmatmul.mubr.bf16.gmra.mrb[0].mxu0 %v1040
  %v1076 = vpop.f32.mrb[0].mxu0
  %v1077 = vadd.f32 0.0, %v1076
  %v1078 = vpop.f32.mrb[0].mxu0
  %v1079 = vpop.f32.mrb[0].mxu0
  %v1080 = vpop.f32.mrb[0].mxu0
  %1081 = vdwg.mxu0
  %v1082 = vadd.f32 %v1034, %v1077
  %v1083 = vxor.u32 %v1033, 2147483648
  %v1084 = vmul.f32 %v1083, 1.442695
  %v1085 = vpow.pop %v1084
  %v1086 = vadd.f32 %v1085, 1.0
  %v1087 = vrcp.pop %v1086
  %v1088 = vmul.f32 1.0, %v1087
  %v1089 = vtanh.pop %v1033
  %v1090 = vmul.f32 %v1088, %v944
  %1092 = vrot.lane.b32.xlu0 %v1089, 64
  %v1093 = vpop.permute.xlu0 %1092
  %v1095 = vmul.f32 %v1088, %v1093
  %1097 = vrot.lane.b32.xlu0 %v1095, 32
  %v1098 = vpop.permute.xlu0 %1097
  %v1100 = vadd.f32 %v1090, %v1098
  %v1101 = vtanh.pop %v1100
  %1103 = vrot.lane.b32.xlu0 %v1101, 64
  %v1104 = vpop.permute.xlu0 %1103
  %v1106 = vmul.f32 %v1088, %v1104
  %v1107 = vxor.u32 %v1082, 2147483648
  %v1108 = vmul.f32 %v1107, 1.442695
  %v1109 = vpow.pop %v1108
  %v1110 = vadd.f32 %v1109, 1.0
  %v1111 = vrcp.pop %v1110
  %v1112 = vmul.f32 1.0, %v1111
  %v1113 = vtanh.pop %v1082
  %v1114 = vmul.f32 %v1112, %v968
  %1116 = vrot.lane.b32.xlu0 %v1113, 64
  %v1117 = vpop.permute.xlu0 %1116
  %v1119 = vmul.f32 %v1112, %v1117
  %1121 = vrot.lane.b32.xlu0 %v1119, 32
  %v1122 = vpop.permute.xlu0 %1121
  %v1124 = vadd.f32 %v1114, %v1122
  %v1125 = vtanh.pop %v1124
  %1127 = vrot.lane.b32.xlu0 %v1125, 64
  %v1128 = vpop.permute.xlu0 %1127
  %v1130 = vmul.f32 %v1112, %v1128
  %1132 = vrot.lane.b32.xlu0 %v1106, 32
  %v1133 = vpop.permute.xlu0 %1132
  %1135 = vst.msk [vmem:[#allocation3 + $0x28] sm:$0xff] %vm203, %v1133
  %1137 = vrot.lane.b32.xlu0 %v1130, 64
  %v1138 = vpop.permute.xlu0 %1137
  %1140 = vst.msk [vmem:[#allocation3 + $0x10] sm:$0xff] %vm359, %v1138
  %v1141 = vld [vmem:[#allocation2 + $0x60] sm:$0xff]
  %v1142 = vpack.c.bf16 %v1106, %v1106
  %1144 = vrot.lane.b32.xlu0 %v1142, 32
  %v1145 = vpop.permute.xlu0 %1144
  %v1147 = vsel %vm203, %v1145, 0
  %1149 = vmatprep.subr.bf16.mxu0 0
  %1150 = vmatpush1.bf16.msra.mxu0 %v199
  %1151 = vmatprep.subr.bf16.mxu0 0
  %1152 = vmatpush1.bf16.msra.mxu0 %v200
  %1153 = vmatprep.subr.bf16.mxu0 0
  %1154 = vmatpush1.bf16.msra.mxu0 0
  %1155 = vmatprep.subr.bf16.mxu0 0
  %1156 = vmatpush1.bf16.msra.mxu0 0
  %1157 = vmatprep.subr.bf16.mxu0 0
  %1158 = vmatpush1.bf16.msra.mxu0 0
  %1159 = vmatprep.subr.bf16.mxu0 0
  %1160 = vmatpush1.bf16.msra.mxu0 0
  %1161 = vmatprep.subr.bf16.mxu0 0
  %1162 = vmatpush1.bf16.msra.mxu0 0
  %1163 = vmatprep.subr.bf16.mxu0 0
  %1164 = vmatpush1.bf16.msra.mxu0 0
  %1165 = vmatprep.subr.bf16.mxu0 0
  %1166 = vmatpush1.bf16.msra.mxu0 0
  %1167 = vmatprep.subr.bf16.mxu0 0
  %1168 = vmatpush1.bf16.msra.mxu0 0
  %1169 = vmatprep.subr.bf16.mxu0 0
  %1170 = vmatpush1.bf16.msra.mxu0 0
  %1171 = vmatprep.subr.bf16.mxu0 0
  %1172 = vmatpush1.bf16.msra.mxu0 0
  %1173 = vmatprep.subr.bf16.mxu0 0
  %1174 = vmatpush1.bf16.msra.mxu0 0
  %1175 = vmatprep.subr.bf16.mxu0 0
  %1176 = vmatpush1.bf16.msra.mxu0 0
  %1177 = vmatprep.subr.bf16.mxu0 0
  %1178 = vmatpush1.bf16.msra.mxu0 0
  %1179 = vmatprep.subr.bf16.mxu0 0
  %1180 = vmatpush1.bf16.msra.mxu0 0
  %1181 = vmatprep.mubr.bf16.mxu0 0
  %1182 = vmatmul.mubr.bf16.gmra.mrb[0].mxu0 %v1147
  %v1183 = vpop.f32.mrb[0].mxu0
  %v1184 = vadd.f32 0.0, %v1183
  %v1185 = vpop.f32.mrb[0].mxu0
  %v1186 = vpop.f32.mrb[0].mxu0
  %v1187 = vpop.f32.mrb[0].mxu0
  %1188 = vdwg.mxu0
  %v1189 = vadd.f32 %v1141, %v1184
  %v1190 = vld [vmem:[#allocation2 + $0x18] sm:$0xff]
  %v1191 = vpack.c.bf16 %v1130, %v1130
  %1193 = vrot.lane.b32.xlu0 %v1191, 32
  %v1194 = vpop.permute.xlu0 %1193
  %v1196 = vsel %vm203, %v1194, 0
  %1198 = vmatprep.subr.bf16.mxu0 0
  %1199 = vmatpush1.bf16.msra.mxu0 %v257
  %1200 = vmatprep.subr.bf16.mxu0 0
  %1201 = vmatpush1.bf16.msra.mxu0 %v258
  %1202 = vmatprep.subr.bf16.mxu0 0
  %1203 = vmatpush1.bf16.msra.mxu0 0
  %1204 = vmatprep.subr.bf16.mxu0 0
  %1205 = vmatpush1.bf16.msra.mxu0 0
  %1206 = vmatprep.subr.bf16.mxu0 0
  %1207 = vmatpush1.bf16.msra.mxu0 0
  %1208 = vmatprep.subr.bf16.mxu0 0
  %1209 = vmatpush1.bf16.msra.mxu0 0
  %1210 = vmatprep.subr.bf16.mxu0 0
  %1211 = vmatpush1.bf16.msra.mxu0 0
  %1212 = vmatprep.subr.bf16.mxu0 0
  %1213 = vmatpush1.bf16.msra.mxu0 0
  %1214 = vmatprep.subr.bf16.mxu0 0
  %1215 = vmatpush1.bf16.msra.mxu0 0
  %1216 = vmatprep.subr.bf16.mxu0 0
  %1217 = vmatpush1.bf16.msra.mxu0 0
  %1218 = vmatprep.subr.bf16.mxu0 0
  %1219 = vmatpush1.bf16.msra.mxu0 0
  %1220 = vmatprep.subr.bf16.mxu0 0
  %1221 = vmatpush1.bf16.msra.mxu0 0
  %1222 = vmatprep.subr.bf16.mxu0 0
  %1223 = vmatpush1.bf16.msra.mxu0 0
  %1224 = vmatprep.subr.bf16.mxu0 0
  %1225 = vmatpush1.bf16.msra.mxu0 0
  %1226 = vmatprep.subr.bf16.mxu0 0
  %1227 = vmatpush1.bf16.msra.mxu0 0
  %1228 = vmatprep.subr.bf16.mxu0 0
  %1229 = vmatpush1.bf16.msra.mxu0 0
  %1230 = vmatprep.mubr.bf16.mxu0 0
  %1231 = vmatmul.mubr.bf16.gmra.mrb[0].mxu0 %v1196
  %v1232 = vpop.f32.mrb[0].mxu0
  %v1233 = vadd.f32 0.0, %v1232
  %v1234 = vpop.f32.mrb[0].mxu0
  %v1235 = vpop.f32.mrb[0].mxu0
  %v1236 = vpop.f32.mrb[0].mxu0
  %1237 = vdwg.mxu0
  %v1238 = vadd.f32 %v1190, %v1233
  %v1239 = vxor.u32 %v1189, 2147483648
  %v1240 = vmul.f32 %v1239, 1.442695
  %v1241 = vpow.pop %v1240
  %v1242 = vadd.f32 %v1241, 1.0
  %v1243 = vrcp.pop %v1242
  %v1244 = vmul.f32 1.0, %v1243
  %v1245 = vtanh.pop %v1189
  %v1246 = vmul.f32 %v1244, %v1100
  %1248 = vrot.lane.b32.xlu0 %v1245, 64
  %v1249 = vpop.permute.xlu0 %1248
  %v1251 = vmul.f32 %v1244, %v1249
  %1253 = vrot.lane.b32.xlu0 %v1251, 32
  %v1254 = vpop.permute.xlu0 %1253
  %v1256 = vadd.f32 %v1246, %v1254
  %v1257 = vtanh.pop %v1256
  %1259 = vrot.lane.b32.xlu0 %v1257, 64
  %v1260 = vpop.permute.xlu0 %1259
  %v1262 = vmul.f32 %v1244, %v1260
  %v1263 = vxor.u32 %v1238, 2147483648
  %v1264 = vmul.f32 %v1263, 1.442695
  %v1265 = vpow.pop %v1264
  %v1266 = vadd.f32 %v1265, 1.0
  %v1267 = vrcp.pop %v1266
  %v1268 = vmul.f32 1.0, %v1267
  %v1269 = vtanh.pop %v1238
  %v1270 = vmul.f32 %v1268, %v1124
  %1272 = vrot.lane.b32.xlu0 %v1269, 64
  %v1273 = vpop.permute.xlu0 %1272
  %v1275 = vmul.f32 %v1268, %v1273
  %1277 = vrot.lane.b32.xlu0 %v1275, 32
  %v1278 = vpop.permute.xlu0 %1277
  %v1280 = vadd.f32 %v1270, %v1278
  %v1281 = vtanh.pop %v1280
  %1283 = vrot.lane.b32.xlu0 %v1281, 64
  %v1284 = vpop.permute.xlu0 %1283
  %v1286 = vmul.f32 %v1268, %v1284
  %1288 = vrot.lane.b32.xlu0 %v1262, 32
  %v1289 = vpop.permute.xlu0 %1288
  %1291 = vst.msk [vmem:[#allocation3 + $0x30] sm:$0xff] %vm203, %v1289
  %1293 = vrot.lane.b32.xlu0 %v1286, 64
  %v1294 = vpop.permute.xlu0 %1293
  %1296 = vst.msk [vmem:[#allocation3 + $0x8] sm:$0xff] %vm359, %v1294
  %v1297 = vld [vmem:[#allocation2 + $0x70] sm:$0xff]
  %v1298 = vpack.c.bf16 %v1262, %v1262
  %1300 = vrot.lane.b32.xlu0 %v1298, 32
  %v1301 = vpop.permute.xlu0 %1300
  %v1303 = vsel %vm203, %v1301, 0
  %1305 = vmatprep.subr.bf16.mxu0 0
  %1306 = vmatpush1.bf16.msra.mxu0 %v199
  %1307 = vmatprep.subr.bf16.mxu0 0
  %1308 = vmatpush1.bf16.msra.mxu0 %v200
  %1309 = vmatprep.subr.bf16.mxu0 0
  %1310 = vmatpush1.bf16.msra.mxu0 0
  %1311 = vmatprep.subr.bf16.mxu0 0
  %1312 = vmatpush1.bf16.msra.mxu0 0
  %1313 = vmatprep.subr.bf16.mxu0 0
  %1314 = vmatpush1.bf16.msra.mxu0 0
  %1315 = vmatprep.subr.bf16.mxu0 0
  %1316 = vmatpush1.bf16.msra.mxu0 0
  %1317 = vmatprep.subr.bf16.mxu0 0
  %1318 = vmatpush1.bf16.msra.mxu0 0
  %1319 = vmatprep.subr.bf16.mxu0 0
  %1320 = vmatpush1.bf16.msra.mxu0 0
  %1321 = vmatprep.subr.bf16.mxu0 0
  %1322 = vmatpush1.bf16.msra.mxu0 0
  %1323 = vmatprep.subr.bf16.mxu0 0
  %1324 = vmatpush1.bf16.msra.mxu0 0
  %1325 = vmatprep.subr.bf16.mxu0 0
  %1326 = vmatpush1.bf16.msra.mxu0 0
  %1327 = vmatprep.subr.bf16.mxu0 0
  %1328 = vmatpush1.bf16.msra.mxu0 0
  %1329 = vmatprep.subr.bf16.mxu0 0
  %1330 = vmatpush1.bf16.msra.mxu0 0
  %1331 = vmatprep.subr.bf16.mxu0 0
  %1332 = vmatpush1.bf16.msra.mxu0 0
  %1333 = vmatprep.subr.bf16.mxu0 0
  %1334 = vmatpush1.bf16.msra.mxu0 0
  %1335 = vmatprep.subr.bf16.mxu0 0
  %1336 = vmatpush1.bf16.msra.mxu0 0
  %1337 = vmatprep.mubr.bf16.mxu0 0
  %1338 = vmatmul.mubr.bf16.gmra.mrb[0].mxu0 %v1303
  %v1339 = vpop.f32.mrb[0].mxu0
  %v1340 = vadd.f32 0.0, %v1339
  %v1341 = vpop.f32.mrb[0].mxu0
  %v1342 = vpop.f32.mrb[0].mxu0
  %v1343 = vpop.f32.mrb[0].mxu0
  %1344 = vdwg.mxu0
  %v1345 = vadd.f32 %v1297, %v1340
  %v1346 = vld [vmem:[#allocation2 + $0x8] sm:$0xff]
  %v1347 = vpack.c.bf16 %v1286, %v1286
  %1349 = vrot.lane.b32.xlu0 %v1347, 32
  %v1350 = vpop.permute.xlu0 %1349
  %v1352 = vsel %vm203, %v1350, 0
  %1354 = vmatprep.subr.bf16.mxu0 0
  %1355 = vmatpush1.bf16.msra.mxu0 %v257
  %1356 = vmatprep.subr.bf16.mxu0 0
  %1357 = vmatpush1.bf16.msra.mxu0 %v258
  %1358 = vmatprep.subr.bf16.mxu0 0
  %1359 = vmatpush1.bf16.msra.mxu0 0
  %1360 = vmatprep.subr.bf16.mxu0 0
  %1361 = vmatpush1.bf16.msra.mxu0 0
  %1362 = vmatprep.subr.bf16.mxu0 0
  %1363 = vmatpush1.bf16.msra.mxu0 0
  %1364 = vmatprep.subr.bf16.mxu0 0
  %1365 = vmatpush1.bf16.msra.mxu0 0
  %1366 = vmatprep.subr.bf16.mxu0 0
  %1367 = vmatpush1.bf16.msra.mxu0 0
  %1368 = vmatprep.subr.bf16.mxu0 0
  %1369 = vmatpush1.bf16.msra.mxu0 0
  %1370 = vmatprep.subr.bf16.mxu0 0
  %1371 = vmatpush1.bf16.msra.mxu0 0
  %1372 = vmatprep.subr.bf16.mxu0 0
  %1373 = vmatpush1.bf16.msra.mxu0 0
  %1374 = vmatprep.subr.bf16.mxu0 0
  %1375 = vmatpush1.bf16.msra.mxu0 0
  %1376 = vmatprep.subr.bf16.mxu0 0
  %1377 = vmatpush1.bf16.msra.mxu0 0
  %1378 = vmatprep.subr.bf16.mxu0 0
  %1379 = vmatpush1.bf16.msra.mxu0 0
  %1380 = vmatprep.subr.bf16.mxu0 0
  %1381 = vmatpush1.bf16.msra.mxu0 0
  %1382 = vmatprep.subr.bf16.mxu0 0
  %1383 = vmatpush1.bf16.msra.mxu0 0
  %1384 = vmatprep.subr.bf16.mxu0 0
  %1385 = vmatpush1.bf16.msra.mxu0 0
  %1386 = vmatprep.mubr.bf16.mxu0 0
  %1387 = vmatmul.mubr.bf16.gmra.mrb[0].mxu0 %v1352
  %v1388 = vpop.f32.mrb[0].mxu0
  %v1389 = vadd.f32 0.0, %v1388
  %v1390 = vpop.f32.mrb[0].mxu0
  %v1391 = vpop.f32.mrb[0].mxu0
  %v1392 = vpop.f32.mrb[0].mxu0
  %1393 = vdwg.mxu0
  %v1394 = vadd.f32 %v1346, %v1389
  %v1395 = vxor.u32 %v1345, 2147483648
  %v1396 = vmul.f32 %v1395, 1.442695
  %v1397 = vpow.pop %v1396
  %v1398 = vadd.f32 %v1397, 1.0
  %v1399 = vrcp.pop %v1398
  %v1400 = vmul.f32 1.0, %v1399
  %v1401 = vtanh.pop %v1345
  %v1402 = vmul.f32 %v1400, %v1256
  %1404 = vrot.lane.b32.xlu0 %v1401, 64
  %v1405 = vpop.permute.xlu0 %1404
  %v1407 = vmul.f32 %v1400, %v1405
  %1409 = vrot.lane.b32.xlu0 %v1407, 32
  %v1410 = vpop.permute.xlu0 %1409
  %v1412 = vadd.f32 %v1402, %v1410
  %v1413 = vtanh.pop %v1412
  %1415 = vrot.lane.b32.xlu0 %v1413, 64
  %v1416 = vpop.permute.xlu0 %1415
  %v1418 = vmul.f32 %v1400, %v1416
  %v1419 = vxor.u32 %v1394, 2147483648
  %v1420 = vmul.f32 %v1419, 1.442695
  %v1421 = vpow.pop %v1420
  %v1422 = vadd.f32 %v1421, 1.0
  %v1423 = vrcp.pop %v1422
  %v1424 = vmul.f32 1.0, %v1423
  %v1425 = vtanh.pop %v1394
  %v1426 = vmul.f32 %v1424, %v1280
  %1428 = vrot.lane.b32.xlu0 %v1425, 64
  %v1429 = vpop.permute.xlu0 %1428
  %v1431 = vmul.f32 %v1424, %v1429
  %1433 = vrot.lane.b32.xlu0 %v1431, 32
  %v1434 = vpop.permute.xlu0 %1433
  %v1436 = vadd.f32 %v1426, %v1434
  %v1437 = vtanh.pop %v1436
  %1439 = vrot.lane.b32.xlu0 %v1437, 64
  %v1440 = vpop.permute.xlu0 %1439
  %v1442 = vmul.f32 %v1424, %v1440
  %1444 = vrot.lane.b32.xlu0 %v1418, 32
  %v1445 = vpop.permute.xlu0 %1444
  %1447 = vst.msk [vmem:[#allocation3 + $0x38] sm:$0xff] %vm203, %v1445
  %1449 = vrot.lane.b32.xlu0 %v1442, 64
  %v1450 = vpop.permute.xlu0 %1449
  %1452 = vst.msk [vmem:[#allocation3] sm:$0xff] %vm359, %v1450
  %v1453 = vld [vmem:[#allocation3] sm:$0xff]
  %v1454 = vld [vmem:[#allocation3 + $0x8] sm:$0xff]
  %v1455 = vld [vmem:[#allocation3 + $0x10] sm:$0xff]
  %v1456 = vld [vmem:[#allocation3 + $0x18] sm:$0xff]
  %v1457 = vld [vmem:[#allocation3 + $0x20] sm:$0xff]
  %v1458 = vld [vmem:[#allocation3 + $0x28] sm:$0xff]
  %v1459 = vld [vmem:[#allocation3 + $0x30] sm:$0xff]
  %v1460 = vld [vmem:[#allocation3 + $0x38] sm:$0xff]
  %v1461 = vpack.c.bf16 %v1454, %v1453
  %v1462 = vpack.c.bf16 %v1456, %v1455
  %v1463 = vpack.c.bf16 %v1458, %v1457
  %v1464 = vpack.c.bf16 %v1460, %v1459
  %v1465 = vld [vmem:[%s5] sm:$0xff]
  %v1466 = vld [vmem:[%s5 + $0x8] sm:$0xff]
  %v1467 = vld [vmem:[%s5 + $0x10] sm:$0xff]
  %v1468 = vld [vmem:[%s5 + $0x18] sm:$0xff]
  %v1469 = vld [vmem:[%s5 + $0x20] sm:$0xff]
  %v1470 = vld [vmem:[%s5 + $0x28] sm:$0xff]
  %v1471 = vld [vmem:[%s5 + $0x30] sm:$0xff]
  %v1472 = vld [vmem:[%s5 + $0x38] sm:$0xff]
  %v1473 = vld [vmem:[%s6] sm:$0x3]
  %v1475 = vlaneseq
  %v1476 = vshrl.u32 %v1475, 7
  %v1477 = vsub.s32 0, %v1476
  %v1478 = vrot.slane %v1473, %v1477
  %v1479 = vlaneseq
  %v1480 = vshrl.u32 %v1479, 7
  %v1481 = vsub.s32 1, %v1480
  %v1482 = vrot.slane %v1473, %v1481
  %v1493 = vunpack.c.l.b16 %v1465
  %v1494 = vunpack.c.h.b16 %v1465
  %v1495 = vunpack.c.l.b16 %v1466
  %v1496 = vunpack.c.h.b16 %v1466
  %v1497 = vunpack.c.l.b16 %v1467
  %v1498 = vunpack.c.h.b16 %v1467
  %v1499 = vunpack.c.l.b16 %v1468
  %v1500 = vunpack.c.h.b16 %v1468
  %v1501 = vunpack.c.l.b16 %v1469
  %v1502 = vunpack.c.h.b16 %v1469
  %v1503 = vunpack.c.l.b16 %v1470
  %v1504 = vunpack.c.h.b16 %v1470
  %v1505 = vunpack.c.l.b16 %v1471
  %v1506 = vunpack.c.h.b16 %v1471
  %v1507 = vunpack.c.l.b16 %v1472
  %v1508 = vunpack.c.h.b16 %v1472
  %v1509 = vpack.c.b16 %v1495, %v1493
  %v1510 = vpack.c.b16 %v1496, %v1494
  %v1511 = vpack.c.b16 %v1499, %v1497
  %v1512 = vpack.c.b16 %v1500, %v1498
  %v1513 = vpack.c.b16 %v1503, %v1501
  %v1514 = vpack.c.b16 %v1504, %v1502
  %v1515 = vpack.c.b16 %v1507, %v1505
  %v1516 = vpack.c.b16 %v1508, %v1506
  %vm1525 = vcmask 523264
  %v1527 = vsel %vm1525, %v1461, 0
  %v1530 = vsel %vm1525, %v1462, 0
  %v1533 = vsel %vm1525, %v1463, 0
  %v1536 = vsel %vm1525, %v1464, 0
  %1538 = vmatprep.subr.bf16.mxu0 %v1510
  %1539 = vmatpush1.bf16.msra.mxu0 %v1509
  %1540 = vmatprep.subr.bf16.mxu0 %v1512
  %1541 = vmatpush1.bf16.msra.mxu0 %v1511
  %1542 = vmatprep.subr.bf16.mxu0 %v1514
  %1543 = vmatpush1.bf16.msra.mxu0 %v1513
  %1544 = vmatprep.subr.bf16.mxu0 %v1516
  %1545 = vmatpush1.bf16.msra.mxu0 %v1515
  %1546 = vmatprep.subr.bf16.mxu0 0
  %1547 = vmatpush1.bf16.msra.mxu0 0
  %1548 = vmatprep.subr.bf16.mxu0 0
  %1549 = vmatpush1.bf16.msra.mxu0 0
  %1550 = vmatprep.subr.bf16.mxu0 0
  %1551 = vmatpush1.bf16.msra.mxu0 0
  %1552 = vmatprep.subr.bf16.mxu0 0
  %1553 = vmatpush1.bf16.msra.mxu0 0
  %1554 = vmatprep.subr.bf16.mxu0 0
  %1555 = vmatpush1.bf16.msra.mxu0 0
  %1556 = vmatprep.subr.bf16.mxu0 0
  %1557 = vmatpush1.bf16.msra.mxu0 0
  %1558 = vmatprep.subr.bf16.mxu0 0
  %1559 = vmatpush1.bf16.msra.mxu0 0
  %1560 = vmatprep.subr.bf16.mxu0 0
  %1561 = vmatpush1.bf16.msra.mxu0 0
  %1562 = vmatprep.subr.bf16.mxu0 0
  %1563 = vmatpush1.bf16.msra.mxu0 0
  %1564 = vmatprep.subr.bf16.mxu0 0
  %1565 = vmatpush1.bf16.msra.mxu0 0
  %1566 = vmatprep.subr.bf16.mxu0 0
  %1567 = vmatpush1.bf16.msra.mxu0 0
  %1568 = vmatprep.subr.bf16.mxu0 0
  %1569 = vmatpush1.bf16.msra.mxu0 0
  %1570 = vmatprep.mubr.bf16.mxu0 0
  %1571 = vmatmul.mubr.bf16.gmra.mrb[0].mxu0 %v1527
  %v1572 = vpop.f32.mrb[0].mxu0
  %v1573 = vadd.f32 %v1478, %v1572
  %v1574 = vpop.f32.mrb[0].mxu0
  %v1575 = vadd.f32 %v1482, %v1574
  %v1576 = vpop.f32.mrb[0].mxu0
  %v1577 = vadd.f32 %v1478, %v1576
  %v1578 = vpop.f32.mrb[0].mxu0
  %v1579 = vadd.f32 %v1482, %v1578
  %1580 = vmatprep.mubr.bf16.mxu0 0
  %1581 = vmatmul.mubr.bf16.gmra.mrb[0].mxu0 %v1530
  %v1582 = vpop.f32.mrb[0].mxu0
  %v1583 = vadd.f32 %v1478, %v1582
  %v1584 = vpop.f32.mrb[0].mxu0
  %v1585 = vadd.f32 %v1482, %v1584
  %v1586 = vpop.f32.mrb[0].mxu0
  %v1587 = vadd.f32 %v1478, %v1586
  %v1588 = vpop.f32.mrb[0].mxu0
  %v1589 = vadd.f32 %v1482, %v1588
  %1590 = vmatprep.mubr.bf16.mxu0 0
  %1591 = vmatmul.mubr.bf16.gmra.mrb[0].mxu0 %v1533
  %v1592 = vpop.f32.mrb[0].mxu0
  %v1593 = vadd.f32 %v1478, %v1592
  %v1594 = vpop.f32.mrb[0].mxu0
  %v1595 = vadd.f32 %v1482, %v1594
  %v1596 = vpop.f32.mrb[0].mxu0
  %v1597 = vadd.f32 %v1478, %v1596
  %v1598 = vpop.f32.mrb[0].mxu0
  %v1599 = vadd.f32 %v1482, %v1598
  %1600 = vmatprep.mubr.bf16.mxu0 0
  %1601 = vmatmul.mubr.bf16.gmra.mrb[0].mxu0 %v1536
  %v1602 = vpop.f32.mrb[0].mxu0
  %v1603 = vadd.f32 %v1478, %v1602
  %v1604 = vpop.f32.mrb[0].mxu0
  %v1605 = vadd.f32 %v1482, %v1604
  %v1606 = vpop.f32.mrb[0].mxu0
  %v1607 = vadd.f32 %v1478, %v1606
  %v1608 = vpop.f32.mrb[0].mxu0
  %v1609 = vadd.f32 %v1482, %v1608
  %1610 = vdwg.mxu0
  %1611 = vst [vmem:[#allocation2] sm:$0xff] %v1573
  %1612 = vst [vmem:[#allocation2 + $0x8] sm:$0xff] %v1575
  %1613 = vst [vmem:[#allocation2 + $0x10] sm:$0xff] %v1577
  %1614 = vst [vmem:[#allocation2 + $0x18] sm:$0xff] %v1579
  %1615 = vst [vmem:[#allocation2 + $0x20] sm:$0xff] %v1583
  %1616 = vst [vmem:[#allocation2 + $0x28] sm:$0xff] %v1585
  %1617 = vst [vmem:[#allocation2 + $0x30] sm:$0xff] %v1587
  %1618 = vst [vmem:[#allocation2 + $0x38] sm:$0xff] %v1589
  %1619 = vst [vmem:[#allocation2 + $0x40] sm:$0xff] %v1593
  %1620 = vst [vmem:[#allocation2 + $0x48] sm:$0xff] %v1595
  %1621 = vst [vmem:[#allocation2 + $0x50] sm:$0xff] %v1597
  %1622 = vst [vmem:[#allocation2 + $0x58] sm:$0xff] %v1599
  %1623 = vst [vmem:[#allocation2 + $0x60] sm:$0xff] %v1603
  %1624 = vst [vmem:[#allocation2 + $0x68] sm:$0xff] %v1605
  %1625 = vst [vmem:[#allocation2 + $0x70] sm:$0xff] %v1607
  %1626 = vst [vmem:[#allocation2 + $0x78] sm:$0xff] %v1609
  %v1627 = vld [vmem:[%s7] sm:$0xf]
  %v1628 = vld [vmem:[%s7 + $0x4] sm:$0xf]
  %v1629 = vld [vmem:[%s7 + $0x8] sm:$0xf]
  %v1630 = vld [vmem:[%s7 + $0xc] sm:$0xf]
  %v1631 = vld [vmem:[%s8] sm:$0xf]
  %v1632 = vld [vmem:[%s8 + $0x4] sm:$0xf]
  %v1633 = vld [vmem:[%s8 + $0x8] sm:$0xf]
  %v1634 = vld [vmem:[%s8 + $0xc] sm:$0xf]
  %v1635 = vld [vmem:[#allocation2] sm:$0xff]
  %v1640 = vunpack.c.l.b16 %v1627
  %v1641 = vunpack.c.l.b16 %v1628
  %v1642 = vunpack.c.l.b16 %v1629
  %v1643 = vunpack.c.l.b16 %v1630
  %v1644 = vpack.c.b16 %v1641, %v1640
  %v1645 = vpack.c.b16 %v1643, %v1642
  %1648 = vmatprep.subr.bf16.mxu0 0
  %1649 = vmatpush1.bf16.msra.mxu0 %v1644
  %1650 = vmatprep.subr.bf16.mxu0 0
  %1651 = vmatpush1.bf16.msra.mxu0 %v1645
  %1652 = vmatprep.subr.bf16.mxu0 0
  %1653 = vmatpush1.bf16.msra.mxu0 0
  %1654 = vmatprep.subr.bf16.mxu0 0
  %1655 = vmatpush1.bf16.msra.mxu0 0
  %1656 = vmatprep.subr.bf16.mxu0 0
  %1657 = vmatpush1.bf16.msra.mxu0 0
  %1658 = vmatprep.subr.bf16.mxu0 0
  %1659 = vmatpush1.bf16.msra.mxu0 0
  %1660 = vmatprep.subr.bf16.mxu0 0
  %1661 = vmatpush1.bf16.msra.mxu0 0
  %1662 = vmatprep.subr.bf16.mxu0 0
  %1663 = vmatpush1.bf16.msra.mxu0 0
  %1664 = vmatprep.subr.bf16.mxu0 0
  %1665 = vmatpush1.bf16.msra.mxu0 0
  %1666 = vmatprep.subr.bf16.mxu0 0
  %1667 = vmatpush1.bf16.msra.mxu0 0
  %1668 = vmatprep.subr.bf16.mxu0 0
  %1669 = vmatpush1.bf16.msra.mxu0 0
  %1670 = vmatprep.subr.bf16.mxu0 0
  %1671 = vmatpush1.bf16.msra.mxu0 0
  %1672 = vmatprep.subr.bf16.mxu0 0
  %1673 = vmatpush1.bf16.msra.mxu0 0
  %1674 = vmatprep.subr.bf16.mxu0 0
  %1675 = vmatpush1.bf16.msra.mxu0 0
  %1676 = vmatprep.subr.bf16.mxu0 0
  %1677 = vmatpush1.bf16.msra.mxu0 0
  %1678 = vmatprep.subr.bf16.mxu0 0
  %1679 = vmatpush1.bf16.msra.mxu0 0
  %1680 = vmatprep.mubr.bf16.mxu0 0
  %1681 = vmatmul.mubr.bf16.gmra.mrb[0].mxu0 %v205
  %v1682 = vpop.f32.mrb[0].mxu0
  %v1683 = vadd.f32 0.0, %v1682
  %v1684 = vpop.f32.mrb[0].mxu0
  %v1685 = vpop.f32.mrb[0].mxu0
  %v1686 = vpop.f32.mrb[0].mxu0
  %1687 = vdwg.mxu0
  %v1688 = vadd.f32 %v1635, %v1683
  %v1689 = vld [vmem:[#allocation2 + $0x78] sm:$0xff]
  %v1694 = vunpack.c.l.b16 %v1631
  %v1695 = vunpack.c.l.b16 %v1632
  %v1696 = vunpack.c.l.b16 %v1633
  %v1697 = vunpack.c.l.b16 %v1634
  %v1698 = vpack.c.b16 %v1695, %v1694
  %v1699 = vpack.c.b16 %v1697, %v1696
  %1702 = vmatprep.subr.bf16.mxu0 0
  %1703 = vmatpush1.bf16.msra.mxu0 %v1698
  %1704 = vmatprep.subr.bf16.mxu0 0
  %1705 = vmatpush1.bf16.msra.mxu0 %v1699
  %1706 = vmatprep.subr.bf16.mxu0 0
  %1707 = vmatpush1.bf16.msra.mxu0 0
  %1708 = vmatprep.subr.bf16.mxu0 0
  %1709 = vmatpush1.bf16.msra.mxu0 0
  %1710 = vmatprep.subr.bf16.mxu0 0
  %1711 = vmatpush1.bf16.msra.mxu0 0
  %1712 = vmatprep.subr.bf16.mxu0 0
  %1713 = vmatpush1.bf16.msra.mxu0 0
  %1714 = vmatprep.subr.bf16.mxu0 0
  %1715 = vmatpush1.bf16.msra.mxu0 0
  %1716 = vmatprep.subr.bf16.mxu0 0
  %1717 = vmatpush1.bf16.msra.mxu0 0
  %1718 = vmatprep.subr.bf16.mxu0 0
  %1719 = vmatpush1.bf16.msra.mxu0 0
  %1720 = vmatprep.subr.bf16.mxu0 0
  %1721 = vmatpush1.bf16.msra.mxu0 0
  %1722 = vmatprep.subr.bf16.mxu0 0
  %1723 = vmatpush1.bf16.msra.mxu0 0
  %1724 = vmatprep.subr.bf16.mxu0 0
  %1725 = vmatpush1.bf16.msra.mxu0 0
  %1726 = vmatprep.subr.bf16.mxu0 0
  %1727 = vmatpush1.bf16.msra.mxu0 0
  %1728 = vmatprep.subr.bf16.mxu0 0
  %1729 = vmatpush1.bf16.msra.mxu0 0
  %1730 = vmatprep.subr.bf16.mxu0 0
  %1731 = vmatpush1.bf16.msra.mxu0 0
  %1732 = vmatprep.subr.bf16.mxu0 0
  %1733 = vmatpush1.bf16.msra.mxu0 0
  %1734 = vmatprep.mubr.bf16.mxu0 0
  %1735 = vmatmul.mubr.bf16.gmra.mrb[0].mxu0 %v205
  %v1736 = vpop.f32.mrb[0].mxu0
  %v1737 = vadd.f32 0.0, %v1736
  %v1738 = vpop.f32.mrb[0].mxu0
  %v1739 = vpop.f32.mrb[0].mxu0
  %v1740 = vpop.f32.mrb[0].mxu0
  %1741 = vdwg.mxu0
  %v1742 = vadd.f32 %v1689, %v1737
  %v1743 = vxor.u32 %v1688, 2147483648
  %v1744 = vmul.f32 %v1743, 1.442695
  %v1745 = vpow.pop %v1744
  %v1746 = vadd.f32 %v1745, 1.0
  %v1747 = vrcp.pop %v1746
  %v1748 = vmul.f32 1.0, %v1747
  %v1749 = vtanh.pop %v1688
  %v1750 = vmul.f32 %v1748, 0.0
  %1752 = vrot.lane.b32.xlu0 %v1749, 64
  %v1753 = vpop.permute.xlu0 %1752
  %v1755 = vmul.f32 %v1748, %v1753
  %1757 = vrot.lane.b32.xlu0 %v1755, 32
  %v1758 = vpop.permute.xlu0 %1757
  %v1760 = vadd.f32 %v1750, %v1758
  %v1761 = vtanh.pop %v1760
  %1763 = vrot.lane.b32.xlu0 %v1761, 64
  %v1764 = vpop.permute.xlu0 %1763
  %v1766 = vmul.f32 %v1748, %v1764
  %v1767 = vxor.u32 %v1742, 2147483648
  %v1768 = vmul.f32 %v1767, 1.442695
  %v1769 = vpow.pop %v1768
  %v1770 = vadd.f32 %v1769, 1.0
  %v1771 = vrcp.pop %v1770
  %v1772 = vmul.f32 1.0, %v1771
  %v1773 = vtanh.pop %v1742
  %v1774 = vmul.f32 %v1772, 0.0
  %1776 = vrot.lane.b32.xlu0 %v1773, 64
  %v1777 = vpop.permute.xlu0 %1776
  %v1779 = vmul.f32 %v1772, %v1777
  %1781 = vrot.lane.b32.xlu0 %v1779, 32
  %v1782 = vpop.permute.xlu0 %1781
  %v1784 = vadd.f32 %v1774, %v1782
  %v1785 = vtanh.pop %v1784
  %1787 = vrot.lane.b32.xlu0 %v1785, 64
  %v1788 = vpop.permute.xlu0 %1787
  %v1790 = vmul.f32 %v1772, %v1788
  %1792 = vrot.lane.b32.xlu0 %v1790, 64
  %v1793 = vpop.permute.xlu0 %1792
  %1795 = vst.msk [vmem:[#allocation3 + $0x38] sm:$0xff] %vm359, %v1793
  %v1796 = vld [vmem:[#allocation2 + $0x10] sm:$0xff]
  %v1797 = vpack.c.bf16 %v1766, %v1766
  %1799 = vrot.lane.b32.xlu0 %v1797, 32
  %v1800 = vpop.permute.xlu0 %1799
  %v1802 = vsel %vm203, %v1800, 0
  %1804 = vmatprep.subr.bf16.mxu0 0
  %1805 = vmatpush1.bf16.msra.mxu0 %v1644
  %1806 = vmatprep.subr.bf16.mxu0 0
  %1807 = vmatpush1.bf16.msra.mxu0 %v1645
  %1808 = vmatprep.subr.bf16.mxu0 0
  %1809 = vmatpush1.bf16.msra.mxu0 0
  %1810 = vmatprep.subr.bf16.mxu0 0
  %1811 = vmatpush1.bf16.msra.mxu0 0
  %1812 = vmatprep.subr.bf16.mxu0 0
  %1813 = vmatpush1.bf16.msra.mxu0 0
  %1814 = vmatprep.subr.bf16.mxu0 0
  %1815 = vmatpush1.bf16.msra.mxu0 0
  %1816 = vmatprep.subr.bf16.mxu0 0
  %1817 = vmatpush1.bf16.msra.mxu0 0
  %1818 = vmatprep.subr.bf16.mxu0 0
  %1819 = vmatpush1.bf16.msra.mxu0 0
  %1820 = vmatprep.subr.bf16.mxu0 0
  %1821 = vmatpush1.bf16.msra.mxu0 0
  %1822 = vmatprep.subr.bf16.mxu0 0
  %1823 = vmatpush1.bf16.msra.mxu0 0
  %1824 = vmatprep.subr.bf16.mxu0 0
  %1825 = vmatpush1.bf16.msra.mxu0 0
  %1826 = vmatprep.subr.bf16.mxu0 0
  %1827 = vmatpush1.bf16.msra.mxu0 0
  %1828 = vmatprep.subr.bf16.mxu0 0
  %1829 = vmatpush1.bf16.msra.mxu0 0
  %1830 = vmatprep.subr.bf16.mxu0 0
  %1831 = vmatpush1.bf16.msra.mxu0 0
  %1832 = vmatprep.subr.bf16.mxu0 0
  %1833 = vmatpush1.bf16.msra.mxu0 0
  %1834 = vmatprep.subr.bf16.mxu0 0
  %1835 = vmatpush1.bf16.msra.mxu0 0
  %1836 = vmatprep.mubr.bf16.mxu0 0
  %1837 = vmatmul.mubr.bf16.gmra.mrb[0].mxu0 %v1802
  %v1838 = vpop.f32.mrb[0].mxu0
  %v1839 = vadd.f32 0.0, %v1838
  %v1840 = vpop.f32.mrb[0].mxu0
  %v1841 = vpop.f32.mrb[0].mxu0
  %v1842 = vpop.f32.mrb[0].mxu0
  %1843 = vdwg.mxu0
  %v1844 = vadd.f32 %v1796, %v1839
  %v1845 = vxor.u32 %v1844, 2147483648
  %v1846 = vmul.f32 %v1845, 1.442695
  %v1847 = vpow.pop %v1846
  %v1848 = vadd.f32 %v1847, 1.0
  %v1849 = vrcp.pop %v1848
  %v1850 = vmul.f32 1.0, %v1849
  %v1851 = vtanh.pop %v1844
  %v1852 = vmul.f32 %v1850, %v1760
  %1854 = vrot.lane.b32.xlu0 %v1851, 64
  %v1855 = vpop.permute.xlu0 %1854
  %v1857 = vmul.f32 %v1850, %v1855
  %1859 = vrot.lane.b32.xlu0 %v1857, 32
  %v1860 = vpop.permute.xlu0 %1859
  %v1862 = vadd.f32 %v1852, %v1860
  %v1863 = vtanh.pop %v1862
  %1865 = vrot.lane.b32.xlu0 %v1863, 64
  %v1866 = vpop.permute.xlu0 %1865
  %v1868 = vmul.f32 %v1850, %v1866
  %v1869 = vld [vmem:[#allocation2 + $0x20] sm:$0xff]
  %v1870 = vpack.c.bf16 %v1868, %v1868
  %1872 = vrot.lane.b32.xlu0 %v1870, 32
  %v1873 = vpop.permute.xlu0 %1872
  %v1875 = vsel %vm203, %v1873, 0
  %1877 = vmatprep.subr.bf16.mxu0 0
  %1878 = vmatpush1.bf16.msra.mxu0 %v1644
  %1879 = vmatprep.subr.bf16.mxu0 0
  %1880 = vmatpush1.bf16.msra.mxu0 %v1645
  %1881 = vmatprep.subr.bf16.mxu0 0
  %1882 = vmatpush1.bf16.msra.mxu0 0
  %1883 = vmatprep.subr.bf16.mxu0 0
  %1884 = vmatpush1.bf16.msra.mxu0 0
  %1885 = vmatprep.subr.bf16.mxu0 0
  %1886 = vmatpush1.bf16.msra.mxu0 0
  %1887 = vmatprep.subr.bf16.mxu0 0
  %1888 = vmatpush1.bf16.msra.mxu0 0
  %1889 = vmatprep.subr.bf16.mxu0 0
  %1890 = vmatpush1.bf16.msra.mxu0 0
  %1891 = vmatprep.subr.bf16.mxu0 0
  %1892 = vmatpush1.bf16.msra.mxu0 0
  %1893 = vmatprep.subr.bf16.mxu0 0
  %1894 = vmatpush1.bf16.msra.mxu0 0
  %1895 = vmatprep.subr.bf16.mxu0 0
  %1896 = vmatpush1.bf16.msra.mxu0 0
  %1897 = vmatprep.subr.bf16.mxu0 0
  %1898 = vmatpush1.bf16.msra.mxu0 0
  %1899 = vmatprep.subr.bf16.mxu0 0
  %1900 = vmatpush1.bf16.msra.mxu0 0
  %1901 = vmatprep.subr.bf16.mxu0 0
  %1902 = vmatpush1.bf16.msra.mxu0 0
  %1903 = vmatprep.subr.bf16.mxu0 0
  %1904 = vmatpush1.bf16.msra.mxu0 0
  %1905 = vmatprep.subr.bf16.mxu0 0
  %1906 = vmatpush1.bf16.msra.mxu0 0
  %1907 = vmatprep.subr.bf16.mxu0 0
  %1908 = vmatpush1.bf16.msra.mxu0 0
  %1909 = vmatprep.mubr.bf16.mxu0 0
  %1910 = vmatmul.mubr.bf16.gmra.mrb[0].mxu0 %v1875
  %v1911 = vpop.f32.mrb[0].mxu0
  %v1912 = vadd.f32 0.0, %v1911
  %v1913 = vpop.f32.mrb[0].mxu0
  %v1914 = vpop.f32.mrb[0].mxu0
  %v1915 = vpop.f32.mrb[0].mxu0
  %1916 = vdwg.mxu0
  %v1917 = vadd.f32 %v1869, %v1912
  %v1918 = vxor.u32 %v1917, 2147483648
  %v1919 = vmul.f32 %v1918, 1.442695
  %v1920 = vpow.pop %v1919
  %v1921 = vadd.f32 %v1920, 1.0
  %v1922 = vrcp.pop %v1921
  %v1923 = vmul.f32 1.0, %v1922
  %v1924 = vtanh.pop %v1917
  %v1925 = vmul.f32 %v1923, %v1862
  %1927 = vrot.lane.b32.xlu0 %v1924, 64
  %v1928 = vpop.permute.xlu0 %1927
  %v1930 = vmul.f32 %v1923, %v1928
  %1932 = vrot.lane.b32.xlu0 %v1930, 32
  %v1933 = vpop.permute.xlu0 %1932
  %v1935 = vadd.f32 %v1925, %v1933
  %v1936 = vtanh.pop %v1935
  %1938 = vrot.lane.b32.xlu0 %v1936, 64
  %v1939 = vpop.permute.xlu0 %1938
  %v1941 = vmul.f32 %v1923, %v1939
  %v1942 = vld [vmem:[#allocation2 + $0x30] sm:$0xff]
  %v1943 = vpack.c.bf16 %v1941, %v1941
  %1945 = vrot.lane.b32.xlu0 %v1943, 32
  %v1946 = vpop.permute.xlu0 %1945
  %v1948 = vsel %vm203, %v1946, 0
  %1950 = vmatprep.subr.bf16.mxu0 0
  %1951 = vmatpush1.bf16.msra.mxu0 %v1644
  %1952 = vmatprep.subr.bf16.mxu0 0
  %1953 = vmatpush1.bf16.msra.mxu0 %v1645
  %1954 = vmatprep.subr.bf16.mxu0 0
  %1955 = vmatpush1.bf16.msra.mxu0 0
  %1956 = vmatprep.subr.bf16.mxu0 0
  %1957 = vmatpush1.bf16.msra.mxu0 0
  %1958 = vmatprep.subr.bf16.mxu0 0
  %1959 = vmatpush1.bf16.msra.mxu0 0
  %1960 = vmatprep.subr.bf16.mxu0 0
  %1961 = vmatpush1.bf16.msra.mxu0 0
  %1962 = vmatprep.subr.bf16.mxu0 0
  %1963 = vmatpush1.bf16.msra.mxu0 0
  %1964 = vmatprep.subr.bf16.mxu0 0
  %1965 = vmatpush1.bf16.msra.mxu0 0
  %1966 = vmatprep.subr.bf16.mxu0 0
  %1967 = vmatpush1.bf16.msra.mxu0 0
  %1968 = vmatprep.subr.bf16.mxu0 0
  %1969 = vmatpush1.bf16.msra.mxu0 0
  %1970 = vmatprep.subr.bf16.mxu0 0
  %1971 = vmatpush1.bf16.msra.mxu0 0
  %1972 = vmatprep.subr.bf16.mxu0 0
  %1973 = vmatpush1.bf16.msra.mxu0 0
  %1974 = vmatprep.subr.bf16.mxu0 0
  %1975 = vmatpush1.bf16.msra.mxu0 0
  %1976 = vmatprep.subr.bf16.mxu0 0
  %1977 = vmatpush1.bf16.msra.mxu0 0
  %1978 = vmatprep.subr.bf16.mxu0 0
  %1979 = vmatpush1.bf16.msra.mxu0 0
  %1980 = vmatprep.subr.bf16.mxu0 0
  %1981 = vmatpush1.bf16.msra.mxu0 0
  %1982 = vmatprep.mubr.bf16.mxu0 0
  %1983 = vmatmul.mubr.bf16.gmra.mrb[0].mxu0 %v1948
  %v1984 = vpop.f32.mrb[0].mxu0
  %v1985 = vadd.f32 0.0, %v1984
  %v1986 = vpop.f32.mrb[0].mxu0
  %v1987 = vpop.f32.mrb[0].mxu0
  %v1988 = vpop.f32.mrb[0].mxu0
  %1989 = vdwg.mxu0
  %v1990 = vadd.f32 %v1942, %v1985
  %v1991 = vxor.u32 %v1990, 2147483648
  %v1992 = vmul.f32 %v1991, 1.442695
  %v1993 = vpow.pop %v1992
  %v1994 = vadd.f32 %v1993, 1.0
  %v1995 = vrcp.pop %v1994
  %v1996 = vmul.f32 1.0, %v1995
  %v1997 = vtanh.pop %v1990
  %v1998 = vmul.f32 %v1996, %v1935
  %2000 = vrot.lane.b32.xlu0 %v1997, 64
  %v2001 = vpop.permute.xlu0 %2000
  %v2003 = vmul.f32 %v1996, %v2001
  %2005 = vrot.lane.b32.xlu0 %v2003, 32
  %v2006 = vpop.permute.xlu0 %2005
  %v2008 = vadd.f32 %v1998, %v2006
  %v2009 = vtanh.pop %v2008
  %2011 = vrot.lane.b32.xlu0 %v2009, 64
  %v2012 = vpop.permute.xlu0 %2011
  %v2014 = vmul.f32 %v1996, %v2012
  %v2015 = vld [vmem:[#allocation2 + $0x40] sm:$0xff]
  %v2016 = vpack.c.bf16 %v2014, %v2014
  %2018 = vrot.lane.b32.xlu0 %v2016, 32
  %v2019 = vpop.permute.xlu0 %2018
  %v2021 = vsel %vm203, %v2019, 0
  %2023 = vmatprep.subr.bf16.mxu0 0
  %2024 = vmatpush1.bf16.msra.mxu0 %v1644
  %2025 = vmatprep.subr.bf16.mxu0 0
  %2026 = vmatpush1.bf16.msra.mxu0 %v1645
  %2027 = vmatprep.subr.bf16.mxu0 0
  %2028 = vmatpush1.bf16.msra.mxu0 0
  %2029 = vmatprep.subr.bf16.mxu0 0
  %2030 = vmatpush1.bf16.msra.mxu0 0
  %2031 = vmatprep.subr.bf16.mxu0 0
  %2032 = vmatpush1.bf16.msra.mxu0 0
  %2033 = vmatprep.subr.bf16.mxu0 0
  %2034 = vmatpush1.bf16.msra.mxu0 0
  %2035 = vmatprep.subr.bf16.mxu0 0
  %2036 = vmatpush1.bf16.msra.mxu0 0
  %2037 = vmatprep.subr.bf16.mxu0 0
  %2038 = vmatpush1.bf16.msra.mxu0 0
  %2039 = vmatprep.subr.bf16.mxu0 0
  %2040 = vmatpush1.bf16.msra.mxu0 0
  %2041 = vmatprep.subr.bf16.mxu0 0
  %2042 = vmatpush1.bf16.msra.mxu0 0
  %2043 = vmatprep.subr.bf16.mxu0 0
  %2044 = vmatpush1.bf16.msra.mxu0 0
  %2045 = vmatprep.subr.bf16.mxu0 0
  %2046 = vmatpush1.bf16.msra.mxu0 0
  %2047 = vmatprep.subr.bf16.mxu0 0
  %2048 = vmatpush1.bf16.msra.mxu0 0
  %2049 = vmatprep.subr.bf16.mxu0 0
  %2050 = vmatpush1.bf16.msra.mxu0 0
  %2051 = vmatprep.subr.bf16.mxu0 0
  %2052 = vmatpush1.bf16.msra.mxu0 0
  %2053 = vmatprep.subr.bf16.mxu0 0
  %2054 = vmatpush1.bf16.msra.mxu0 0
  %2055 = vmatprep.mubr.bf16.mxu0 0
  %2056 = vmatmul.mubr.bf16.gmra.mrb[0].mxu0 %v2021
  %v2057 = vpop.f32.mrb[0].mxu0
  %v2058 = vadd.f32 0.0, %v2057
  %v2059 = vpop.f32.mrb[0].mxu0
  %v2060 = vpop.f32.mrb[0].mxu0
  %v2061 = vpop.f32.mrb[0].mxu0
  %2062 = vdwg.mxu0
  %v2063 = vadd.f32 %v2015, %v2058
  %v2064 = vxor.u32 %v2063, 2147483648
  %v2065 = vmul.f32 %v2064, 1.442695
  %v2066 = vpow.pop %v2065
  %v2067 = vadd.f32 %v2066, 1.0
  %v2068 = vrcp.pop %v2067
  %v2069 = vmul.f32 1.0, %v2068
  %v2070 = vtanh.pop %v2063
  %v2071 = vmul.f32 %v2069, %v2008
  %2073 = vrot.lane.b32.xlu0 %v2070, 64
  %v2074 = vpop.permute.xlu0 %2073
  %v2076 = vmul.f32 %v2069, %v2074
  %2078 = vrot.lane.b32.xlu0 %v2076, 32
  %v2079 = vpop.permute.xlu0 %2078
  %v2081 = vadd.f32 %v2071, %v2079
  %v2082 = vtanh.pop %v2081
  %2084 = vrot.lane.b32.xlu0 %v2082, 64
  %v2085 = vpop.permute.xlu0 %2084
  %v2087 = vmul.f32 %v2069, %v2085
  %v2088 = vld [vmem:[#allocation2 + $0x50] sm:$0xff]
  %v2089 = vpack.c.bf16 %v2087, %v2087
  %2091 = vrot.lane.b32.xlu0 %v2089, 32
  %v2092 = vpop.permute.xlu0 %2091
  %v2094 = vsel %vm203, %v2092, 0
  %2096 = vmatprep.subr.bf16.mxu0 0
  %2097 = vmatpush1.bf16.msra.mxu0 %v1644
  %2098 = vmatprep.subr.bf16.mxu0 0
  %2099 = vmatpush1.bf16.msra.mxu0 %v1645
  %2100 = vmatprep.subr.bf16.mxu0 0
  %2101 = vmatpush1.bf16.msra.mxu0 0
  %2102 = vmatprep.subr.bf16.mxu0 0
  %2103 = vmatpush1.bf16.msra.mxu0 0
  %2104 = vmatprep.subr.bf16.mxu0 0
  %2105 = vmatpush1.bf16.msra.mxu0 0
  %2106 = vmatprep.subr.bf16.mxu0 0
  %2107 = vmatpush1.bf16.msra.mxu0 0
  %2108 = vmatprep.subr.bf16.mxu0 0
  %2109 = vmatpush1.bf16.msra.mxu0 0
  %2110 = vmatprep.subr.bf16.mxu0 0
  %2111 = vmatpush1.bf16.msra.mxu0 0
  %2112 = vmatprep.subr.bf16.mxu0 0
  %2113 = vmatpush1.bf16.msra.mxu0 0
  %2114 = vmatprep.subr.bf16.mxu0 0
  %2115 = vmatpush1.bf16.msra.mxu0 0
  %2116 = vmatprep.subr.bf16.mxu0 0
  %2117 = vmatpush1.bf16.msra.mxu0 0
  %2118 = vmatprep.subr.bf16.mxu0 0
  %2119 = vmatpush1.bf16.msra.mxu0 0
  %2120 = vmatprep.subr.bf16.mxu0 0
  %2121 = vmatpush1.bf16.msra.mxu0 0
  %2122 = vmatprep.subr.bf16.mxu0 0
  %2123 = vmatpush1.bf16.msra.mxu0 0
  %2124 = vmatprep.subr.bf16.mxu0 0
  %2125 = vmatpush1.bf16.msra.mxu0 0
  %2126 = vmatprep.subr.bf16.mxu0 0
  %2127 = vmatpush1.bf16.msra.mxu0 0
  %2128 = vmatprep.mubr.bf16.mxu0 0
  %2129 = vmatmul.mubr.bf16.gmra.mrb[0].mxu0 %v2094
  %v2130 = vpop.f32.mrb[0].mxu0
  %v2131 = vadd.f32 0.0, %v2130
  %v2132 = vpop.f32.mrb[0].mxu0
  %v2133 = vpop.f32.mrb[0].mxu0
  %v2134 = vpop.f32.mrb[0].mxu0
  %2135 = vdwg.mxu0
  %v2136 = vadd.f32 %v2088, %v2131
  %v2137 = vxor.u32 %v2136, 2147483648
  %v2138 = vmul.f32 %v2137, 1.442695
  %v2139 = vpow.pop %v2138
  %v2140 = vadd.f32 %v2139, 1.0
  %v2141 = vrcp.pop %v2140
  %v2142 = vmul.f32 1.0, %v2141
  %v2143 = vtanh.pop %v2136
  %v2144 = vmul.f32 %v2142, %v2081
  %2146 = vrot.lane.b32.xlu0 %v2143, 64
  %v2147 = vpop.permute.xlu0 %2146
  %v2149 = vmul.f32 %v2142, %v2147
  %2151 = vrot.lane.b32.xlu0 %v2149, 32
  %v2152 = vpop.permute.xlu0 %2151
  %v2154 = vadd.f32 %v2144, %v2152
  %v2155 = vtanh.pop %v2154
  %2157 = vrot.lane.b32.xlu0 %v2155, 64
  %v2158 = vpop.permute.xlu0 %2157
  %v2160 = vmul.f32 %v2142, %v2158
  %v2161 = vld [vmem:[#allocation2 + $0x60] sm:$0xff]
  %v2162 = vpack.c.bf16 %v2160, %v2160
  %2164 = vrot.lane.b32.xlu0 %v2162, 32
  %v2165 = vpop.permute.xlu0 %2164
  %v2167 = vsel %vm203, %v2165, 0
  %2169 = vmatprep.subr.bf16.mxu0 0
  %2170 = vmatpush1.bf16.msra.mxu0 %v1644
  %2171 = vmatprep.subr.bf16.mxu0 0
  %2172 = vmatpush1.bf16.msra.mxu0 %v1645
  %2173 = vmatprep.subr.bf16.mxu0 0
  %2174 = vmatpush1.bf16.msra.mxu0 0
  %2175 = vmatprep.subr.bf16.mxu0 0
  %2176 = vmatpush1.bf16.msra.mxu0 0
  %2177 = vmatprep.subr.bf16.mxu0 0
  %2178 = vmatpush1.bf16.msra.mxu0 0
  %2179 = vmatprep.subr.bf16.mxu0 0
  %2180 = vmatpush1.bf16.msra.mxu0 0
  %2181 = vmatprep.subr.bf16.mxu0 0
  %2182 = vmatpush1.bf16.msra.mxu0 0
  %2183 = vmatprep.subr.bf16.mxu0 0
  %2184 = vmatpush1.bf16.msra.mxu0 0
  %2185 = vmatprep.subr.bf16.mxu0 0
  %2186 = vmatpush1.bf16.msra.mxu0 0
  %2187 = vmatprep.subr.bf16.mxu0 0
  %2188 = vmatpush1.bf16.msra.mxu0 0
  %2189 = vmatprep.subr.bf16.mxu0 0
  %2190 = vmatpush1.bf16.msra.mxu0 0
  %2191 = vmatprep.subr.bf16.mxu0 0
  %2192 = vmatpush1.bf16.msra.mxu0 0
  %2193 = vmatprep.subr.bf16.mxu0 0
  %2194 = vmatpush1.bf16.msra.mxu0 0
  %2195 = vmatprep.subr.bf16.mxu0 0
  %2196 = vmatpush1.bf16.msra.mxu0 0
  %2197 = vmatprep.subr.bf16.mxu0 0
  %2198 = vmatpush1.bf16.msra.mxu0 0
  %2199 = vmatprep.subr.bf16.mxu0 0
  %2200 = vmatpush1.bf16.msra.mxu0 0
  %2201 = vmatprep.mubr.bf16.mxu0 0
  %2202 = vmatmul.mubr.bf16.gmra.mrb[0].mxu0 %v2167
  %v2203 = vpop.f32.mrb[0].mxu0
  %v2204 = vadd.f32 0.0, %v2203
  %v2205 = vpop.f32.mrb[0].mxu0
  %v2206 = vpop.f32.mrb[0].mxu0
  %v2207 = vpop.f32.mrb[0].mxu0
  %2208 = vdwg.mxu0
  %v2209 = vadd.f32 %v2161, %v2204
  %v2210 = vxor.u32 %v2209, 2147483648
  %v2211 = vmul.f32 %v2210, 1.442695
  %v2212 = vpow.pop %v2211
  %v2213 = vadd.f32 %v2212, 1.0
  %v2214 = vrcp.pop %v2213
  %v2215 = vmul.f32 1.0, %v2214
  %v2216 = vtanh.pop %v2209
  %v2217 = vmul.f32 %v2215, %v2154
  %2219 = vrot.lane.b32.xlu0 %v2216, 64
  %v2220 = vpop.permute.xlu0 %2219
  %v2222 = vmul.f32 %v2215, %v2220
  %2224 = vrot.lane.b32.xlu0 %v2222, 32
  %v2225 = vpop.permute.xlu0 %2224
  %v2227 = vadd.f32 %v2217, %v2225
  %v2228 = vtanh.pop %v2227
  %2230 = vrot.lane.b32.xlu0 %v2228, 64
  %v2231 = vpop.permute.xlu0 %2230
  %v2233 = vmul.f32 %v2215, %v2231
  %v2234 = vld [vmem:[#allocation2 + $0x70] sm:$0xff]
  %v2235 = vpack.c.bf16 %v2233, %v2233
  %2237 = vrot.lane.b32.xlu0 %v2235, 32
  %v2238 = vpop.permute.xlu0 %2237
  %v2240 = vsel %vm203, %v2238, 0
  %2242 = vmatprep.subr.bf16.mxu0 0
  %2243 = vmatpush1.bf16.msra.mxu0 %v1644
  %2244 = vmatprep.subr.bf16.mxu0 0
  %2245 = vmatpush1.bf16.msra.mxu0 %v1645
  %2246 = vmatprep.subr.bf16.mxu0 0
  %2247 = vmatpush1.bf16.msra.mxu0 0
  %2248 = vmatprep.subr.bf16.mxu0 0
  %2249 = vmatpush1.bf16.msra.mxu0 0
  %2250 = vmatprep.subr.bf16.mxu0 0
  %2251 = vmatpush1.bf16.msra.mxu0 0
  %2252 = vmatprep.subr.bf16.mxu0 0
  %2253 = vmatpush1.bf16.msra.mxu0 0
  %2254 = vmatprep.subr.bf16.mxu0 0
  %2255 = vmatpush1.bf16.msra.mxu0 0
  %2256 = vmatprep.subr.bf16.mxu0 0
  %2257 = vmatpush1.bf16.msra.mxu0 0
  %2258 = vmatprep.subr.bf16.mxu0 0
  %2259 = vmatpush1.bf16.msra.mxu0 0
  %2260 = vmatprep.subr.bf16.mxu0 0
  %2261 = vmatpush1.bf16.msra.mxu0 0
  %2262 = vmatprep.subr.bf16.mxu0 0
  %2263 = vmatpush1.bf16.msra.mxu0 0
  %2264 = vmatprep.subr.bf16.mxu0 0
  %2265 = vmatpush1.bf16.msra.mxu0 0
  %2266 = vmatprep.subr.bf16.mxu0 0
  %2267 = vmatpush1.bf16.msra.mxu0 0
  %2268 = vmatprep.subr.bf16.mxu0 0
  %2269 = vmatpush1.bf16.msra.mxu0 0
  %2270 = vmatprep.subr.bf16.mxu0 0
  %2271 = vmatpush1.bf16.msra.mxu0 0
  %2272 = vmatprep.subr.bf16.mxu0 0
  %2273 = vmatpush1.bf16.msra.mxu0 0
  %2274 = vmatprep.mubr.bf16.mxu0 0
  %2275 = vmatmul.mubr.bf16.gmra.mrb[0].mxu0 %v2240
  %v2276 = vpop.f32.mrb[0].mxu0
  %v2277 = vadd.f32 0.0, %v2276
  %v2278 = vpop.f32.mrb[0].mxu0
  %v2279 = vpop.f32.mrb[0].mxu0
  %v2280 = vpop.f32.mrb[0].mxu0
  %2281 = vdwg.mxu0
  %v2282 = vadd.f32 %v2234, %v2277
  %v2283 = vxor.u32 %v2282, 2147483648
  %v2284 = vmul.f32 %v2283, 1.442695
  %v2285 = vpow.pop %v2284
  %v2286 = vadd.f32 %v2285, 1.0
  %v2287 = vrcp.pop %v2286
  %v2288 = vmul.f32 1.0, %v2287
  %v2289 = vtanh.pop %v2282
  %v2290 = vmul.f32 %v2288, %v2227
  %2292 = vrot.lane.b32.xlu0 %v2289, 64
  %v2293 = vpop.permute.xlu0 %2292
  %v2295 = vmul.f32 %v2288, %v2293
  %2297 = vrot.lane.b32.xlu0 %v2295, 32
  %v2298 = vpop.permute.xlu0 %2297
  %v2300 = vadd.f32 %v2290, %v2298
  %v2301 = vtanh.pop %v2300
  %2303 = vrot.lane.b32.xlu0 %v2301, 64
  %v2304 = vpop.permute.xlu0 %2303
  %v2306 = vmul.f32 %v2288, %v2304
  %2308 = vrot.lane.b32.xlu0 %v2306, 32
  %v2309 = vpop.permute.xlu0 %2308
  %2311 = vst.msk [vmem:[#allocation3 + $0x38] sm:$0xff] %vm203, %v2309
  %v2312 = vld [vmem:[#allocation3 + $0x38] sm:$0xff]
  %v2313 = vpack.c.bf16 %v2312, %v2312
  %v2314 = vld [vmem:[%s9] sm:$0xf]
  %v2315 = vld [vmem:[%s9 + $0x4] sm:$0xf]
  %v2316 = vld [vmem:[%s9 + $0x8] sm:$0xf]
  %v2317 = vld [vmem:[%s9 + $0xc] sm:$0xf]
  %v2318 = vld [vmem:[%s9 + $0x10] sm:$0xf]
  %v2319 = vld [vmem:[%s9 + $0x14] sm:$0xf]
  %v2320 = vld [vmem:[%s9 + $0x18] sm:$0xf]
  %v2321 = vld [vmem:[%s9 + $0x1c] sm:$0xf]
  %v2322 = vld [vmem:[%s10] sm:$0x1]
  %v2324 = vlaneseq
  %v2325 = vshrl.u32 %v2324, 7
  %v2326 = vsub.s32 0, %v2325
  %v2327 = vrot.slane %v2322, %v2326
  %v2337 = vunpack.c.l.b16 %v2314
  %v2338 = vunpack.c.l.b16 %v2315
  %v2339 = vunpack.c.l.b16 %v2316
  %v2340 = vunpack.c.l.b16 %v2317
  %v2341 = vunpack.c.l.b16 %v2318
  %v2342 = vunpack.c.l.b16 %v2319
  %v2343 = vunpack.c.l.b16 %v2320
  %v2344 = vunpack.c.l.b16 %v2321
  %v2345 = vpack.c.b16 %v2338, %v2337
  %v2346 = vpack.c.b16 %v2340, %v2339
  %v2347 = vpack.c.b16 %v2342, %v2341
  %v2348 = vpack.c.b16 %v2344, %v2343
  %v2354 = vsel %vm1525, %v2313, 0
  %2356 = vmatprep.subr.bf16.mxu0 0
  %2357 = vmatpush1.bf16.msra.mxu0 %v2345
  %2358 = vmatprep.subr.bf16.mxu0 0
  %2359 = vmatpush1.bf16.msra.mxu0 %v2346
  %2360 = vmatprep.subr.bf16.mxu0 0
  %2361 = vmatpush1.bf16.msra.mxu0 %v2347
  %2362 = vmatprep.subr.bf16.mxu0 0
  %2363 = vmatpush1.bf16.msra.mxu0 %v2348
  %2364 = vmatprep.subr.bf16.mxu0 0
  %2365 = vmatpush1.bf16.msra.mxu0 0
  %2366 = vmatprep.subr.bf16.mxu0 0
  %2367 = vmatpush1.bf16.msra.mxu0 0
  %2368 = vmatprep.subr.bf16.mxu0 0
  %2369 = vmatpush1.bf16.msra.mxu0 0
  %2370 = vmatprep.subr.bf16.mxu0 0
  %2371 = vmatpush1.bf16.msra.mxu0 0
  %2372 = vmatprep.subr.bf16.mxu0 0
  %2373 = vmatpush1.bf16.msra.mxu0 0
  %2374 = vmatprep.subr.bf16.mxu0 0
  %2375 = vmatpush1.bf16.msra.mxu0 0
  %2376 = vmatprep.subr.bf16.mxu0 0
  %2377 = vmatpush1.bf16.msra.mxu0 0
  %2378 = vmatprep.subr.bf16.mxu0 0
  %2379 = vmatpush1.bf16.msra.mxu0 0
  %2380 = vmatprep.subr.bf16.mxu0 0
  %2381 = vmatpush1.bf16.msra.mxu0 0
  %2382 = vmatprep.subr.bf16.mxu0 0
  %2383 = vmatpush1.bf16.msra.mxu0 0
  %2384 = vmatprep.subr.bf16.mxu0 0
  %2385 = vmatpush1.bf16.msra.mxu0 0
  %2386 = vmatprep.subr.bf16.mxu0 0
  %2387 = vmatpush1.bf16.msra.mxu0 0
  %2388 = vmatprep.mubr.bf16.mxu0 0
  %2389 = vmatmul.mubr.bf16.gmra.mrb[0].mxu0 %v2354
  %v2390 = vpop.f32.mrb[0].mxu0
  %v2391 = vadd.f32 %v2327, %v2390
  %v2392 = vpop.f32.mrb[0].mxu0
  %v2393 = vpop.f32.mrb[0].mxu0
  %v2394 = vpop.f32.mrb[0].mxu0
  %2395 = vdwg.mxu0
  %vm2396 = vcmask 64512
  %2397 = vst.msk [vmem:[%s11] sm:$0xff] %vm2396, %v2391
  // Predicated region
  $region46: #{bidirectional_lstm_forward.1} parent=0 // pred_check
    _
  $region47: #{bidirectional_lstm_forward.1} parent=0 // pred_check_branch
    %2399 = sbr.rel (0) target = $region49
  $region48: #{bidirectional_lstm_forward.1} parent=0 // pred_region
    _
  $region49: #{bidirectional_lstm_forward.1} parent=0 // pred_fallthru
    _
  // Predicated region
  $region50: #{bidirectional_lstm_forward.1} parent=0 // pred_check
    _
  $region51: #{bidirectional_lstm_forward.1} parent=0 // pred_check_branch
    %2401 = sbr.rel (0) target = $region53
  $region52: #{bidirectional_lstm_forward.1} parent=0 // pred_region
    _
  $region53: #{bidirectional_lstm_forward.1} parent=0 // pred_fallthru
    _

</llo_original>
